<compile_context>
chip_gen: v7x
topology: tpu7x:2x2x1
jax: 0.10.0
libtpu: 0.0.40
codegen_flags: <defaults>
</compile_context>

<pallas_src>
import functools

import jax
import jax.numpy as jnp
from jax.experimental import pallas as pl
from jax.experimental.pallas import tpu as pltpu

# ----------------------------- small config ---------------------------------
B = 2              # batch
L_PRE = 12         # length of x_embedding / str_embedding before conv
L_SEQ = L_PRE + 4  # = 16, length of input_ids (= conv output length, k=5 pad=4)
D0 = 32            # dim_embedding            (stands in for 1024)
STR_IN = 12        # structural input channels (stands in for 132)
STR_OUT = 16       # conv1dStr out channels    (stands in for 256)
D_MODEL = D0 + STR_OUT   # = 48  (dim_embedding + 256 in the reference)
N_HEAD = 4
D_K = 8
D_V = 8
D_FF = 64
VOCAB = 24
MAX_LEN = 32
N_LAYERS = 2
KSIZE = 5

# Bias-slab row layout (packed wrapper-side, sliced in-kernel)
(ROW_BCE, ROW_BCS, ROW_EG, ROW_EB, ROW_BQKV, ROW_BO, ROW_AG, ROW_AB,
 ROW_B1, ROW_B2, ROW_RB1, ROW_RB2, ROW_F1B, ROW_FCB) = range(14)
BIAS_ROWS = 16   # padded to a multiple of 8 sublanes
BIAS_LANES = 128


# ----------------------------- fused Pallas kernel --------------------------
def _fused_bert_kernel(
        x_i2c_ref, s_i2c_ref, emb_ref, kpad_ref,
        wce_ref, wcs_ref, wqkv_ref, wo_ref, w1_ref, w2_ref,
        rw_ref, f1w_ref, fcw_ref, bias_ref,
        logits_ref, rep_ref,
        *, batch, seq, n_head, d_k, d_v, d_model, ksize, eps=1e-5):
    f32 = jnp.float32
    inv_sqrt_dk = 1.0 / (float(d_k) ** 0.5)

    def mm(a, b):
        return jnp.dot(a, b, preferred_element_type=f32)

    def layernorm(x, g, b):
        mu = jnp.mean(x, axis=-1, keepdims=True)
        var = jnp.mean((x - mu) ** 2, axis=-1, keepdims=True)
        return (x - mu) * jax.lax.rsqrt(var + eps) * g + b

    def bias(row, width):
        # static sublane pick + lane-prefix slice of the packed bias slab
        return bias_ref[row:row + 1, 0:width]

    d0 = wce_ref.shape[1]        # dim_embedding
    str_out = wcs_ref.shape[1]   # conv1dStr out channels
    d_ff = w1_ref.shape[1]
    hd3 = wqkv_ref.shape[1]      # 3 * n_head * d_k
    n_cls = fcw_ref.shape[1]

    # ---- conv1dEmbed / conv1dStr: one lane-dense im2col matmul each + ReLU
    x_conv = jnp.maximum(mm(x_i2c_ref[...], wce_ref[...]) + bias(ROW_BCE, d0), 0.0)
    s_conv = jnp.maximum(mm(s_i2c_ref[...], wcs_ref[...]) + bias(ROW_BCS, str_out), 0.0)

    # ---- token + position Embedding LayerNorm
    self_emb = layernorm(emb_ref[...], bias(ROW_EG, d0), bias(ROW_EB, d0))

    # (B*L, d_model)
    all_input = jnp.concatenate([self_emb + x_conv, s_conv], axis=-1)

    # ---- EncoderLayer: stacked QKV projection, per-head softmax stage
    qkv = mm(all_input, wqkv_ref[...]) + bias(ROW_BQKV, hd3)   # (B*L, 3*H*d_k)
    kpad = kpad_ref[...]                                        # (B, L), 1.0 at PAD
    hdk = n_head * d_k
    hdv = n_head * d_v

    ctx_rows = []
    for b in range(batch):                                      # static unroll (B=2)
        rs = b * seq
        q_b = qkv[rs:rs + seq, 0:hdk]
        k_b = qkv[rs:rs + seq, hdk:2 * hdk]
        v_b = qkv[rs:rs + seq, 2 * hdk:2 * hdk + hdv]
        pad_b = jnp.broadcast_to(kpad[b:b + 1, :] > 0.5, (seq, seq))
        heads = []
        for h in range(n_head):                                 # static unroll (H=4)
            qh = q_b[:, h * d_k:(h + 1) * d_k]
            kh = k_b[:, h * d_k:(h + 1) * d_k]
            vh = v_b[:, h * d_v:(h + 1) * d_v]
            s = jax.lax.dot_general(qh, kh, (((1,), (1,)), ((), ())),
                                    preferred_element_type=f32) * inv_sqrt_dk
            s = jnp.where(pad_b, -1000000000.0, s)              # masked_fill_
            s = s - jnp.max(s, axis=-1, keepdims=True)
            ex = jnp.exp(s)
            attn = ex / jnp.sum(ex, axis=-1, keepdims=True)     # softmax(dim=-1)
            heads.append(mm(attn, vh))                          # (seq, d_v)
        ctx_rows.append(jnp.concatenate(heads, axis=-1))        # (seq, H*d_v)
    ctx = jnp.concatenate(ctx_rows, axis=0)                     # (B*L, H*d_v)

    attn_out = mm(ctx, wo_ref[...]) + bias(ROW_BO, d_model)
    # residual + LayerNorm (MultiHeadAttention.norm)
    y = layernorm(attn_out + all_input, bias(ROW_AG, d_model), bias(ROW_AB, d_model))
    # PoswiseFeedForwardNet: fc2(relu(fc1(y)))  (no residual / norm)
    h1 = jnp.maximum(mm(y, w1_ref[...]) + bias(ROW_B1, d_ff), 0.0)
    output_t = mm(h1, w2_ref[...]) + bias(ROW_B2, d_model)      # (B*L, d_model)

    # ---- ResNetConv1d (k=5, pad=2) x2, eval-mode BN folded into rw/rb
    pad = (ksize - 1) // 2
    kd = ksize * d_model

    def conv_im2col(x):           # (B*L, d_model) -> (B*L, K*d_model)
        z = jnp.zeros((pad, d_model), f32)
        rows = []
        for b in range(batch):
            xb = x[b * seq:(b + 1) * seq, :]
            xp = jnp.concatenate([z, xb, z], axis=0)             # (seq + 2*pad, C)
            rows.append(jnp.concatenate(
                [xp[t:t + seq, :] for t in range(ksize)], axis=-1))
        return jnp.concatenate(rows, axis=0)

    rw1 = rw_ref[0:kd, :]          # sublane-aligned static slices of the stacked slab
    rw2 = rw_ref[kd:2 * kd, :]
    hc = jnp.maximum(mm(conv_im2col(all_input), rw1) + bias(ROW_RB1, d_model), 0.0)
    oc = mm(conv_im2col(hc), rw2) + bias(ROW_RB2, d_model)
    output_c = jnp.maximum(oc + all_input, 0.0)                  # + identity, ReLU

    # ---- concat, representation (token 0 of each sequence), head
    output = jnp.concatenate([output_t, output_c], axis=-1)     # (B*L, 2*d_model)
    rep = jnp.concatenate(
        [output[b * seq:b * seq + 1, :] for b in range(batch)], axis=0)

    hh = jnp.maximum(mm(rep, f1w_ref[...]) + bias(ROW_F1B, d_model), 0.0)
    logits_ref[...] = mm(hh, fcw_ref[...]) + bias(ROW_FCB, n_cls)  # fc2 & classifier folded
    rep_ref[...] = rep


# ----------------------------- parameters ------------------------------------
def init_params(key):
    keys = iter(jax.random.split(key, 64))

    def w(shape, scale=0.05):
        return (scale * jax.random.normal(next(keys), shape)).astype(jnp.float32)

    p = {}
    p["tok_embed"] = w((VOCAB, D0), 0.1)
    p["pos_embed"] = w((MAX_LEN, D0), 0.1)
    p["emb_ln_g"] = jnp.ones((1, D0), jnp.float32)
    p["emb_ln_b"] = jnp.zeros((1, D0), jnp.float32)

    p["convS_w"] = w((KSIZE, STR_IN, STR_OUT)); p["convS_b"] = w((1, STR_OUT))
    p["convE_w"] = w((KSIZE, D0, D0));          p["convE_b"] = w((1, D0))

    layers = []
    for _ in range(N_LAYERS):
        layers.append(dict(
            wq=w((D_MODEL, N_HEAD * D_K)), bq=w((1, N_HEAD * D_K)),
            wk=w((D_MODEL, N_HEAD * D_K)), bk=w((1, N_HEAD * D_K)),
            wv=w((D_MODEL, N_HEAD * D_V)), bv=w((1, N_HEAD * D_V)),
            wo=w((N_HEAD * D_V, D_MODEL)), bo=w((1, D_MODEL)),
            ln_g=jnp.ones((1, D_MODEL), jnp.float32),
            ln_b=jnp.zeros((1, D_MODEL), jnp.float32),
            w1=w((D_MODEL, D_FF)), b1=w((1, D_FF)),
            w2=w((D_FF, D_MODEL)), b2=w((1, D_MODEL)),
        ))
    p["layers"] = layers

    # eval-mode BatchNorm1d (running_mean=0, running_var=1) -> scale/shift
    def bn_fold():
        gamma = jnp.ones((1, D_MODEL), jnp.float32)
        beta = jnp.zeros((1, D_MODEL), jnp.float32)
        mean = jnp.zeros((1, D_MODEL), jnp.float32)
        var = jnp.ones((1, D_MODEL), jnp.float32)
        scale = gamma / jnp.sqrt(var + 1e-5)
        return scale, beta - mean * scale

    p["res_w1"] = w((KSIZE, D_MODEL, D_MODEL)); p["res_b1"] = w((1, D_MODEL))
    p["res_bn1_scale"], p["res_bn1_shift"] = bn_fold()
    p["res_w2"] = w((KSIZE, D_MODEL, D_MODEL)); p["res_b2"] = w((1, D_MODEL))
    p["res_bn2_scale"], p["res_bn2_shift"] = bn_fold()

    p["fc1_w"] = w((2 * D_MODEL, D_MODEL)); p["fc1_b"] = w((1, D_MODEL))
    p["fc2_w"] = w((D_MODEL, 2));           p["fc2_b"] = w((1, 2))
    p["cls_w"] = w((2, 2));                 p["cls_b"] = w((1, 2))
    return p


# ----------------------------- forward ---------------------------------------
def bert_forward(p, input_ids, x_embedding, str_embedding):
    bsz, length = input_ids.shape

    # ---- XLA glue: im2col slabs for the input convs (k=5, pad=4), gathers
    def im2col(x, pad):
        out_len = x.shape[1] + 2 * pad - KSIZE + 1
        xp = jnp.pad(x, ((0, 0), (pad, pad), (0, 0)))
        cols = jnp.concatenate([xp[:, t:t + out_len, :] for t in range(KSIZE)],
                               axis=-1)                      # (B, out_len, K*Cin)
        return cols.reshape(x.shape[0] * out_len, -1)

    x_i2c = im2col(x_embedding.astype(jnp.float32), 4)       # (B*L, K*D0)
    s_i2c = im2col(str_embedding.astype(jnp.float32), 4)     # (B*L, K*STR_IN)

    tok = p["tok_embed"][input_ids]                          # (B, L, D0)
    pos = p["pos_embed"][:length][None, :, :]                # (1, L, D0)
    emb = (tok + pos).reshape(bsz * length, D0)

    kpad = (input_ids == 0).astype(jnp.float32)              # (B, L), key-pad mask

    # ---- weight folding (cheap XLA ops outside the kernel)
    # Reference feeds `all_input` to every layer and keeps only the last
    # layer's output -> only the last layer's parameters matter.
    lp = p["layers"][-1]
    wqkv = jnp.concatenate([lp["wq"], lp["wk"], lp["wv"]], axis=1)   # (48, 96)
    bqkv = jnp.concatenate([lp["bq"], lp["bk"], lp["bv"]], axis=1)   # (1, 96)

    wce = p["convE_w"].reshape(KSIZE * D0, D0)               # (160, 32)
    wcs = p["convS_w"].reshape(KSIZE * STR_IN, STR_OUT)      # (60, 16)

    rw1 = p["res_w1"].reshape(KSIZE * D_MODEL, D_MODEL) * p["res_bn1_scale"]
    rb1 = p["res_b1"] * p["res_bn1_scale"] + p["res_bn1_shift"]
    rw2 = p["res_w2"].reshape(KSIZE * D_MODEL, D_MODEL) * p["res_bn2_scale"]
    rb2 = p["res_b2"] * p["res_bn2_scale"] + p["res_bn2_shift"]
    rw = jnp.concatenate([rw1, rw2], axis=0)                 # (2*K*d_model, d_model)

    fcw = jnp.dot(p["fc2_w"], p["cls_w"])                    # fc2 ∘ classifier
    fcb = jnp.dot(p["fc2_b"], p["cls_w"]) + p["cls_b"]

    # ---- pack all bias / LN-gain rows into one slab (one DMA, one VMEM tile)
    bias_rows = [
        p["convE_b"], p["convS_b"], p["emb_ln_g"], p["emb_ln_b"],
        bqkv, lp["bo"], lp["ln_g"], lp["ln_b"],
        lp["b1"], lp["b2"], rb1, rb2, p["fc1_b"], fcb,
    ]
    bias_slab = jnp.zeros((BIAS_ROWS, BIAS_LANES), jnp.float32)
    for i, r in enumerate(bias_rows):
        bias_slab = bias_slab.at[i, :r.shape[-1]].set(r.reshape(-1))

    kernel = functools.partial(
        _fused_bert_kernel, batch=bsz, seq=length,
        n_head=N_HEAD, d_k=D_K, d_v=D_V, d_model=D_MODEL, ksize=KSIZE)

    args = (x_i2c, s_i2c, emb, kpad,
            wce, wcs, wqkv, lp["wo"], lp["w1"], lp["w2"],
            rw, p["fc1_w"], fcw, bias_slab)

    vmem_spec = pl.BlockSpec(memory_space=pltpu.MemorySpace.VMEM)
    logits, representation = pl.pallas_call(
        kernel,
        out_shape=(jax.ShapeDtypeStruct((bsz, 2), jnp.float32),
                   jax.ShapeDtypeStruct((bsz, 2 * D_MODEL), jnp.float32)),
        in_specs=[vmem_spec] * len(args),
        out_specs=(vmem_spec, vmem_spec),
    )(*args)
    return logits, representation


# ----------------------------- main -------------------------------------------
if __name__ == "__main__":
    key = jax.random.PRNGKey(0)
    pkey, k1, k2, k3 = jax.random.split(key, 4)
    params = init_params(pkey)

    input_ids = jax.random.randint(k1, (B, L_SEQ), 1, VOCAB).astype(jnp.int32)
    input_ids = input_ids.at[0, -2:].set(0)   # PAD tokens -> exercises the mask
    x_embedding = jax.random.normal(k2, (B, L_PRE, D0), jnp.float32)
    str_embedding = jax.random.normal(k3, (B, L_PRE, STR_IN), jnp.float32)

    fwd = jax.jit(functools.partial(bert_forward, params))
    logits, representation = fwd(input_ids, x_embedding, str_embedding)
    jax.block_until_ready((logits, representation))

    assert logits.shape == (B, 2)
    assert representation.shape == (B, 2 * D_MODEL)
    assert bool(jnp.all(jnp.isfinite(logits)))
    assert bool(jnp.all(jnp.isfinite(representation)))
    print("KERNEL_OK")
</pallas_src>

<mosaic_0001>
module attributes {stable_mosaic.version = 11 : i64} {
  func.func @_fused_bert_kernel(%arg0: memref<32x160xf32, #tpu.memory_space<vmem>>, %arg1: memref<32x60xf32, #tpu.memory_space<vmem>>, %arg2: memref<32x32xf32, #tpu.memory_space<vmem>>, %arg3: memref<2x16xf32, #tpu.memory_space<vmem>>, %arg4: memref<160x32xf32, #tpu.memory_space<vmem>>, %arg5: memref<60x16xf32, #tpu.memory_space<vmem>>, %arg6: memref<48x96xf32, #tpu.memory_space<vmem>>, %arg7: memref<32x48xf32, #tpu.memory_space<vmem>>, %arg8: memref<48x64xf32, #tpu.memory_space<vmem>>, %arg9: memref<64x48xf32, #tpu.memory_space<vmem>>, %arg10: memref<480x48xf32, #tpu.memory_space<vmem>>, %arg11: memref<96x48xf32, #tpu.memory_space<vmem>>, %arg12: memref<48x2xf32, #tpu.memory_space<vmem>>, %arg13: memref<16x128xf32, #tpu.memory_space<vmem>>, %arg14: memref<2x2xf32, #tpu.memory_space<vmem>>, %arg15: memref<2x96xf32, #tpu.memory_space<vmem>>) attributes {dimension_semantics = [], scalar_prefetch = 0 : i64, scratch_operands = 0 : i64, tpu.core_type = #tpu.core_type<tc>} {
    %c0 = arith.constant 0 : index
    %c0_0 = arith.constant 0 : index
    %0 = vector.load %arg0[%c0, %c0_0] : memref<32x160xf32, #tpu.memory_space<vmem>>, vector<32x160xf32>
    %c0_1 = arith.constant 0 : index
    %c0_2 = arith.constant 0 : index
    %1 = vector.load %arg4[%c0_1, %c0_2] : memref<160x32xf32, #tpu.memory_space<vmem>>, vector<160x32xf32>
    %cst = arith.constant dense<0.000000e+00> : vector<32x32xf32>
    %2 = tpu.matmul %0, %1, %cst {dimension_numbers = #tpu.dot_dimension_numbers<[1], [0], [0], [1], [0, 0, 1, 1], [], []>} : vector<32x160xf32>, vector<160x32xf32>, vector<32x32xf32> -> vector<32x32xf32>
    %c0_3 = arith.constant 0 : index
    %c0_4 = arith.constant 0 : index
    %3 = vector.load %arg13[%c0_3, %c0_4] : memref<16x128xf32, #tpu.memory_space<vmem>>, vector<1x32xf32>
    %4 = vector.broadcast %3 : vector<1x32xf32> to vector<32x32xf32>
    %5 = arith.addf %2, %4 : vector<32x32xf32>
    %cst_5 = arith.constant 0.000000e+00 : f32
    %6 = vector.broadcast %cst_5 : f32 to vector<32x32xf32>
    %7 = arith.maximumf %5, %6 : vector<32x32xf32>
    %c0_6 = arith.constant 0 : index
    %c0_7 = arith.constant 0 : index
    %8 = vector.load %arg1[%c0_6, %c0_7] : memref<32x60xf32, #tpu.memory_space<vmem>>, vector<32x60xf32>
    %c0_8 = arith.constant 0 : index
    %c0_9 = arith.constant 0 : index
    %9 = vector.load %arg5[%c0_8, %c0_9] : memref<60x16xf32, #tpu.memory_space<vmem>>, vector<60x16xf32>
    %cst_10 = arith.constant dense<0.000000e+00> : vector<32x16xf32>
    %10 = tpu.matmul %8, %9, %cst_10 {dimension_numbers = #tpu.dot_dimension_numbers<[1], [0], [0], [1], [0, 0, 1, 1], [], []>} : vector<32x60xf32>, vector<60x16xf32>, vector<32x16xf32> -> vector<32x16xf32>
    %c1 = arith.constant 1 : index
    %c0_11 = arith.constant 0 : index
    %11 = vector.load %arg13[%c1, %c0_11] : memref<16x128xf32, #tpu.memory_space<vmem>>, vector<1x16xf32>
    %12 = vector.broadcast %11 : vector<1x16xf32> to vector<32x16xf32>
    %13 = arith.addf %10, %12 : vector<32x16xf32>
    %cst_12 = arith.constant 0.000000e+00 : f32
    %14 = vector.broadcast %cst_12 : f32 to vector<32x16xf32>
    %15 = arith.maximumf %13, %14 : vector<32x16xf32>
    %c0_13 = arith.constant 0 : index
    %c0_14 = arith.constant 0 : index
    %16 = vector.load %arg2[%c0_13, %c0_14] : memref<32x32xf32, #tpu.memory_space<vmem>>, vector<32x32xf32>
    %c2 = arith.constant 2 : index
    %c0_15 = arith.constant 0 : index
    %17 = vector.load %arg13[%c2, %c0_15] : memref<16x128xf32, #tpu.memory_space<vmem>>, vector<1x32xf32>
    %c3 = arith.constant 3 : index
    %c0_16 = arith.constant 0 : index
    %18 = vector.load %arg13[%c3, %c0_16] : memref<16x128xf32, #tpu.memory_space<vmem>>, vector<1x32xf32>
    %cst_17 = arith.constant dense<0.000000e+00> : vector<32xf32>
    %19 = vector.multi_reduction <add>, %16, %cst_17 [1] : vector<32x32xf32> to vector<32xf32>
    %20 = vector.shape_cast %19 : vector<32xf32> to vector<32x1xf32>
    %cst_18 = arith.constant 3.200000e+01 : f32
    %21 = vector.broadcast %cst_18 : f32 to vector<32x1xf32>
    %22 = arith.divf %20, %21 : vector<32x1xf32>
    %23 = vector.broadcast %22 : vector<32x1xf32> to vector<32x32xf32>
    %24 = arith.subf %16, %23 : vector<32x32xf32>
    %25 = arith.mulf %24, %24 : vector<32x32xf32>
    %cst_19 = arith.constant dense<0.000000e+00> : vector<32xf32>
    %26 = vector.multi_reduction <add>, %25, %cst_19 [1] : vector<32x32xf32> to vector<32xf32>
    %27 = vector.shape_cast %26 : vector<32xf32> to vector<32x1xf32>
    %cst_20 = arith.constant 3.200000e+01 : f32
    %28 = vector.broadcast %cst_20 : f32 to vector<32x1xf32>
    %29 = arith.divf %27, %28 : vector<32x1xf32>
    %30 = vector.broadcast %22 : vector<32x1xf32> to vector<32x32xf32>
    %31 = arith.subf %16, %30 : vector<32x32xf32>
    %cst_21 = arith.constant 9.99999974E-6 : f32
    %32 = vector.broadcast %cst_21 : f32 to vector<32x1xf32>
    %33 = arith.addf %29, %32 : vector<32x1xf32>
    %34 = math.rsqrt %33 : vector<32x1xf32>
    %35 = vector.broadcast %34 : vector<32x1xf32> to vector<32x32xf32>
    %36 = arith.mulf %31, %35 : vector<32x32xf32>
    %37 = vector.broadcast %17 : vector<1x32xf32> to vector<32x32xf32>
    %38 = arith.mulf %36, %37 : vector<32x32xf32>
    %39 = vector.broadcast %18 : vector<1x32xf32> to vector<32x32xf32>
    %40 = arith.addf %38, %39 : vector<32x32xf32>
    %41 = arith.addf %40, %7 : vector<32x32xf32>
    %42 = tpu.concatenate %41, %15 in 1 : vector<32x32xf32>, vector<32x16xf32> -> vector<32x48xf32>
    %c0_22 = arith.constant 0 : index
    %c0_23 = arith.constant 0 : index
    %43 = vector.load %arg6[%c0_22, %c0_23] : memref<48x96xf32, #tpu.memory_space<vmem>>, vector<48x96xf32>
    %cst_24 = arith.constant dense<0.000000e+00> : vector<32x96xf32>
    %44 = tpu.matmul %42, %43, %cst_24 {dimension_numbers = #tpu.dot_dimension_numbers<[1], [0], [0], [1], [0, 0, 1, 1], [], []>} : vector<32x48xf32>, vector<48x96xf32>, vector<32x96xf32> -> vector<32x96xf32>
    %c4 = arith.constant 4 : index
    %c0_25 = arith.constant 0 : index
    %45 = vector.load %arg13[%c4, %c0_25] : memref<16x128xf32, #tpu.memory_space<vmem>>, vector<1x96xf32>
    %46 = vector.broadcast %45 : vector<1x96xf32> to vector<32x96xf32>
    %47 = arith.addf %44, %46 : vector<32x96xf32>
    %c0_26 = arith.constant 0 : index
    %c0_27 = arith.constant 0 : index
    %48 = vector.load %arg3[%c0_26, %c0_27] : memref<2x16xf32, #tpu.memory_space<vmem>>, vector<2x16xf32>
    %49 = vector.extract_strided_slice %47 {offsets = [0, 0], sizes = [16, 32], strides = [1, 1]} : vector<32x96xf32> to vector<16x32xf32>
    %50 = vector.extract_strided_slice %47 {offsets = [0, 32], sizes = [16, 32], strides = [1, 1]} : vector<32x96xf32> to vector<16x32xf32>
    %51 = vector.extract_strided_slice %47 {offsets = [0, 64], sizes = [16, 32], strides = [1, 1]} : vector<32x96xf32> to vector<16x32xf32>
    %52 = vector.extract_strided_slice %48 {offsets = [0, 0], sizes = [1, 16], strides = [1, 1]} : vector<2x16xf32> to vector<1x16xf32>
    %cst_28 = arith.constant 5.000000e-01 : f32
    %53 = vector.broadcast %cst_28 : f32 to vector<1x16xf32>
    %54 = arith.cmpf ogt, %52, %53 : vector<1x16xf32>
    %55 = vector.shape_cast %54 : vector<1x16xi1> to vector<1x16xi1>
    %56 = vector.broadcast %55 : vector<1x16xi1> to vector<16x16xi1>
    %57 = vector.extract_strided_slice %49 {offsets = [0, 0], sizes = [16, 8], strides = [1, 1]} : vector<16x32xf32> to vector<16x8xf32>
    %58 = vector.extract_strided_slice %50 {offsets = [0, 0], sizes = [16, 8], strides = [1, 1]} : vector<16x32xf32> to vector<16x8xf32>
    %59 = vector.extract_strided_slice %51 {offsets = [0, 0], sizes = [16, 8], strides = [1, 1]} : vector<16x32xf32> to vector<16x8xf32>
    %cst_29 = arith.constant dense<0.000000e+00> : vector<16x16xf32>
    %60 = tpu.matmul %57, %58, %cst_29 {dimension_numbers = #tpu.dot_dimension_numbers<[1], [1], [0], [0], [0, 0, 1, 0], [], []>} : vector<16x8xf32>, vector<16x8xf32>, vector<16x16xf32> -> vector<16x16xf32>
    %cst_30 = arith.constant 0.353553385 : f32
    %61 = vector.broadcast %cst_30 : f32 to vector<16x16xf32>
    %62 = arith.mulf %60, %61 : vector<16x16xf32>
    %cst_31 = arith.constant -1.000000e+09 : f32
    %63 = vector.broadcast %cst_31 : f32 to vector<16x16xf32>
    %64 = arith.select %56, %63, %62 : vector<16x16xi1>, vector<16x16xf32>
    %cst_32 = arith.constant dense<0xFF800000> : vector<16xf32>
    %65 = vector.multi_reduction <maximumf>, %64, %cst_32 [1] : vector<16x16xf32> to vector<16xf32>
    %66 = vector.shape_cast %65 : vector<16xf32> to vector<16x1xf32>
    %67 = vector.broadcast %66 : vector<16x1xf32> to vector<16x16xf32>
    %68 = arith.subf %64, %67 : vector<16x16xf32>
    %69 = math.exp %68 : vector<16x16xf32>
    %cst_33 = arith.constant dense<0.000000e+00> : vector<16xf32>
    %70 = vector.multi_reduction <add>, %69, %cst_33 [1] : vector<16x16xf32> to vector<16xf32>
    %71 = vector.shape_cast %70 : vector<16xf32> to vector<16x1xf32>
    %72 = vector.broadcast %71 : vector<16x1xf32> to vector<16x16xf32>
    %73 = arith.divf %69, %72 : vector<16x16xf32>
    %cst_34 = arith.constant dense<0.000000e+00> : vector<16x8xf32>
    %74 = tpu.matmul %73, %59, %cst_34 {dimension_numbers = #tpu.dot_dimension_numbers<[1], [0], [0], [1], [0, 0, 1, 1], [], []>} : vector<16x16xf32>, vector<16x8xf32>, vector<16x8xf32> -> vector<16x8xf32>
    %75 = vector.extract_strided_slice %49 {offsets = [0, 8], sizes = [16, 8], strides = [1, 1]} : vector<16x32xf32> to vector<16x8xf32>
    %76 = vector.extract_strided_slice %50 {offsets = [0, 8], sizes = [16, 8], strides = [1, 1]} : vector<16x32xf32> to vector<16x8xf32>
    %77 = vector.extract_strided_slice %51 {offsets = [0, 8], sizes = [16, 8], strides = [1, 1]} : vector<16x32xf32> to vector<16x8xf32>
    %cst_35 = arith.constant dense<0.000000e+00> : vector<16x16xf32>
    %78 = tpu.matmul %75, %76, %cst_35 {dimension_numbers = #tpu.dot_dimension_numbers<[1], [1], [0], [0], [0, 0, 1, 0], [], []>} : vector<16x8xf32>, vector<16x8xf32>, vector<16x16xf32> -> vector<16x16xf32>
    %cst_36 = arith.constant 0.353553385 : f32
    %79 = vector.broadcast %cst_36 : f32 to vector<16x16xf32>
    %80 = arith.mulf %78, %79 : vector<16x16xf32>
    %cst_37 = arith.constant -1.000000e+09 : f32
    %81 = vector.broadcast %cst_37 : f32 to vector<16x16xf32>
    %82 = arith.select %56, %81, %80 : vector<16x16xi1>, vector<16x16xf32>
    %cst_38 = arith.constant dense<0xFF800000> : vector<16xf32>
    %83 = vector.multi_reduction <maximumf>, %82, %cst_38 [1] : vector<16x16xf32> to vector<16xf32>
    %84 = vector.shape_cast %83 : vector<16xf32> to vector<16x1xf32>
    %85 = vector.broadcast %84 : vector<16x1xf32> to vector<16x16xf32>
    %86 = arith.subf %82, %85 : vector<16x16xf32>
    %87 = math.exp %86 : vector<16x16xf32>
    %cst_39 = arith.constant dense<0.000000e+00> : vector<16xf32>
    %88 = vector.multi_reduction <add>, %87, %cst_39 [1] : vector<16x16xf32> to vector<16xf32>
    %89 = vector.shape_cast %88 : vector<16xf32> to vector<16x1xf32>
    %90 = vector.broadcast %89 : vector<16x1xf32> to vector<16x16xf32>
    %91 = arith.divf %87, %90 : vector<16x16xf32>
    %cst_40 = arith.constant dense<0.000000e+00> : vector<16x8xf32>
    %92 = tpu.matmul %91, %77, %cst_40 {dimension_numbers = #tpu.dot_dimension_numbers<[1], [0], [0], [1], [0, 0, 1, 1], [], []>} : vector<16x16xf32>, vector<16x8xf32>, vector<16x8xf32> -> vector<16x8xf32>
    %93 = vector.extract_strided_slice %49 {offsets = [0, 16], sizes = [16, 8], strides = [1, 1]} : vector<16x32xf32> to vector<16x8xf32>
    %94 = vector.extract_strided_slice %50 {offsets = [0, 16], sizes = [16, 8], strides = [1, 1]} : vector<16x32xf32> to vector<16x8xf32>
    %95 = vector.extract_strided_slice %51 {offsets = [0, 16], sizes = [16, 8], strides = [1, 1]} : vector<16x32xf32> to vector<16x8xf32>
    %cst_41 = arith.constant dense<0.000000e+00> : vector<16x16xf32>
    %96 = tpu.matmul %93, %94, %cst_41 {dimension_numbers = #tpu.dot_dimension_numbers<[1], [1], [0], [0], [0, 0, 1, 0], [], []>} : vector<16x8xf32>, vector<16x8xf32>, vector<16x16xf32> -> vector<16x16xf32>
    %cst_42 = arith.constant 0.353553385 : f32
    %97 = vector.broadcast %cst_42 : f32 to vector<16x16xf32>
    %98 = arith.mulf %96, %97 : vector<16x16xf32>
    %cst_43 = arith.constant -1.000000e+09 : f32
    %99 = vector.broadcast %cst_43 : f32 to vector<16x16xf32>
    %100 = arith.select %56, %99, %98 : vector<16x16xi1>, vector<16x16xf32>
    %cst_44 = arith.constant dense<0xFF800000> : vector<16xf32>
    %101 = vector.multi_reduction <maximumf>, %100, %cst_44 [1] : vector<16x16xf32> to vector<16xf32>
    %102 = vector.shape_cast %101 : vector<16xf32> to vector<16x1xf32>
    %103 = vector.broadcast %102 : vector<16x1xf32> to vector<16x16xf32>
    %104 = arith.subf %100, %103 : vector<16x16xf32>
    %105 = math.exp %104 : vector<16x16xf32>
    %cst_45 = arith.constant dense<0.000000e+00> : vector<16xf32>
    %106 = vector.multi_reduction <add>, %105, %cst_45 [1] : vector<16x16xf32> to vector<16xf32>
    %107 = vector.shape_cast %106 : vector<16xf32> to vector<16x1xf32>
    %108 = vector.broadcast %107 : vector<16x1xf32> to vector<16x16xf32>
    %109 = arith.divf %105, %108 : vector<16x16xf32>
    %cst_46 = arith.constant dense<0.000000e+00> : vector<16x8xf32>
    %110 = tpu.matmul %109, %95, %cst_46 {dimension_numbers = #tpu.dot_dimension_numbers<[1], [0], [0], [1], [0, 0, 1, 1], [], []>} : vector<16x16xf32>, vector<16x8xf32>, vector<16x8xf32> -> vector<16x8xf32>
    %111 = vector.extract_strided_slice %49 {offsets = [0, 24], sizes = [16, 8], strides = [1, 1]} : vector<16x32xf32> to vector<16x8xf32>
    %112 = vector.extract_strided_slice %50 {offsets = [0, 24], sizes = [16, 8], strides = [1, 1]} : vector<16x32xf32> to vector<16x8xf32>
    %113 = vector.extract_strided_slice %51 {offsets = [0, 24], sizes = [16, 8], strides = [1, 1]} : vector<16x32xf32> to vector<16x8xf32>
    %cst_47 = arith.constant dense<0.000000e+00> : vector<16x16xf32>
    %114 = tpu.matmul %111, %112, %cst_47 {dimension_numbers = #tpu.dot_dimension_numbers<[1], [1], [0], [0], [0, 0, 1, 0], [], []>} : vector<16x8xf32>, vector<16x8xf32>, vector<16x16xf32> -> vector<16x16xf32>
    %cst_48 = arith.constant 0.353553385 : f32
    %115 = vector.broadcast %cst_48 : f32 to vector<16x16xf32>
    %116 = arith.mulf %114, %115 : vector<16x16xf32>
    %cst_49 = arith.constant -1.000000e+09 : f32
    %117 = vector.broadcast %cst_49 : f32 to vector<16x16xf32>
    %118 = arith.select %56, %117, %116 : vector<16x16xi1>, vector<16x16xf32>
    %cst_50 = arith.constant dense<0xFF800000> : vector<16xf32>
    %119 = vector.multi_reduction <maximumf>, %118, %cst_50 [1] : vector<16x16xf32> to vector<16xf32>
    %120 = vector.shape_cast %119 : vector<16xf32> to vector<16x1xf32>
    %121 = vector.broadcast %120 : vector<16x1xf32> to vector<16x16xf32>
    %122 = arith.subf %118, %121 : vector<16x16xf32>
    %123 = math.exp %122 : vector<16x16xf32>
    %cst_51 = arith.constant dense<0.000000e+00> : vector<16xf32>
    %124 = vector.multi_reduction <add>, %123, %cst_51 [1] : vector<16x16xf32> to vector<16xf32>
    %125 = vector.shape_cast %124 : vector<16xf32> to vector<16x1xf32>
    %126 = vector.broadcast %125 : vector<16x1xf32> to vector<16x16xf32>
    %127 = arith.divf %123, %126 : vector<16x16xf32>
    %cst_52 = arith.constant dense<0.000000e+00> : vector<16x8xf32>
    %128 = tpu.matmul %127, %113, %cst_52 {dimension_numbers = #tpu.dot_dimension_numbers<[1], [0], [0], [1], [0, 0, 1, 1], [], []>} : vector<16x16xf32>, vector<16x8xf32>, vector<16x8xf32> -> vector<16x8xf32>
    %129 = tpu.concatenate %74, %92, %110, %128 in 1 : vector<16x8xf32>, vector<16x8xf32>, vector<16x8xf32>, vector<16x8xf32> -> vector<16x32xf32>
    %130 = vector.extract_strided_slice %47 {offsets = [16, 0], sizes = [16, 32], strides = [1, 1]} : vector<32x96xf32> to vector<16x32xf32>
    %131 = vector.extract_strided_slice %47 {offsets = [16, 32], sizes = [16, 32], strides = [1, 1]} : vector<32x96xf32> to vector<16x32xf32>
    %132 = vector.extract_strided_slice %47 {offsets = [16, 64], sizes = [16, 32], strides = [1, 1]} : vector<32x96xf32> to vector<16x32xf32>
    %133 = vector.extract_strided_slice %48 {offsets = [1, 0], sizes = [1, 16], strides = [1, 1]} : vector<2x16xf32> to vector<1x16xf32>
    %cst_53 = arith.constant 5.000000e-01 : f32
    %134 = vector.broadcast %cst_53 : f32 to vector<1x16xf32>
    %135 = arith.cmpf ogt, %133, %134 : vector<1x16xf32>
    %136 = vector.shape_cast %135 : vector<1x16xi1> to vector<1x16xi1>
    %137 = vector.broadcast %136 : vector<1x16xi1> to vector<16x16xi1>
    %138 = vector.extract_strided_slice %130 {offsets = [0, 0], sizes = [16, 8], strides = [1, 1]} : vector<16x32xf32> to vector<16x8xf32>
    %139 = vector.extract_strided_slice %131 {offsets = [0, 0], sizes = [16, 8], strides = [1, 1]} : vector<16x32xf32> to vector<16x8xf32>
    %140 = vector.extract_strided_slice %132 {offsets = [0, 0], sizes = [16, 8], strides = [1, 1]} : vector<16x32xf32> to vector<16x8xf32>
    %cst_54 = arith.constant dense<0.000000e+00> : vector<16x16xf32>
    %141 = tpu.matmul %138, %139, %cst_54 {dimension_numbers = #tpu.dot_dimension_numbers<[1], [1], [0], [0], [0, 0, 1, 0], [], []>} : vector<16x8xf32>, vector<16x8xf32>, vector<16x16xf32> -> vector<16x16xf32>
    %cst_55 = arith.constant 0.353553385 : f32
    %142 = vector.broadcast %cst_55 : f32 to vector<16x16xf32>
    %143 = arith.mulf %141, %142 : vector<16x16xf32>
    %cst_56 = arith.constant -1.000000e+09 : f32
    %144 = vector.broadcast %cst_56 : f32 to vector<16x16xf32>
    %145 = arith.select %137, %144, %143 : vector<16x16xi1>, vector<16x16xf32>
    %cst_57 = arith.constant dense<0xFF800000> : vector<16xf32>
    %146 = vector.multi_reduction <maximumf>, %145, %cst_57 [1] : vector<16x16xf32> to vector<16xf32>
    %147 = vector.shape_cast %146 : vector<16xf32> to vector<16x1xf32>
    %148 = vector.broadcast %147 : vector<16x1xf32> to vector<16x16xf32>
    %149 = arith.subf %145, %148 : vector<16x16xf32>
    %150 = math.exp %149 : vector<16x16xf32>
    %cst_58 = arith.constant dense<0.000000e+00> : vector<16xf32>
    %151 = vector.multi_reduction <add>, %150, %cst_58 [1] : vector<16x16xf32> to vector<16xf32>
    %152 = vector.shape_cast %151 : vector<16xf32> to vector<16x1xf32>
    %153 = vector.broadcast %152 : vector<16x1xf32> to vector<16x16xf32>
    %154 = arith.divf %150, %153 : vector<16x16xf32>
    %cst_59 = arith.constant dense<0.000000e+00> : vector<16x8xf32>
    %155 = tpu.matmul %154, %140, %cst_59 {dimension_numbers = #tpu.dot_dimension_numbers<[1], [0], [0], [1], [0, 0, 1, 1], [], []>} : vector<16x16xf32>, vector<16x8xf32>, vector<16x8xf32> -> vector<16x8xf32>
    %156 = vector.extract_strided_slice %130 {offsets = [0, 8], sizes = [16, 8], strides = [1, 1]} : vector<16x32xf32> to vector<16x8xf32>
    %157 = vector.extract_strided_slice %131 {offsets = [0, 8], sizes = [16, 8], strides = [1, 1]} : vector<16x32xf32> to vector<16x8xf32>
    %158 = vector.extract_strided_slice %132 {offsets = [0, 8], sizes = [16, 8], strides = [1, 1]} : vector<16x32xf32> to vector<16x8xf32>
    %cst_60 = arith.constant dense<0.000000e+00> : vector<16x16xf32>
    %159 = tpu.matmul %156, %157, %cst_60 {dimension_numbers = #tpu.dot_dimension_numbers<[1], [1], [0], [0], [0, 0, 1, 0], [], []>} : vector<16x8xf32>, vector<16x8xf32>, vector<16x16xf32> -> vector<16x16xf32>
    %cst_61 = arith.constant 0.353553385 : f32
    %160 = vector.broadcast %cst_61 : f32 to vector<16x16xf32>
    %161 = arith.mulf %159, %160 : vector<16x16xf32>
    %cst_62 = arith.constant -1.000000e+09 : f32
    %162 = vector.broadcast %cst_62 : f32 to vector<16x16xf32>
    %163 = arith.select %137, %162, %161 : vector<16x16xi1>, vector<16x16xf32>
    %cst_63 = arith.constant dense<0xFF800000> : vector<16xf32>
    %164 = vector.multi_reduction <maximumf>, %163, %cst_63 [1] : vector<16x16xf32> to vector<16xf32>
    %165 = vector.shape_cast %164 : vector<16xf32> to vector<16x1xf32>
    %166 = vector.broadcast %165 : vector<16x1xf32> to vector<16x16xf32>
    %167 = arith.subf %163, %166 : vector<16x16xf32>
    %168 = math.exp %167 : vector<16x16xf32>
    %cst_64 = arith.constant dense<0.000000e+00> : vector<16xf32>
    %169 = vector.multi_reduction <add>, %168, %cst_64 [1] : vector<16x16xf32> to vector<16xf32>
    %170 = vector.shape_cast %169 : vector<16xf32> to vector<16x1xf32>
    %171 = vector.broadcast %170 : vector<16x1xf32> to vector<16x16xf32>
    %172 = arith.divf %168, %171 : vector<16x16xf32>
    %cst_65 = arith.constant dense<0.000000e+00> : vector<16x8xf32>
    %173 = tpu.matmul %172, %158, %cst_65 {dimension_numbers = #tpu.dot_dimension_numbers<[1], [0], [0], [1], [0, 0, 1, 1], [], []>} : vector<16x16xf32>, vector<16x8xf32>, vector<16x8xf32> -> vector<16x8xf32>
    %174 = vector.extract_strided_slice %130 {offsets = [0, 16], sizes = [16, 8], strides = [1, 1]} : vector<16x32xf32> to vector<16x8xf32>
    %175 = vector.extract_strided_slice %131 {offsets = [0, 16], sizes = [16, 8], strides = [1, 1]} : vector<16x32xf32> to vector<16x8xf32>
    %176 = vector.extract_strided_slice %132 {offsets = [0, 16], sizes = [16, 8], strides = [1, 1]} : vector<16x32xf32> to vector<16x8xf32>
    %cst_66 = arith.constant dense<0.000000e+00> : vector<16x16xf32>
    %177 = tpu.matmul %174, %175, %cst_66 {dimension_numbers = #tpu.dot_dimension_numbers<[1], [1], [0], [0], [0, 0, 1, 0], [], []>} : vector<16x8xf32>, vector<16x8xf32>, vector<16x16xf32> -> vector<16x16xf32>
    %cst_67 = arith.constant 0.353553385 : f32
    %178 = vector.broadcast %cst_67 : f32 to vector<16x16xf32>
    %179 = arith.mulf %177, %178 : vector<16x16xf32>
    %cst_68 = arith.constant -1.000000e+09 : f32
    %180 = vector.broadcast %cst_68 : f32 to vector<16x16xf32>
    %181 = arith.select %137, %180, %179 : vector<16x16xi1>, vector<16x16xf32>
    %cst_69 = arith.constant dense<0xFF800000> : vector<16xf32>
    %182 = vector.multi_reduction <maximumf>, %181, %cst_69 [1] : vector<16x16xf32> to vector<16xf32>
    %183 = vector.shape_cast %182 : vector<16xf32> to vector<16x1xf32>
    %184 = vector.broadcast %183 : vector<16x1xf32> to vector<16x16xf32>
    %185 = arith.subf %181, %184 : vector<16x16xf32>
    %186 = math.exp %185 : vector<16x16xf32>
    %cst_70 = arith.constant dense<0.000000e+00> : vector<16xf32>
    %187 = vector.multi_reduction <add>, %186, %cst_70 [1] : vector<16x16xf32> to vector<16xf32>
    %188 = vector.shape_cast %187 : vector<16xf32> to vector<16x1xf32>
    %189 = vector.broadcast %188 : vector<16x1xf32> to vector<16x16xf32>
    %190 = arith.divf %186, %189 : vector<16x16xf32>
    %cst_71 = arith.constant dense<0.000000e+00> : vector<16x8xf32>
    %191 = tpu.matmul %190, %176, %cst_71 {dimension_numbers = #tpu.dot_dimension_numbers<[1], [0], [0], [1], [0, 0, 1, 1], [], []>} : vector<16x16xf32>, vector<16x8xf32>, vector<16x8xf32> -> vector<16x8xf32>
    %192 = vector.extract_strided_slice %130 {offsets = [0, 24], sizes = [16, 8], strides = [1, 1]} : vector<16x32xf32> to vector<16x8xf32>
    %193 = vector.extract_strided_slice %131 {offsets = [0, 24], sizes = [16, 8], strides = [1, 1]} : vector<16x32xf32> to vector<16x8xf32>
    %194 = vector.extract_strided_slice %132 {offsets = [0, 24], sizes = [16, 8], strides = [1, 1]} : vector<16x32xf32> to vector<16x8xf32>
    %cst_72 = arith.constant dense<0.000000e+00> : vector<16x16xf32>
    %195 = tpu.matmul %192, %193, %cst_72 {dimension_numbers = #tpu.dot_dimension_numbers<[1], [1], [0], [0], [0, 0, 1, 0], [], []>} : vector<16x8xf32>, vector<16x8xf32>, vector<16x16xf32> -> vector<16x16xf32>
    %cst_73 = arith.constant 0.353553385 : f32
    %196 = vector.broadcast %cst_73 : f32 to vector<16x16xf32>
    %197 = arith.mulf %195, %196 : vector<16x16xf32>
    %cst_74 = arith.constant -1.000000e+09 : f32
    %198 = vector.broadcast %cst_74 : f32 to vector<16x16xf32>
    %199 = arith.select %137, %198, %197 : vector<16x16xi1>, vector<16x16xf32>
    %cst_75 = arith.constant dense<0xFF800000> : vector<16xf32>
    %200 = vector.multi_reduction <maximumf>, %199, %cst_75 [1] : vector<16x16xf32> to vector<16xf32>
    %201 = vector.shape_cast %200 : vector<16xf32> to vector<16x1xf32>
    %202 = vector.broadcast %201 : vector<16x1xf32> to vector<16x16xf32>
    %203 = arith.subf %199, %202 : vector<16x16xf32>
    %204 = math.exp %203 : vector<16x16xf32>
    %cst_76 = arith.constant dense<0.000000e+00> : vector<16xf32>
    %205 = vector.multi_reduction <add>, %204, %cst_76 [1] : vector<16x16xf32> to vector<16xf32>
    %206 = vector.shape_cast %205 : vector<16xf32> to vector<16x1xf32>
    %207 = vector.broadcast %206 : vector<16x1xf32> to vector<16x16xf32>
    %208 = arith.divf %204, %207 : vector<16x16xf32>
    %cst_77 = arith.constant dense<0.000000e+00> : vector<16x8xf32>
    %209 = tpu.matmul %208, %194, %cst_77 {dimension_numbers = #tpu.dot_dimension_numbers<[1], [0], [0], [1], [0, 0, 1, 1], [], []>} : vector<16x16xf32>, vector<16x8xf32>, vector<16x8xf32> -> vector<16x8xf32>
    %210 = tpu.concatenate %155, %173, %191, %209 in 1 : vector<16x8xf32>, vector<16x8xf32>, vector<16x8xf32>, vector<16x8xf32> -> vector<16x32xf32>
    %211 = tpu.concatenate %129, %210 in 0 : vector<16x32xf32>, vector<16x32xf32> -> vector<32x32xf32>
    %c0_78 = arith.constant 0 : index
    %c0_79 = arith.constant 0 : index
    %212 = vector.load %arg7[%c0_78, %c0_79] : memref<32x48xf32, #tpu.memory_space<vmem>>, vector<32x48xf32>
    %cst_80 = arith.constant dense<0.000000e+00> : vector<32x48xf32>
    %213 = tpu.matmul %211, %212, %cst_80 {dimension_numbers = #tpu.dot_dimension_numbers<[1], [0], [0], [1], [0, 0, 1, 1], [], []>} : vector<32x32xf32>, vector<32x48xf32>, vector<32x48xf32> -> vector<32x48xf32>
    %c5 = arith.constant 5 : index
    %c0_81 = arith.constant 0 : index
    %214 = vector.load %arg13[%c5, %c0_81] : memref<16x128xf32, #tpu.memory_space<vmem>>, vector<1x48xf32>
    %215 = vector.broadcast %214 : vector<1x48xf32> to vector<32x48xf32>
    %216 = arith.addf %213, %215 : vector<32x48xf32>
    %217 = arith.addf %216, %42 : vector<32x48xf32>
    %c6 = arith.constant 6 : index
    %c0_82 = arith.constant 0 : index
    %218 = vector.load %arg13[%c6, %c0_82] : memref<16x128xf32, #tpu.memory_space<vmem>>, vector<1x48xf32>
    %c7 = arith.constant 7 : index
    %c0_83 = arith.constant 0 : index
    %219 = vector.load %arg13[%c7, %c0_83] : memref<16x128xf32, #tpu.memory_space<vmem>>, vector<1x48xf32>
    %cst_84 = arith.constant dense<0.000000e+00> : vector<32xf32>
    %220 = vector.multi_reduction <add>, %217, %cst_84 [1] : vector<32x48xf32> to vector<32xf32>
    %221 = vector.shape_cast %220 : vector<32xf32> to vector<32x1xf32>
    %cst_85 = arith.constant 4.800000e+01 : f32
    %222 = vector.broadcast %cst_85 : f32 to vector<32x1xf32>
    %223 = arith.divf %221, %222 : vector<32x1xf32>
    %224 = vector.broadcast %223 : vector<32x1xf32> to vector<32x48xf32>
    %225 = arith.subf %217, %224 : vector<32x48xf32>
    %226 = arith.mulf %225, %225 : vector<32x48xf32>
    %cst_86 = arith.constant dense<0.000000e+00> : vector<32xf32>
    %227 = vector.multi_reduction <add>, %226, %cst_86 [1] : vector<32x48xf32> to vector<32xf32>
    %228 = vector.shape_cast %227 : vector<32xf32> to vector<32x1xf32>
    %cst_87 = arith.constant 4.800000e+01 : f32
    %229 = vector.broadcast %cst_87 : f32 to vector<32x1xf32>
    %230 = arith.divf %228, %229 : vector<32x1xf32>
    %231 = vector.broadcast %223 : vector<32x1xf32> to vector<32x48xf32>
    %232 = arith.subf %217, %231 : vector<32x48xf32>
    %cst_88 = arith.constant 9.99999974E-6 : f32
    %233 = vector.broadcast %cst_88 : f32 to vector<32x1xf32>
    %234 = arith.addf %230, %233 : vector<32x1xf32>
    %235 = math.rsqrt %234 : vector<32x1xf32>
    %236 = vector.broadcast %235 : vector<32x1xf32> to vector<32x48xf32>
    %237 = arith.mulf %232, %236 : vector<32x48xf32>
    %238 = vector.broadcast %218 : vector<1x48xf32> to vector<32x48xf32>
    %239 = arith.mulf %237, %238 : vector<32x48xf32>
    %240 = vector.broadcast %219 : vector<1x48xf32> to vector<32x48xf32>
    %241 = arith.addf %239, %240 : vector<32x48xf32>
    %c0_89 = arith.constant 0 : index
    %c0_90 = arith.constant 0 : index
    %242 = vector.load %arg8[%c0_89, %c0_90] : memref<48x64xf32, #tpu.memory_space<vmem>>, vector<48x64xf32>
    %cst_91 = arith.constant dense<0.000000e+00> : vector<32x64xf32>
    %243 = tpu.matmul %241, %242, %cst_91 {dimension_numbers = #tpu.dot_dimension_numbers<[1], [0], [0], [1], [0, 0, 1, 1], [], []>} : vector<32x48xf32>, vector<48x64xf32>, vector<32x64xf32> -> vector<32x64xf32>
    %c8 = arith.constant 8 : index
    %c0_92 = arith.constant 0 : index
    %244 = vector.load %arg13[%c8, %c0_92] : memref<16x128xf32, #tpu.memory_space<vmem>>, vector<1x64xf32>
    %245 = vector.broadcast %244 : vector<1x64xf32> to vector<32x64xf32>
    %246 = arith.addf %243, %245 : vector<32x64xf32>
    %cst_93 = arith.constant 0.000000e+00 : f32
    %247 = vector.broadcast %cst_93 : f32 to vector<32x64xf32>
    %248 = arith.maximumf %246, %247 : vector<32x64xf32>
    %c0_94 = arith.constant 0 : index
    %c0_95 = arith.constant 0 : index
    %249 = vector.load %arg9[%c0_94, %c0_95] : memref<64x48xf32, #tpu.memory_space<vmem>>, vector<64x48xf32>
    %cst_96 = arith.constant dense<0.000000e+00> : vector<32x48xf32>
    %250 = tpu.matmul %248, %249, %cst_96 {dimension_numbers = #tpu.dot_dimension_numbers<[1], [0], [0], [1], [0, 0, 1, 1], [], []>} : vector<32x64xf32>, vector<64x48xf32>, vector<32x48xf32> -> vector<32x48xf32>
    %c9 = arith.constant 9 : index
    %c0_97 = arith.constant 0 : index
    %251 = vector.load %arg13[%c9, %c0_97] : memref<16x128xf32, #tpu.memory_space<vmem>>, vector<1x48xf32>
    %252 = vector.broadcast %251 : vector<1x48xf32> to vector<32x48xf32>
    %253 = arith.addf %250, %252 : vector<32x48xf32>
    %c0_98 = arith.constant 0 : index
    %c0_99 = arith.constant 0 : index
    %254 = vector.load %arg10[%c0_98, %c0_99] : memref<480x48xf32, #tpu.memory_space<vmem>>, vector<240x48xf32>
    %c240 = arith.constant 240 : index
    %c0_100 = arith.constant 0 : index
    %255 = vector.load %arg10[%c240, %c0_100] : memref<480x48xf32, #tpu.memory_space<vmem>>, vector<240x48xf32>
    %cst_101 = arith.constant 0.000000e+00 : f32
    %256 = vector.broadcast %cst_101 : f32 to vector<2x48xf32>
    %257 = vector.extract_strided_slice %42 {offsets = [0, 0], sizes = [16, 48], strides = [1, 1]} : vector<32x48xf32> to vector<16x48xf32>
    %258 = tpu.concatenate %256, %257, %256 in 0 : vector<2x48xf32>, vector<16x48xf32>, vector<2x48xf32> -> vector<20x48xf32>
    %259 = vector.extract_strided_slice %258 {offsets = [0, 0], sizes = [16, 48], strides = [1, 1]} : vector<20x48xf32> to vector<16x48xf32>
    %260 = vector.extract_strided_slice %258 {offsets = [1, 0], sizes = [16, 48], strides = [1, 1]} : vector<20x48xf32> to vector<16x48xf32>
    %261 = vector.extract_strided_slice %258 {offsets = [2, 0], sizes = [16, 48], strides = [1, 1]} : vector<20x48xf32> to vector<16x48xf32>
    %262 = vector.extract_strided_slice %258 {offsets = [3, 0], sizes = [16, 48], strides = [1, 1]} : vector<20x48xf32> to vector<16x48xf32>
    %263 = vector.extract_strided_slice %258 {offsets = [4, 0], sizes = [16, 48], strides = [1, 1]} : vector<20x48xf32> to vector<16x48xf32>
    %264 = tpu.concatenate %259, %260, %261, %262, %263 in 1 : vector<16x48xf32>, vector<16x48xf32>, vector<16x48xf32>, vector<16x48xf32>, vector<16x48xf32> -> vector<16x240xf32>
    %265 = vector.extract_strided_slice %42 {offsets = [16, 0], sizes = [16, 48], strides = [1, 1]} : vector<32x48xf32> to vector<16x48xf32>
    %266 = tpu.concatenate %256, %265, %256 in 0 : vector<2x48xf32>, vector<16x48xf32>, vector<2x48xf32> -> vector<20x48xf32>
    %267 = vector.extract_strided_slice %266 {offsets = [0, 0], sizes = [16, 48], strides = [1, 1]} : vector<20x48xf32> to vector<16x48xf32>
    %268 = vector.extract_strided_slice %266 {offsets = [1, 0], sizes = [16, 48], strides = [1, 1]} : vector<20x48xf32> to vector<16x48xf32>
    %269 = vector.extract_strided_slice %266 {offsets = [2, 0], sizes = [16, 48], strides = [1, 1]} : vector<20x48xf32> to vector<16x48xf32>
    %270 = vector.extract_strided_slice %266 {offsets = [3, 0], sizes = [16, 48], strides = [1, 1]} : vector<20x48xf32> to vector<16x48xf32>
    %271 = vector.extract_strided_slice %266 {offsets = [4, 0], sizes = [16, 48], strides = [1, 1]} : vector<20x48xf32> to vector<16x48xf32>
    %272 = tpu.concatenate %267, %268, %269, %270, %271 in 1 : vector<16x48xf32>, vector<16x48xf32>, vector<16x48xf32>, vector<16x48xf32>, vector<16x48xf32> -> vector<16x240xf32>
    %273 = tpu.concatenate %264, %272 in 0 : vector<16x240xf32>, vector<16x240xf32> -> vector<32x240xf32>
    %cst_102 = arith.constant dense<0.000000e+00> : vector<32x48xf32>
    %274 = tpu.matmul %273, %254, %cst_102 {dimension_numbers = #tpu.dot_dimension_numbers<[1], [0], [0], [1], [0, 0, 1, 1], [], []>} : vector<32x240xf32>, vector<240x48xf32>, vector<32x48xf32> -> vector<32x48xf32>
    %c10 = arith.constant 10 : index
    %c0_103 = arith.constant 0 : index
    %275 = vector.load %arg13[%c10, %c0_103] : memref<16x128xf32, #tpu.memory_space<vmem>>, vector<1x48xf32>
    %276 = vector.broadcast %275 : vector<1x48xf32> to vector<32x48xf32>
    %277 = arith.addf %274, %276 : vector<32x48xf32>
    %cst_104 = arith.constant 0.000000e+00 : f32
    %278 = vector.broadcast %cst_104 : f32 to vector<32x48xf32>
    %279 = arith.maximumf %277, %278 : vector<32x48xf32>
    %cst_105 = arith.constant 0.000000e+00 : f32
    %280 = vector.broadcast %cst_105 : f32 to vector<2x48xf32>
    %281 = vector.extract_strided_slice %279 {offsets = [0, 0], sizes = [16, 48], strides = [1, 1]} : vector<32x48xf32> to vector<16x48xf32>
    %282 = tpu.concatenate %280, %281, %280 in 0 : vector<2x48xf32>, vector<16x48xf32>, vector<2x48xf32> -> vector<20x48xf32>
    %283 = vector.extract_strided_slice %282 {offsets = [0, 0], sizes = [16, 48], strides = [1, 1]} : vector<20x48xf32> to vector<16x48xf32>
    %284 = vector.extract_strided_slice %282 {offsets = [1, 0], sizes = [16, 48], strides = [1, 1]} : vector<20x48xf32> to vector<16x48xf32>
    %285 = vector.extract_strided_slice %282 {offsets = [2, 0], sizes = [16, 48], strides = [1, 1]} : vector<20x48xf32> to vector<16x48xf32>
    %286 = vector.extract_strided_slice %282 {offsets = [3, 0], sizes = [16, 48], strides = [1, 1]} : vector<20x48xf32> to vector<16x48xf32>
    %287 = vector.extract_strided_slice %282 {offsets = [4, 0], sizes = [16, 48], strides = [1, 1]} : vector<20x48xf32> to vector<16x48xf32>
    %288 = tpu.concatenate %283, %284, %285, %286, %287 in 1 : vector<16x48xf32>, vector<16x48xf32>, vector<16x48xf32>, vector<16x48xf32>, vector<16x48xf32> -> vector<16x240xf32>
    %289 = vector.extract_strided_slice %279 {offsets = [16, 0], sizes = [16, 48], strides = [1, 1]} : vector<32x48xf32> to vector<16x48xf32>
    %290 = tpu.concatenate %280, %289, %280 in 0 : vector<2x48xf32>, vector<16x48xf32>, vector<2x48xf32> -> vector<20x48xf32>
    %291 = vector.extract_strided_slice %290 {offsets = [0, 0], sizes = [16, 48], strides = [1, 1]} : vector<20x48xf32> to vector<16x48xf32>
    %292 = vector.extract_strided_slice %290 {offsets = [1, 0], sizes = [16, 48], strides = [1, 1]} : vector<20x48xf32> to vector<16x48xf32>
    %293 = vector.extract_strided_slice %290 {offsets = [2, 0], sizes = [16, 48], strides = [1, 1]} : vector<20x48xf32> to vector<16x48xf32>
    %294 = vector.extract_strided_slice %290 {offsets = [3, 0], sizes = [16, 48], strides = [1, 1]} : vector<20x48xf32> to vector<16x48xf32>
    %295 = vector.extract_strided_slice %290 {offsets = [4, 0], sizes = [16, 48], strides = [1, 1]} : vector<20x48xf32> to vector<16x48xf32>
    %296 = tpu.concatenate %291, %292, %293, %294, %295 in 1 : vector<16x48xf32>, vector<16x48xf32>, vector<16x48xf32>, vector<16x48xf32>, vector<16x48xf32> -> vector<16x240xf32>
    %297 = tpu.concatenate %288, %296 in 0 : vector<16x240xf32>, vector<16x240xf32> -> vector<32x240xf32>
    %cst_106 = arith.constant dense<0.000000e+00> : vector<32x48xf32>
    %298 = tpu.matmul %297, %255, %cst_106 {dimension_numbers = #tpu.dot_dimension_numbers<[1], [0], [0], [1], [0, 0, 1, 1], [], []>} : vector<32x240xf32>, vector<240x48xf32>, vector<32x48xf32> -> vector<32x48xf32>
    %c11 = arith.constant 11 : index
    %c0_107 = arith.constant 0 : index
    %299 = vector.load %arg13[%c11, %c0_107] : memref<16x128xf32, #tpu.memory_space<vmem>>, vector<1x48xf32>
    %300 = vector.broadcast %299 : vector<1x48xf32> to vector<32x48xf32>
    %301 = arith.addf %298, %300 : vector<32x48xf32>
    %302 = arith.addf %301, %42 : vector<32x48xf32>
    %cst_108 = arith.constant 0.000000e+00 : f32
    %303 = vector.broadcast %cst_108 : f32 to vector<32x48xf32>
    %304 = arith.maximumf %302, %303 : vector<32x48xf32>
    %305 = tpu.concatenate %253, %304 in 1 : vector<32x48xf32>, vector<32x48xf32> -> vector<32x96xf32>
    %306 = vector.extract_strided_slice %305 {offsets = [0, 0], sizes = [1, 96], strides = [1, 1]} : vector<32x96xf32> to vector<1x96xf32>
    %307 = vector.extract_strided_slice %305 {offsets = [16, 0], sizes = [1, 96], strides = [1, 1]} : vector<32x96xf32> to vector<1x96xf32>
    %308 = tpu.concatenate %306, %307 in 0 : vector<1x96xf32>, vector<1x96xf32> -> vector<2x96xf32>
    %c0_109 = arith.constant 0 : index
    %c0_110 = arith.constant 0 : index
    %309 = vector.load %arg11[%c0_109, %c0_110] : memref<96x48xf32, #tpu.memory_space<vmem>>, vector<96x48xf32>
    %cst_111 = arith.constant dense<0.000000e+00> : vector<2x48xf32>
    %310 = tpu.matmul %308, %309, %cst_111 {dimension_numbers = #tpu.dot_dimension_numbers<[1], [0], [0], [1], [0, 0, 1, 1], [], []>} : vector<2x96xf32>, vector<96x48xf32>, vector<2x48xf32> -> vector<2x48xf32>
    %c12 = arith.constant 12 : index
    %c0_112 = arith.constant 0 : index
    %311 = vector.load %arg13[%c12, %c0_112] : memref<16x128xf32, #tpu.memory_space<vmem>>, vector<1x48xf32>
    %312 = vector.broadcast %311 : vector<1x48xf32> to vector<2x48xf32>
    %313 = arith.addf %310, %312 : vector<2x48xf32>
    %cst_113 = arith.constant 0.000000e+00 : f32
    %314 = vector.broadcast %cst_113 : f32 to vector<2x48xf32>
    %315 = arith.maximumf %313, %314 : vector<2x48xf32>
    %c0_114 = arith.constant 0 : index
    %c0_115 = arith.constant 0 : index
    %316 = vector.load %arg12[%c0_114, %c0_115] : memref<48x2xf32, #tpu.memory_space<vmem>>, vector<48x2xf32>
    %cst_116 = arith.constant dense<0.000000e+00> : vector<2x2xf32>
    %317 = tpu.matmul %315, %316, %cst_116 {dimension_numbers = #tpu.dot_dimension_numbers<[1], [0], [0], [1], [0, 0, 1, 1], [], []>} : vector<2x48xf32>, vector<48x2xf32>, vector<2x2xf32> -> vector<2x2xf32>
    %c13 = arith.constant 13 : index
    %c0_117 = arith.constant 0 : index
    %318 = vector.load %arg13[%c13, %c0_117] : memref<16x128xf32, #tpu.memory_space<vmem>>, vector<1x2xf32>
    %319 = vector.broadcast %318 : vector<1x2xf32> to vector<2x2xf32>
    %320 = arith.addf %317, %319 : vector<2x2xf32>
    %c0_118 = arith.constant 0 : index
    %c0_119 = arith.constant 0 : index
    %321 = vector.load %arg14[%c0_118, %c0_119] : memref<2x2xf32, #tpu.memory_space<vmem>>, vector<2x2xf32>
    tpu.vector_store %arg14[%c0_118, %c0_119], %320 {strides = array<i32>} : memref<2x2xf32, #tpu.memory_space<vmem>>, vector<2x2xf32>,
    %c0_120 = arith.constant 0 : index
    %c0_121 = arith.constant 0 : index
    %322 = vector.load %arg15[%c0_120, %c0_121] : memref<2x96xf32, #tpu.memory_space<vmem>>, vector<2x96xf32>
    tpu.vector_store %arg15[%c0_120, %c0_121], %308 {strides = array<i32>} : memref<2x96xf32, #tpu.memory_space<vmem>>, vector<2x96xf32>,
    return
  }
}

</mosaic_0001>

<llo_original>
// kernel: bert_forward.1
$region0: #{bert_forward.1}
  #allocation0 [shape = 'u32[]', space=smem, size = 0x4, offset = 0x4, fixed_abs, tag = 'smem constant byte address 0x4 - core index']
  #allocation1 [shape = 'u32[144,128]{1,0:T(1,128)}', space=vmem, size = 0x12000, scoped, tag = 'internal scratch']
  %s0 = inlined_call_operand.vmem [shape: f32[32,160], index: 0, kind: input, shape index: {}]
  %s1 = inlined_call_operand.vmem [shape: f32[32,60], index: 1, kind: input, shape index: {}]
  %s2 = inlined_call_operand.vmem [shape: f32[32,32], index: 2, kind: input, shape index: {}]
  %s3 = inlined_call_operand.vmem [shape: f32[2,16], index: 3, kind: input, shape index: {}]
  %s4 = inlined_call_operand.vmem [shape: f32[160,32], index: 4, kind: input, shape index: {}]
  %s5 = inlined_call_operand.vmem [shape: f32[60,16], index: 5, kind: input, shape index: {}]
  %s6 = inlined_call_operand.vmem [shape: f32[48,96], index: 6, kind: input, shape index: {}]
  %s7 = inlined_call_operand.vmem [shape: f32[32,48], index: 7, kind: input, shape index: {}]
  %s8 = inlined_call_operand.vmem [shape: f32[48,64], index: 8, kind: input, shape index: {}]
  %s9 = inlined_call_operand.vmem [shape: f32[64,48], index: 9, kind: input, shape index: {}]
  %s10 = inlined_call_operand.vmem [shape: f32[480,48], index: 10, kind: input, shape index: {}]
  %s11 = inlined_call_operand.vmem [shape: f32[96,48], index: 11, kind: input, shape index: {}]
  %s12 = inlined_call_operand.vmem [shape: f32[48,2], index: 12, kind: input, shape index: {}]
  %s13 = inlined_call_operand.vmem [shape: f32[16,128], index: 13, kind: input, shape index: {}]
  %s14 = inlined_call_operand.hbm [shape: f32[2,2], index: 14, kind: output, shape index: {0}]
  %s15 = inlined_call_operand.hbm [shape: f32[2,96], index: 15, kind: output, shape index: {1}]
  %16 = xla_tuple %s14, %s15
  %s17 = sld [smem:[#allocation0]]
  $region74: #{bert_forward.1} parent=0
    _
  %s19 = ssub.s32 1, %s17
  %s20 = scalar_select 0, %s19, %s17
  $region1: #{bert_forward.1} parent=0
    #allocation2 [shape = 'u8[1024]{0}', space=vmem, size = 0x400, scoped, tag = 'output window, operand 0, single buffered']
    #allocation3 [shape = 's32[1]{0}', space=sflag, size = 0x4, scoped, tag = 'scoped memory for bert_forward.1']
    #allocation4 [shape = 'u8[1024]{0}', space=vmem, size = 0x400, scoped, tag = 'output window, operand 1, single buffered']
    #allocation5 [shape = 's32[1]{0}', space=sflag, size = 0x4, scoped, tag = 'scoped memory for bert_forward.1']
    %21 = vsyncpa [#allocation3], 0
    %22 = vsyncpa [#allocation5], 0
    // Predicated region
    $region2: #{bert_forward.1} parent=1 // pred_check
      _
    $region3: #{bert_forward.1} parent=1 // pred_check_branch
      %24 = sbr.rel (0) target = $region5
    $region4: #{bert_forward.1} parent=1 // pred_region
      _
    $region5: #{bert_forward.1} parent=1 // pred_fallthru
      _
    // Predicated region
    $region6: #{bert_forward.1} parent=1 // pred_check
      _
    $region7: #{bert_forward.1} parent=1 // pred_check_branch
      %26 = sbr.rel (0) target = $region9
    $region8: #{bert_forward.1} parent=1 // pred_region
      _
    $region9: #{bert_forward.1} parent=1 // pred_fallthru
      _
    // Predicated region
    $region10: #{bert_forward.1} parent=1 // pred_check
      _
    $region11: #{bert_forward.1} parent=1 // pred_check_branch
      %28 = sbr.rel (0) target = $region13
    $region12: #{bert_forward.1} parent=1 // pred_region
      _
    $region13: #{bert_forward.1} parent=1 // pred_fallthru
      _
    // Predicated region
    $region14: #{bert_forward.1} parent=1 // pred_check
      _
    $region15: #{bert_forward.1} parent=1 // pred_check_branch
      %30 = sbr.rel (0) target = $region17
    $region16: #{bert_forward.1} parent=1 // pred_region
      _
    $region17: #{bert_forward.1} parent=1 // pred_fallthru
      _
    // Predicated region
    $region18: #{bert_forward.1} parent=1 // pred_check
      _
    $region19: #{bert_forward.1} parent=1 // pred_check_branch
      %32 = sbr.rel (0) target = $region21
    $region20: #{bert_forward.1} parent=1 // pred_region
      _
    $region21: #{bert_forward.1} parent=1 // pred_fallthru
      _
    // Predicated region
    $region22: #{bert_forward.1} parent=1 // pred_check
      _
    $region23: #{bert_forward.1} parent=1 // pred_check_branch
      %34 = sbr.rel (0) target = $region25
    $region24: #{bert_forward.1} parent=1 // pred_region
      _
    $region25: #{bert_forward.1} parent=1 // pred_fallthru
      _
    // Predicated region
    $region26: #{bert_forward.1} parent=1 // pred_check
      _
    $region27: #{bert_forward.1} parent=1 // pred_check_branch
      %36 = sbr.rel (0) target = $region29
    $region28: #{bert_forward.1} parent=1 // pred_region
      _
    $region29: #{bert_forward.1} parent=1 // pred_fallthru
      _
    // Predicated region
    $region30: #{bert_forward.1} parent=1 // pred_check
      _
    $region31: #{bert_forward.1} parent=1 // pred_check_branch
      %38 = sbr.rel (0) target = $region33
    $region32: #{bert_forward.1} parent=1 // pred_region
      _
    $region33: #{bert_forward.1} parent=1 // pred_fallthru
      _
    // Predicated region
    $region34: #{bert_forward.1} parent=1 // pred_check
      _
    $region35: #{bert_forward.1} parent=1 // pred_check_branch
      %40 = sbr.rel (0) target = $region37
    $region36: #{bert_forward.1} parent=1 // pred_region
      _
    $region37: #{bert_forward.1} parent=1 // pred_fallthru
      _
    // Predicated region
    $region38: #{bert_forward.1} parent=1 // pred_check
      _
    $region39: #{bert_forward.1} parent=1 // pred_check_branch
      %42 = sbr.rel (0) target = $region41
    $region40: #{bert_forward.1} parent=1 // pred_region
      _
    $region41: #{bert_forward.1} parent=1 // pred_fallthru
      _
    // Predicated region
    $region42: #{bert_forward.1} parent=1 // pred_check
      _
    $region43: #{bert_forward.1} parent=1 // pred_check_branch
      %44 = sbr.rel (0) target = $region45
    $region44: #{bert_forward.1} parent=1 // pred_region
      _
    $region45: #{bert_forward.1} parent=1 // pred_fallthru
      _
    // Predicated region
    $region46: #{bert_forward.1} parent=1 // pred_check
      _
    $region47: #{bert_forward.1} parent=1 // pred_check_branch
      %46 = sbr.rel (0) target = $region49
    $region48: #{bert_forward.1} parent=1 // pred_region
      _
    $region49: #{bert_forward.1} parent=1 // pred_fallthru
      _
    // Predicated region
    $region50: #{bert_forward.1} parent=1 // pred_check
      _
    $region51: #{bert_forward.1} parent=1 // pred_check_branch
      %48 = sbr.rel (0) target = $region53
    $region52: #{bert_forward.1} parent=1 // pred_region
      _
    $region53: #{bert_forward.1} parent=1 // pred_fallthru
      _
    // Predicated region
    $region54: #{bert_forward.1} parent=1 // pred_check
      _
    $region55: #{bert_forward.1} parent=1 // pred_check_branch
      %50 = sbr.rel (0) target = $region57
    $region56: #{bert_forward.1} parent=1 // pred_region
      _
    $region57: #{bert_forward.1} parent=1 // pred_fallthru
      _
    %v51 = vld [vmem:[%s0] sm:$0xff]
    %v52 = vld [vmem:[%s0 + $0x8] sm:$0xff]
    %v53 = vld [vmem:[%s0 + $0x10] sm:$0xff]
    %v54 = vld [vmem:[%s0 + $0x18] sm:$0xff]
    %v55 = vld [vmem:[%s0 + $0x20] sm:$0xff]
    %v56 = vld [vmem:[%s0 + $0x28] sm:$0xff]
    %v57 = vld [vmem:[%s0 + $0x30] sm:$0xff]
    %v58 = vld [vmem:[%s0 + $0x38] sm:$0xff]
    %v59 = vld [vmem:[%s4] sm:$0xff]
    %v60 = vld [vmem:[%s4 + $0x8] sm:$0xff]
    %v61 = vld [vmem:[%s4 + $0x10] sm:$0xff]
    %v62 = vld [vmem:[%s4 + $0x18] sm:$0xff]
    %v63 = vld [vmem:[%s4 + $0x20] sm:$0xff]
    %v64 = vld [vmem:[%s4 + $0x28] sm:$0xff]
    %v65 = vld [vmem:[%s4 + $0x30] sm:$0xff]
    %v66 = vld [vmem:[%s4 + $0x38] sm:$0xff]
    %v67 = vld [vmem:[%s4 + $0x40] sm:$0xff]
    %v68 = vld [vmem:[%s4 + $0x48] sm:$0xff]
    %v69 = vld [vmem:[%s4 + $0x50] sm:$0xff]
    %v70 = vld [vmem:[%s4 + $0x58] sm:$0xff]
    %v71 = vld [vmem:[%s4 + $0x60] sm:$0xff]
    %v72 = vld [vmem:[%s4 + $0x68] sm:$0xff]
    %v73 = vld [vmem:[%s4 + $0x70] sm:$0xff]
    %v74 = vld [vmem:[%s4 + $0x78] sm:$0xff]
    %v75 = vld [vmem:[%s4 + $0x80] sm:$0xff]
    %v76 = vld [vmem:[%s4 + $0x88] sm:$0xff]
    %v77 = vld [vmem:[%s4 + $0x90] sm:$0xff]
    %v78 = vld [vmem:[%s4 + $0x98] sm:$0xff]
    %v79 = vld [vmem:[%s13] sm:$0x1]
    %v80 = vlaneseq
    %v81 = vshrl.u32 %v80, 7
    %v82 = vsub.s32 0, %v81
    %v83 = vrot.slane %v79, %v82
    %vm84 = vcmask 261120
    %v86 = vsel %vm84, %v52, 0
    %v89 = vsel %vm84, %v54, 0
    %v92 = vsel %vm84, %v56, 0
    %v95 = vsel %vm84, %v58, 0
    %97 = vmatprep.subr.mxu0 0.0
    %98 = vmatpush1.msra.mxu0 %v59
    %99 = vmatprep.subr.mxu0 0.0
    %100 = vmatpush1.msra.mxu0 %v60
    %101 = vmatprep.subr.mxu0 0.0
    %102 = vmatpush1.msra.mxu0 %v61
    %103 = vmatprep.subr.mxu0 0.0
    %104 = vmatpush1.msra.mxu0 %v62
    %105 = vmatprep.subr.mxu0 0.0
    %106 = vmatpush1.msra.mxu0 %v63
    %107 = vmatprep.subr.mxu0 0.0
    %108 = vmatpush1.msra.mxu0 %v64
    %109 = vmatprep.subr.mxu0 0.0
    %110 = vmatpush1.msra.mxu0 %v65
    %111 = vmatprep.subr.mxu0 0.0
    %112 = vmatpush1.msra.mxu0 %v66
    %113 = vmatprep.subr.mxu0 0.0
    %114 = vmatpush1.msra.mxu0 %v67
    %115 = vmatprep.subr.mxu0 0.0
    %116 = vmatpush1.msra.mxu0 %v68
    %117 = vmatprep.subr.mxu0 0.0
    %118 = vmatpush1.msra.mxu0 %v69
    %119 = vmatprep.subr.mxu0 0.0
    %120 = vmatpush1.msra.mxu0 %v70
    %121 = vmatprep.subr.mxu0 0.0
    %122 = vmatpush1.msra.mxu0 %v71
    %123 = vmatprep.subr.mxu0 0.0
    %124 = vmatpush1.msra.mxu0 %v72
    %125 = vmatprep.subr.mxu0 0.0
    %126 = vmatpush1.msra.mxu0 %v73
    %127 = vmatprep.subr.mxu0 0.0
    %128 = vmatpush1.msra.mxu0 %v74
    %129 = vmatprep.subr.mxu0 0.0
    %130 = vmatpush1.msra.mxu0 %v75
    %131 = vmatprep.subr.mxu0 0.0
    %132 = vmatpush1.msra.mxu0 %v76
    %133 = vmatprep.subr.mxu0 0.0
    %134 = vmatpush1.msra.mxu0 %v77
    %135 = vmatprep.subr.mxu0 0.0
    %136 = vmatpush1.msra.mxu0 %v78
    %137 = vmatprep.subr.mxu0 0.0
    %138 = vmatpush1.msra.mxu0 0.0
    %139 = vmatprep.subr.mxu0 0.0
    %140 = vmatpush1.msra.mxu0 0.0
    %141 = vmatprep.subr.mxu0 0.0
    %142 = vmatpush1.msra.mxu0 0.0
    %143 = vmatprep.subr.mxu0 0.0
    %144 = vmatpush1.msra.mxu0 0.0
    %145 = vmatprep.subr.mxu0 0.0
    %146 = vmatpush1.msra.mxu0 0.0
    %147 = vmatprep.subr.mxu0 0.0
    %148 = vmatpush1.msra.mxu0 0.0
    %149 = vmatprep.subr.mxu0 0.0
    %150 = vmatpush1.msra.mxu0 0.0
    %151 = vmatprep.subr.mxu0 0.0
    %152 = vmatpush1.msra.mxu0 0.0
    %153 = vmatprep.subr.mxu0 0.0
    %154 = vmatpush1.msra.mxu0 0.0
    %155 = vmatprep.subr.mxu0 0.0
    %156 = vmatpush1.msra.mxu0 0.0
    %157 = vmatprep.subr.mxu0 0.0
    %158 = vmatpush1.msra.mxu0 0.0
    %159 = vmatprep.subr.mxu0 0.0
    %160 = vmatpush1.msra.mxu0 0.0
    %161 = vmatprep.mubr.f32.mxu0 %v86
    %162 = vmatmul.mubr.f32.gmra.mrb[0].mxu0 %v51
    %v163 = vpop.f32.mrb[0].mxu0
    %v164 = vadd.f32 %v83, %v163
    %v165 = vpop.f32.mrb[0].mxu0
    %166 = vmatprep.mubr.f32.mxu0 %v89
    %167 = vmatmul.mubr.f32.gmra.mrb[0].mxu0 %v53
    %v168 = vpop.f32.mrb[0].mxu0
    %v169 = vadd.f32 %v83, %v168
    %v170 = vpop.f32.mrb[0].mxu0
    %171 = vmatprep.mubr.f32.mxu0 %v92
    %172 = vmatmul.mubr.f32.gmra.mrb[0].mxu0 %v55
    %v173 = vpop.f32.mrb[0].mxu0
    %v174 = vadd.f32 %v83, %v173
    %v175 = vpop.f32.mrb[0].mxu0
    %176 = vmatprep.mubr.f32.mxu0 %v95
    %177 = vmatmul.mubr.f32.gmra.mrb[0].mxu0 %v57
    %v178 = vpop.f32.mrb[0].mxu0
    %v179 = vadd.f32 %v83, %v178
    %v180 = vpop.f32.mrb[0].mxu0
    %181 = vdwg.mxu0
    %v182 = vmax.f32 %v164, 0.0
    %v183 = vmax.f32 %v169, 0.0
    %v184 = vmax.f32 %v174, 0.0
    %v185 = vmax.f32 %v179, 0.0
    %v186 = vld [vmem:[%s1] sm:$0xff]
    %v187 = vld [vmem:[%s1 + $0x8] sm:$0xff]
    %v188 = vld [vmem:[%s1 + $0x10] sm:$0xff]
    %v189 = vld [vmem:[%s1 + $0x18] sm:$0xff]
    %v190 = vld [vmem:[%s5] sm:$0xff]
    %v191 = vld [vmem:[%s5 + $0x8] sm:$0xff]
    %v192 = vld [vmem:[%s5 + $0x10] sm:$0xff]
    %v193 = vld [vmem:[%s5 + $0x18] sm:$0xff]
    %v194 = vld [vmem:[%s5 + $0x20] sm:$0xff]
    %v195 = vld [vmem:[%s5 + $0x28] sm:$0xff]
    %v196 = vld [vmem:[%s5 + $0x30] sm:$0xff]
    %v197 = vld [vmem:[%s5 + $0x38] sm:$0xf]
    %v198 = vld [vmem:[%s13 + $0x1] sm:$0x1]
    %v199 = vlaneseq
    %v200 = vshrl.u32 %v199, 7
    %v201 = vsub.s32 0, %v200
    %v202 = vrot.slane %v198, %v201
    %vm203 = vcmask 490496
    %v205 = vsel %vm203, %v186, 0
    %v208 = vsel %vm203, %v187, 0
    %v211 = vsel %vm203, %v188, 0
    %v214 = vsel %vm203, %v189, 0
    %vm216 = vcmask 1043456
    %v218 = vsel %vm216, %v197, 0
    %220 = vmatprep.subr.mxu0 0.0
    %221 = vmatpush1.msra.mxu0 %v190
    %222 = vmatprep.subr.mxu0 0.0
    %223 = vmatpush1.msra.mxu0 %v191
    %224 = vmatprep.subr.mxu0 0.0
    %225 = vmatpush1.msra.mxu0 %v192
    %226 = vmatprep.subr.mxu0 0.0
    %227 = vmatpush1.msra.mxu0 %v193
    %228 = vmatprep.subr.mxu0 0.0
    %229 = vmatpush1.msra.mxu0 %v194
    %230 = vmatprep.subr.mxu0 0.0
    %231 = vmatpush1.msra.mxu0 %v195
    %232 = vmatprep.subr.mxu0 0.0
    %233 = vmatpush1.msra.mxu0 %v196
    %234 = vmatprep.subr.mxu0 0.0
    %235 = vmatpush1.msra.mxu0 %v218
    %236 = vmatprep.subr.mxu0 0.0
    %237 = vmatpush1.msra.mxu0 0.0
    %238 = vmatprep.subr.mxu0 0.0
    %239 = vmatpush1.msra.mxu0 0.0
    %240 = vmatprep.subr.mxu0 0.0
    %241 = vmatpush1.msra.mxu0 0.0
    %242 = vmatprep.subr.mxu0 0.0
    %243 = vmatpush1.msra.mxu0 0.0
    %244 = vmatprep.subr.mxu0 0.0
    %245 = vmatpush1.msra.mxu0 0.0
    %246 = vmatprep.subr.mxu0 0.0
    %247 = vmatpush1.msra.mxu0 0.0
    %248 = vmatprep.subr.mxu0 0.0
    %249 = vmatpush1.msra.mxu0 0.0
    %250 = vmatprep.subr.mxu0 0.0
    %251 = vmatpush1.msra.mxu0 0.0
    %252 = vmatprep.subr.mxu0 0.0
    %253 = vmatpush1.msra.mxu0 0.0
    %254 = vmatprep.subr.mxu0 0.0
    %255 = vmatpush1.msra.mxu0 0.0
    %256 = vmatprep.subr.mxu0 0.0
    %257 = vmatpush1.msra.mxu0 0.0
    %258 = vmatprep.subr.mxu0 0.0
    %259 = vmatpush1.msra.mxu0 0.0
    %260 = vmatprep.subr.mxu0 0.0
    %261 = vmatpush1.msra.mxu0 0.0
    %262 = vmatprep.subr.mxu0 0.0
    %263 = vmatpush1.msra.mxu0 0.0
    %264 = vmatprep.subr.mxu0 0.0
    %265 = vmatpush1.msra.mxu0 0.0
    %266 = vmatprep.subr.mxu0 0.0
    %267 = vmatpush1.msra.mxu0 0.0
    %268 = vmatprep.subr.mxu0 0.0
    %269 = vmatpush1.msra.mxu0 0.0
    %270 = vmatprep.subr.mxu0 0.0
    %271 = vmatpush1.msra.mxu0 0.0
    %272 = vmatprep.subr.mxu0 0.0
    %273 = vmatpush1.msra.mxu0 0.0
    %274 = vmatprep.subr.mxu0 0.0
    %275 = vmatpush1.msra.mxu0 0.0
    %276 = vmatprep.subr.mxu0 0.0
    %277 = vmatpush1.msra.mxu0 0.0
    %278 = vmatprep.subr.mxu0 0.0
    %279 = vmatpush1.msra.mxu0 0.0
    %280 = vmatprep.subr.mxu0 0.0
    %281 = vmatpush1.msra.mxu0 0.0
    %282 = vmatprep.subr.mxu0 0.0
    %283 = vmatpush1.msra.mxu0 0.0
    %284 = vmatprep.mubr.f32.mxu0 0.0
    %285 = vmatmul.mubr.f32.gmra.mrb[0].mxu0 %v205
    %v286 = vpop.f32.mrb[0].mxu0
    %v287 = vadd.f32 %v202, %v286
    %v288 = vpop.f32.mrb[0].mxu0
    %289 = vmatprep.mubr.f32.mxu0 0.0
    %290 = vmatmul.mubr.f32.gmra.mrb[0].mxu0 %v208
    %v291 = vpop.f32.mrb[0].mxu0
    %v292 = vadd.f32 %v202, %v291
    %v293 = vpop.f32.mrb[0].mxu0
    %294 = vmatprep.mubr.f32.mxu0 0.0
    %295 = vmatmul.mubr.f32.gmra.mrb[0].mxu0 %v211
    %v296 = vpop.f32.mrb[0].mxu0
    %v297 = vadd.f32 %v202, %v296
    %v298 = vpop.f32.mrb[0].mxu0
    %299 = vmatprep.mubr.f32.mxu0 0.0
    %300 = vmatmul.mubr.f32.gmra.mrb[0].mxu0 %v214
    %v301 = vpop.f32.mrb[0].mxu0
    %v302 = vadd.f32 %v202, %v301
    %v303 = vpop.f32.mrb[0].mxu0
    %304 = vdwg.mxu0
    %v305 = vmax.f32 %v287, 0.0
    %v306 = vmax.f32 %v292, 0.0
    %v307 = vmax.f32 %v297, 0.0
    %v308 = vmax.f32 %v302, 0.0
    %v309 = vld [vmem:[%s2] sm:$0xff]
    %v310 = vld [vmem:[%s2 + $0x8] sm:$0xff]
    %v311 = vld [vmem:[%s2 + $0x10] sm:$0xff]
    %v312 = vld [vmem:[%s2 + $0x18] sm:$0xff]
    %v313 = vld [vmem:[%s13 + $0x2] sm:$0x1]
    %v314 = vld [vmem:[%s13 + $0x3] sm:$0x1]
    %v315 = vsel %vm84, %v309, 0.0
    %316 = vadd.xlane.f32.xlu0 %v315
    %v317 = vpop.xlane.xlu0 %316
    %v318 = vsel %vm84, %v310, 0.0
    %319 = vadd.xlane.f32.xlu0 %v318
    %v320 = vpop.xlane.xlu0 %319
    %v321 = vsel %vm84, %v311, 0.0
    %322 = vadd.xlane.f32.xlu0 %v321
    %v323 = vpop.xlane.xlu0 %322
    %v324 = vsel %vm84, %v312, 0.0
    %325 = vadd.xlane.f32.xlu0 %v324
    %v326 = vpop.xlane.xlu0 %325
    %v327 = vrcp.pop 32.0
    %v328 = vmul.f32 %v317, %v327
    %v329 = vmul.f32 %v320, %v327
    %v330 = vmul.f32 %v323, %v327
    %v331 = vmul.f32 %v326, %v327
    %v332 = vsub.f32 %v309, %v328
    %v333 = vsub.f32 %v310, %v329
    %v334 = vsub.f32 %v311, %v330
    %v335 = vsub.f32 %v312, %v331
    %v336 = vmul.f32 %v332, %v332
    %v337 = vmul.f32 %v333, %v333
    %v338 = vmul.f32 %v334, %v334
    %v339 = vmul.f32 %v335, %v335
    %v340 = vsel %vm84, %v336, 0.0
    %341 = vadd.xlane.f32.xlu0 %v340
    %v342 = vpop.xlane.xlu0 %341
    %v343 = vsel %vm84, %v337, 0.0
    %344 = vadd.xlane.f32.xlu0 %v343
    %v345 = vpop.xlane.xlu0 %344
    %v346 = vsel %vm84, %v338, 0.0
    %347 = vadd.xlane.f32.xlu0 %v346
    %v348 = vpop.xlane.xlu0 %347
    %v349 = vsel %vm84, %v339, 0.0
    %350 = vadd.xlane.f32.xlu0 %v349
    %v351 = vpop.xlane.xlu0 %350
    %v352 = vmul.f32 %v342, %v327
    %v353 = vmul.f32 %v345, %v327
    %v354 = vmul.f32 %v348, %v327
    %v355 = vmul.f32 %v351, %v327
    %v356 = vadd.f32 %v352, 1e-05
    %v357 = vadd.f32 %v353, 1e-05
    %v358 = vadd.f32 %v354, 1e-05
    %v359 = vadd.f32 %v355, 1e-05
    %v360 = vrsqrt.pop %v356
    %v361 = vrsqrt.pop %v357
    %v362 = vrsqrt.pop %v358
    %v363 = vrsqrt.pop %v359
    %v364 = vmul.f32 %v332, %v360
    %v365 = vmul.f32 %v333, %v361
    %v366 = vmul.f32 %v334, %v362
    %v367 = vmul.f32 %v335, %v363
    %v368 = vlaneseq
    %v369 = vshrl.u32 %v368, 7
    %v370 = vsub.s32 0, %v369
    %v371 = vrot.slane %v313, %v370
    %v372 = vmul.f32 %v364, %v371
    %v373 = vmul.f32 %v365, %v371
    %v374 = vmul.f32 %v366, %v371
    %v375 = vmul.f32 %v367, %v371
    %v376 = vlaneseq
    %v377 = vshrl.u32 %v376, 7
    %v378 = vsub.s32 0, %v377
    %v379 = vrot.slane %v314, %v378
    %v380 = vadd.f32 %v372, %v379
    %v381 = vadd.f32 %v373, %v379
    %v382 = vadd.f32 %v374, %v379
    %v383 = vadd.f32 %v375, %v379
    %v384 = vadd.f32 %v380, %v182
    %v385 = vadd.f32 %v381, %v183
    %v386 = vadd.f32 %v382, %v184
    %v387 = vadd.f32 %v383, %v185
    %392 = vrot.lane.b32.xlu0 %v305, 32
    %v393 = vpop.permute.xlu0 %392
    %394 = vrot.lane.b32.xlu0 %v306, 32
    %v395 = vpop.permute.xlu0 %394
    %396 = vrot.lane.b32.xlu0 %v307, 32
    %v397 = vpop.permute.xlu0 %396
    %398 = vrot.lane.b32.xlu0 %v308, 32
    %v399 = vpop.permute.xlu0 %398
    %v404 = vsel %vm84, %v384, %v393
    %v405 = vsel %vm84, %v385, %v395
    %v406 = vsel %vm84, %v386, %v397
    %v407 = vsel %vm84, %v387, %v399
    %v408 = vld [vmem:[%s6] sm:$0xff]
    %v409 = vld [vmem:[%s6 + $0x8] sm:$0xff]
    %v410 = vld [vmem:[%s6 + $0x10] sm:$0xff]
    %v411 = vld [vmem:[%s6 + $0x18] sm:$0xff]
    %v412 = vld [vmem:[%s6 + $0x20] sm:$0xff]
    %v413 = vld [vmem:[%s6 + $0x28] sm:$0xff]
    %v414 = vld [vmem:[%s13 + $0x4] sm:$0x1]
    %v415 = vlaneseq
    %v416 = vshrl.u32 %v415, 7
    %v417 = vsub.s32 0, %v416
    %v418 = vrot.slane %v414, %v417
    %vm419 = vcmask 392192
    %v421 = vsel %vm419, %v404, 0
    %v424 = vsel %vm419, %v405, 0
    %v427 = vsel %vm419, %v406, 0
    %v430 = vsel %vm419, %v407, 0
    %432 = vmatprep.subr.mxu0 0.0
    %433 = vmatpush1.msra.mxu0 %v408
    %434 = vmatprep.subr.mxu0 0.0
    %435 = vmatpush1.msra.mxu0 %v409
    %436 = vmatprep.subr.mxu0 0.0
    %437 = vmatpush1.msra.mxu0 %v410
    %438 = vmatprep.subr.mxu0 0.0
    %439 = vmatpush1.msra.mxu0 %v411
    %440 = vmatprep.subr.mxu0 0.0
    %441 = vmatpush1.msra.mxu0 %v412
    %442 = vmatprep.subr.mxu0 0.0
    %443 = vmatpush1.msra.mxu0 %v413
    %444 = vmatprep.subr.mxu0 0.0
    %445 = vmatpush1.msra.mxu0 0.0
    %446 = vmatprep.subr.mxu0 0.0
    %447 = vmatpush1.msra.mxu0 0.0
    %448 = vmatprep.subr.mxu0 0.0
    %449 = vmatpush1.msra.mxu0 0.0
    %450 = vmatprep.subr.mxu0 0.0
    %451 = vmatpush1.msra.mxu0 0.0
    %452 = vmatprep.subr.mxu0 0.0
    %453 = vmatpush1.msra.mxu0 0.0
    %454 = vmatprep.subr.mxu0 0.0
    %455 = vmatpush1.msra.mxu0 0.0
    %456 = vmatprep.subr.mxu0 0.0
    %457 = vmatpush1.msra.mxu0 0.0
    %458 = vmatprep.subr.mxu0 0.0
    %459 = vmatpush1.msra.mxu0 0.0
    %460 = vmatprep.subr.mxu0 0.0
    %461 = vmatpush1.msra.mxu0 0.0
    %462 = vmatprep.subr.mxu0 0.0
    %463 = vmatpush1.msra.mxu0 0.0
    %464 = vmatprep.subr.mxu0 0.0
    %465 = vmatpush1.msra.mxu0 0.0
    %466 = vmatprep.subr.mxu0 0.0
    %467 = vmatpush1.msra.mxu0 0.0
    %468 = vmatprep.subr.mxu0 0.0
    %469 = vmatpush1.msra.mxu0 0.0
    %470 = vmatprep.subr.mxu0 0.0
    %471 = vmatpush1.msra.mxu0 0.0
    %472 = vmatprep.subr.mxu0 0.0
    %473 = vmatpush1.msra.mxu0 0.0
    %474 = vmatprep.subr.mxu0 0.0
    %475 = vmatpush1.msra.mxu0 0.0
    %476 = vmatprep.subr.mxu0 0.0
    %477 = vmatpush1.msra.mxu0 0.0
    %478 = vmatprep.subr.mxu0 0.0
    %479 = vmatpush1.msra.mxu0 0.0
    %480 = vmatprep.subr.mxu0 0.0
    %481 = vmatpush1.msra.mxu0 0.0
    %482 = vmatprep.subr.mxu0 0.0
    %483 = vmatpush1.msra.mxu0 0.0
    %484 = vmatprep.subr.mxu0 0.0
    %485 = vmatpush1.msra.mxu0 0.0
    %486 = vmatprep.subr.mxu0 0.0
    %487 = vmatpush1.msra.mxu0 0.0
    %488 = vmatprep.subr.mxu0 0.0
    %489 = vmatpush1.msra.mxu0 0.0
    %490 = vmatprep.subr.mxu0 0.0
    %491 = vmatpush1.msra.mxu0 0.0
    %492 = vmatprep.subr.mxu0 0.0
    %493 = vmatpush1.msra.mxu0 0.0
    %494 = vmatprep.subr.mxu0 0.0
    %495 = vmatpush1.msra.mxu0 0.0
    %496 = vmatprep.mubr.f32.mxu0 0.0
    %497 = vmatmul.mubr.f32.gmra.mrb[0].mxu0 %v421
    %v498 = vpop.f32.mrb[0].mxu0
    %v499 = vadd.f32 %v418, %v498
    %v500 = vpop.f32.mrb[0].mxu0
    %501 = vmatprep.mubr.f32.mxu0 0.0
    %502 = vmatmul.mubr.f32.gmra.mrb[0].mxu0 %v424
    %v503 = vpop.f32.mrb[0].mxu0
    %v504 = vadd.f32 %v418, %v503
    %v505 = vpop.f32.mrb[0].mxu0
    %506 = vmatprep.mubr.f32.mxu0 0.0
    %507 = vmatmul.mubr.f32.gmra.mrb[0].mxu0 %v427
    %v508 = vpop.f32.mrb[0].mxu0
    %v509 = vadd.f32 %v418, %v508
    %v510 = vpop.f32.mrb[0].mxu0
    %511 = vmatprep.mubr.f32.mxu0 0.0
    %512 = vmatmul.mubr.f32.gmra.mrb[0].mxu0 %v430
    %v513 = vpop.f32.mrb[0].mxu0
    %v514 = vadd.f32 %v418, %v513
    %v515 = vpop.f32.mrb[0].mxu0
    %516 = vdwg.mxu0
    %v517 = vld [vmem:[%s3] sm:$0x3]
    %vm518 = vcmp.gt.f32.partialorder %v517, 0.5
    %v519 = vsel %vm518, 1, 0
    %v520 = vlaneseq
    %v521 = vshrl.u32 %v520, 7
    %v522 = vsub.s32 0, %v521
    %v523 = vrot.slane %v519, %v522
    %vm524 = vcmp.eq.s32.totalorder %v523, 1
    %527 = vrot.lane.b32.xlu0 %v499, 96
    %v528 = vpop.permute.xlu0 %527
    %529 = vrot.lane.b32.xlu0 %v504, 96
    %v530 = vpop.permute.xlu0 %529
    %vm531 = vcmask 64512
    %v532 = vsel %vm531, %v499, 0
    %v534 = vsel %vm531, %v504, 0
    %v536 = vsel %vm531, %v528, 0
    %v538 = vsel %vm531, %v530, 0
    %540 = vmatprep.subr.mxu0 0.0
    %541 = vmatpush1.xpose.msra.mxu0 %v536
    %542 = vmatprep.subr.mxu0 0.0
    %543 = vmatpush1.xpose.msra.mxu0 %v538
    %544 = vmatprep.subr.mxu0 0.0
    %545 = vmatpush1.xpose.msra.mxu0 0.0
    %546 = vmatprep.subr.mxu0 0.0
    %547 = vmatpush1.xpose.msra.mxu0 0.0
    %548 = vmatprep.subr.mxu0 0.0
    %549 = vmatpush1.xpose.msra.mxu0 0.0
    %550 = vmatprep.subr.mxu0 0.0
    %551 = vmatpush1.xpose.msra.mxu0 0.0
    %552 = vmatprep.subr.mxu0 0.0
    %553 = vmatpush1.xpose.msra.mxu0 0.0
    %554 = vmatprep.subr.mxu0 0.0
    %555 = vmatpush1.xpose.msra.mxu0 0.0
    %556 = vmatprep.subr.mxu0 0.0
    %557 = vmatpush1.xpose.msra.mxu0 0.0
    %558 = vmatprep.subr.mxu0 0.0
    %559 = vmatpush1.xpose.msra.mxu0 0.0
    %560 = vmatprep.subr.mxu0 0.0
    %561 = vmatpush1.xpose.msra.mxu0 0.0
    %562 = vmatprep.subr.mxu0 0.0
    %563 = vmatpush1.xpose.msra.mxu0 0.0
    %564 = vmatprep.subr.mxu0 0.0
    %565 = vmatpush1.xpose.msra.mxu0 0.0
    %566 = vmatprep.subr.mxu0 0.0
    %567 = vmatpush1.xpose.msra.mxu0 0.0
    %568 = vmatprep.subr.mxu0 0.0
    %569 = vmatpush1.xpose.msra.mxu0 0.0
    %570 = vmatprep.subr.mxu0 0.0
    %571 = vmatpush1.xpose.msra.mxu0 0.0
    %572 = vmatprep.subr.mxu0 0.0
    %573 = vmatpush1.xpose.msra.mxu0 0.0
    %574 = vmatprep.subr.mxu0 0.0
    %575 = vmatpush1.xpose.msra.mxu0 0.0
    %576 = vmatprep.subr.mxu0 0.0
    %577 = vmatpush1.xpose.msra.mxu0 0.0
    %578 = vmatprep.subr.mxu0 0.0
    %579 = vmatpush1.xpose.msra.mxu0 0.0
    %580 = vmatprep.subr.mxu0 0.0
    %581 = vmatpush1.xpose.msra.mxu0 0.0
    %582 = vmatprep.subr.mxu0 0.0
    %583 = vmatpush1.xpose.msra.mxu0 0.0
    %584 = vmatprep.subr.mxu0 0.0
    %585 = vmatpush1.xpose.msra.mxu0 0.0
    %586 = vmatprep.subr.mxu0 0.0
    %587 = vmatpush1.xpose.msra.mxu0 0.0
    %588 = vmatprep.subr.mxu0 0.0
    %589 = vmatpush1.xpose.msra.mxu0 0.0
    %590 = vmatprep.subr.mxu0 0.0
    %591 = vmatpush1.xpose.msra.mxu0 0.0
    %592 = vmatprep.subr.mxu0 0.0
    %593 = vmatpush1.xpose.msra.mxu0 0.0
    %594 = vmatprep.subr.mxu0 0.0
    %595 = vmatpush1.xpose.msra.mxu0 0.0
    %596 = vmatprep.subr.mxu0 0.0
    %597 = vmatpush1.xpose.msra.mxu0 0.0
    %598 = vmatprep.subr.mxu0 0.0
    %599 = vmatpush1.xpose.msra.mxu0 0.0
    %600 = vmatprep.subr.mxu0 0.0
    %601 = vmatpush1.xpose.msra.mxu0 0.0
    %602 = vmatprep.subr.mxu0 0.0
    %603 = vmatpush1.xpose.msra.mxu0 0.0
    %604 = vmatprep.mubr.f32.mxu0 0.0
    %605 = vmatmul.mubr.f32.gmra.mrb[0].mxu0 %v532
    %v606 = vpop.f32.mrb[0].mxu0
    %v607 = vadd.f32 0.0, %v606
    %v608 = vpop.f32.mrb[0].mxu0
    %609 = vmatprep.mubr.f32.mxu0 0.0
    %610 = vmatmul.mubr.f32.gmra.mrb[0].mxu0 %v534
    %v611 = vpop.f32.mrb[0].mxu0
    %v612 = vadd.f32 0.0, %v611
    %v613 = vpop.f32.mrb[0].mxu0
    %614 = vdwg.mxu0
    %v615 = vmul.f32 %v607, 0.35355338
    %v616 = vmul.f32 %v612, 0.35355338
    %v617 = vsel %vm524, -1e+09, %v615
    %v618 = vsel %vm524, -1e+09, %v616
    %vm619 = vcmask 130048
    %v620 = vsel %vm619, %v617, -inf
    %621 = vmax.xlane.f32.xlu0 %v620
    %v622 = vpop.xlane.xlu0 %621
    %v623 = vsel %vm619, %v618, -inf
    %624 = vmax.xlane.f32.xlu0 %v623
    %v625 = vpop.xlane.xlu0 %624
    %v626 = vsub.f32 %v617, %v622
    %v627 = vsub.f32 %v618, %v625
    %v628 = vmul.f32 %v626, 1.442695
    %v629 = vpow.pop %v628
    %v630 = vmul.f32 %v627, 1.442695
    %v631 = vpow.pop %v630
    %v632 = vsel %vm619, %v629, 0.0
    %633 = vadd.xlane.f32.xlu0 %v632
    %v634 = vpop.xlane.xlu0 %633
    %v635 = vsel %vm619, %v631, 0.0
    %636 = vadd.xlane.f32.xlu0 %v635
    %v637 = vpop.xlane.xlu0 %636
    %v638 = vrcp.pop %v634
    %v639 = vmul.f32 %v629, %v638
    %v640 = vrcp.pop %v637
    %v641 = vmul.f32 %v631, %v640
    %642 = vrot.lane.b32.xlu0 %v499, 64
    %v643 = vpop.permute.xlu0 %642
    %644 = vrot.lane.b32.xlu0 %v504, 64
    %v645 = vpop.permute.xlu0 %644
    %v649 = vsel %vm619, %v639, 0
    %v652 = vsel %vm619, %v641, 0
    %654 = vmatprep.subr.mxu0 0.0
    %655 = vmatpush1.msra.mxu0 %v643
    %656 = vmatprep.subr.mxu0 0.0
    %657 = vmatpush1.msra.mxu0 %v645
    %658 = vmatprep.subr.mxu0 0.0
    %659 = vmatpush1.msra.mxu0 0.0
    %660 = vmatprep.subr.mxu0 0.0
    %661 = vmatpush1.msra.mxu0 0.0
    %662 = vmatprep.subr.mxu0 0.0
    %663 = vmatpush1.msra.mxu0 0.0
    %664 = vmatprep.subr.mxu0 0.0
    %665 = vmatpush1.msra.mxu0 0.0
    %666 = vmatprep.subr.mxu0 0.0
    %667 = vmatpush1.msra.mxu0 0.0
    %668 = vmatprep.subr.mxu0 0.0
    %669 = vmatpush1.msra.mxu0 0.0
    %670 = vmatprep.subr.mxu0 0.0
    %671 = vmatpush1.msra.mxu0 0.0
    %672 = vmatprep.subr.mxu0 0.0
    %673 = vmatpush1.msra.mxu0 0.0
    %674 = vmatprep.subr.mxu0 0.0
    %675 = vmatpush1.msra.mxu0 0.0
    %676 = vmatprep.subr.mxu0 0.0
    %677 = vmatpush1.msra.mxu0 0.0
    %678 = vmatprep.subr.mxu0 0.0
    %679 = vmatpush1.msra.mxu0 0.0
    %680 = vmatprep.subr.mxu0 0.0
    %681 = vmatpush1.msra.mxu0 0.0
    %682 = vmatprep.subr.mxu0 0.0
    %683 = vmatpush1.msra.mxu0 0.0
    %684 = vmatprep.subr.mxu0 0.0
    %685 = vmatpush1.msra.mxu0 0.0
    %686 = vmatprep.subr.mxu0 0.0
    %687 = vmatpush1.msra.mxu0 0.0
    %688 = vmatprep.subr.mxu0 0.0
    %689 = vmatpush1.msra.mxu0 0.0
    %690 = vmatprep.subr.mxu0 0.0
    %691 = vmatpush1.msra.mxu0 0.0
    %692 = vmatprep.subr.mxu0 0.0
    %693 = vmatpush1.msra.mxu0 0.0
    %694 = vmatprep.subr.mxu0 0.0
    %695 = vmatpush1.msra.mxu0 0.0
    %696 = vmatprep.subr.mxu0 0.0
    %697 = vmatpush1.msra.mxu0 0.0
    %698 = vmatprep.subr.mxu0 0.0
    %699 = vmatpush1.msra.mxu0 0.0
    %700 = vmatprep.subr.mxu0 0.0
    %701 = vmatpush1.msra.mxu0 0.0
    %702 = vmatprep.subr.mxu0 0.0
    %703 = vmatpush1.msra.mxu0 0.0
    %704 = vmatprep.subr.mxu0 0.0
    %705 = vmatpush1.msra.mxu0 0.0
    %706 = vmatprep.subr.mxu0 0.0
    %707 = vmatpush1.msra.mxu0 0.0
    %708 = vmatprep.subr.mxu0 0.0
    %709 = vmatpush1.msra.mxu0 0.0
    %710 = vmatprep.subr.mxu0 0.0
    %711 = vmatpush1.msra.mxu0 0.0
    %712 = vmatprep.subr.mxu0 0.0
    %713 = vmatpush1.msra.mxu0 0.0
    %714 = vmatprep.subr.mxu0 0.0
    %715 = vmatpush1.msra.mxu0 0.0
    %716 = vmatprep.subr.mxu0 0.0
    %717 = vmatpush1.msra.mxu0 0.0
    %718 = vmatprep.mubr.f32.mxu0 0.0
    %719 = vmatmul.mubr.f32.gmra.mrb[0].mxu0 %v649
    %v720 = vpop.f32.mrb[0].mxu0
    %v721 = vadd.f32 0.0, %v720
    %v722 = vpop.f32.mrb[0].mxu0
    %723 = vmatprep.mubr.f32.mxu0 0.0
    %724 = vmatmul.mubr.f32.gmra.mrb[0].mxu0 %v652
    %v725 = vpop.f32.mrb[0].mxu0
    %v726 = vadd.f32 0.0, %v725
    %v727 = vpop.f32.mrb[0].mxu0
    %728 = vdwg.mxu0
    %729 = vrot.lane.b32.xlu0 %v499, 120
    %v730 = vpop.permute.xlu0 %729
    %731 = vrot.lane.b32.xlu0 %v504, 120
    %v732 = vpop.permute.xlu0 %731
    %733 = vrot.lane.b32.xlu0 %v499, 88
    %v734 = vpop.permute.xlu0 %733
    %735 = vrot.lane.b32.xlu0 %v504, 88
    %v736 = vpop.permute.xlu0 %735
    %v737 = vsel %vm531, %v730, 0
    %v739 = vsel %vm531, %v732, 0
    %v741 = vsel %vm531, %v734, 0
    %v743 = vsel %vm531, %v736, 0
    %745 = vmatprep.subr.mxu0 0.0
    %746 = vmatpush1.xpose.msra.mxu0 %v741
    %747 = vmatprep.subr.mxu0 0.0
    %748 = vmatpush1.xpose.msra.mxu0 %v743
    %749 = vmatprep.subr.mxu0 0.0
    %750 = vmatpush1.xpose.msra.mxu0 0.0
    %751 = vmatprep.subr.mxu0 0.0
    %752 = vmatpush1.xpose.msra.mxu0 0.0
    %753 = vmatprep.subr.mxu0 0.0
    %754 = vmatpush1.xpose.msra.mxu0 0.0
    %755 = vmatprep.subr.mxu0 0.0
    %756 = vmatpush1.xpose.msra.mxu0 0.0
    %757 = vmatprep.subr.mxu0 0.0
    %758 = vmatpush1.xpose.msra.mxu0 0.0
    %759 = vmatprep.subr.mxu0 0.0
    %760 = vmatpush1.xpose.msra.mxu0 0.0
    %761 = vmatprep.subr.mxu0 0.0
    %762 = vmatpush1.xpose.msra.mxu0 0.0
    %763 = vmatprep.subr.mxu0 0.0
    %764 = vmatpush1.xpose.msra.mxu0 0.0
    %765 = vmatprep.subr.mxu0 0.0
    %766 = vmatpush1.xpose.msra.mxu0 0.0
    %767 = vmatprep.subr.mxu0 0.0
    %768 = vmatpush1.xpose.msra.mxu0 0.0
    %769 = vmatprep.subr.mxu0 0.0
    %770 = vmatpush1.xpose.msra.mxu0 0.0
    %771 = vmatprep.subr.mxu0 0.0
    %772 = vmatpush1.xpose.msra.mxu0 0.0
    %773 = vmatprep.subr.mxu0 0.0
    %774 = vmatpush1.xpose.msra.mxu0 0.0
    %775 = vmatprep.subr.mxu0 0.0
    %776 = vmatpush1.xpose.msra.mxu0 0.0
    %777 = vmatprep.subr.mxu0 0.0
    %778 = vmatpush1.xpose.msra.mxu0 0.0
    %779 = vmatprep.subr.mxu0 0.0
    %780 = vmatpush1.xpose.msra.mxu0 0.0
    %781 = vmatprep.subr.mxu0 0.0
    %782 = vmatpush1.xpose.msra.mxu0 0.0
    %783 = vmatprep.subr.mxu0 0.0
    %784 = vmatpush1.xpose.msra.mxu0 0.0
    %785 = vmatprep.subr.mxu0 0.0
    %786 = vmatpush1.xpose.msra.mxu0 0.0
    %787 = vmatprep.subr.mxu0 0.0
    %788 = vmatpush1.xpose.msra.mxu0 0.0
    %789 = vmatprep.subr.mxu0 0.0
    %790 = vmatpush1.xpose.msra.mxu0 0.0
    %791 = vmatprep.subr.mxu0 0.0
    %792 = vmatpush1.xpose.msra.mxu0 0.0
    %793 = vmatprep.subr.mxu0 0.0
    %794 = vmatpush1.xpose.msra.mxu0 0.0
    %795 = vmatprep.subr.mxu0 0.0
    %796 = vmatpush1.xpose.msra.mxu0 0.0
    %797 = vmatprep.subr.mxu0 0.0
    %798 = vmatpush1.xpose.msra.mxu0 0.0
    %799 = vmatprep.subr.mxu0 0.0
    %800 = vmatpush1.xpose.msra.mxu0 0.0
    %801 = vmatprep.subr.mxu0 0.0
    %802 = vmatpush1.xpose.msra.mxu0 0.0
    %803 = vmatprep.subr.mxu0 0.0
    %804 = vmatpush1.xpose.msra.mxu0 0.0
    %805 = vmatprep.subr.mxu0 0.0
    %806 = vmatpush1.xpose.msra.mxu0 0.0
    %807 = vmatprep.subr.mxu0 0.0
    %808 = vmatpush1.xpose.msra.mxu0 0.0
    %809 = vmatprep.mubr.f32.mxu0 0.0
    %810 = vmatmul.mubr.f32.gmra.mrb[0].mxu0 %v737
    %v811 = vpop.f32.mrb[0].mxu0
    %v812 = vadd.f32 0.0, %v811
    %v813 = vpop.f32.mrb[0].mxu0
    %814 = vmatprep.mubr.f32.mxu0 0.0
    %815 = vmatmul.mubr.f32.gmra.mrb[0].mxu0 %v739
    %v816 = vpop.f32.mrb[0].mxu0
    %v817 = vadd.f32 0.0, %v816
    %v818 = vpop.f32.mrb[0].mxu0
    %819 = vdwg.mxu0
    %v820 = vmul.f32 %v812, 0.35355338
    %v821 = vmul.f32 %v817, 0.35355338
    %v822 = vsel %vm524, -1e+09, %v820
    %v823 = vsel %vm524, -1e+09, %v821
    %v824 = vsel %vm619, %v822, -inf
    %825 = vmax.xlane.f32.xlu0 %v824
    %v826 = vpop.xlane.xlu0 %825
    %v827 = vsel %vm619, %v823, -inf
    %828 = vmax.xlane.f32.xlu0 %v827
    %v829 = vpop.xlane.xlu0 %828
    %v830 = vsub.f32 %v822, %v826
    %v831 = vsub.f32 %v823, %v829
    %v832 = vmul.f32 %v830, 1.442695
    %v833 = vpow.pop %v832
    %v834 = vmul.f32 %v831, 1.442695
    %v835 = vpow.pop %v834
    %v836 = vsel %vm619, %v833, 0.0
    %837 = vadd.xlane.f32.xlu0 %v836
    %v838 = vpop.xlane.xlu0 %837
    %v839 = vsel %vm619, %v835, 0.0
    %840 = vadd.xlane.f32.xlu0 %v839
    %v841 = vpop.xlane.xlu0 %840
    %v842 = vrcp.pop %v838
    %v843 = vmul.f32 %v833, %v842
    %v844 = vrcp.pop %v841
    %v845 = vmul.f32 %v835, %v844
    %846 = vrot.lane.b32.xlu0 %v499, 56
    %v847 = vpop.permute.xlu0 %846
    %848 = vrot.lane.b32.xlu0 %v504, 56
    %v849 = vpop.permute.xlu0 %848
    %v853 = vsel %vm619, %v843, 0
    %v856 = vsel %vm619, %v845, 0
    %858 = vmatprep.subr.mxu0 0.0
    %859 = vmatpush1.msra.mxu0 %v847
    %860 = vmatprep.subr.mxu0 0.0
    %861 = vmatpush1.msra.mxu0 %v849
    %862 = vmatprep.subr.mxu0 0.0
    %863 = vmatpush1.msra.mxu0 0.0
    %864 = vmatprep.subr.mxu0 0.0
    %865 = vmatpush1.msra.mxu0 0.0
    %866 = vmatprep.subr.mxu0 0.0
    %867 = vmatpush1.msra.mxu0 0.0
    %868 = vmatprep.subr.mxu0 0.0
    %869 = vmatpush1.msra.mxu0 0.0
    %870 = vmatprep.subr.mxu0 0.0
    %871 = vmatpush1.msra.mxu0 0.0
    %872 = vmatprep.subr.mxu0 0.0
    %873 = vmatpush1.msra.mxu0 0.0
    %874 = vmatprep.subr.mxu0 0.0
    %875 = vmatpush1.msra.mxu0 0.0
    %876 = vmatprep.subr.mxu0 0.0
    %877 = vmatpush1.msra.mxu0 0.0
    %878 = vmatprep.subr.mxu0 0.0
    %879 = vmatpush1.msra.mxu0 0.0
    %880 = vmatprep.subr.mxu0 0.0
    %881 = vmatpush1.msra.mxu0 0.0
    %882 = vmatprep.subr.mxu0 0.0
    %883 = vmatpush1.msra.mxu0 0.0
    %884 = vmatprep.subr.mxu0 0.0
    %885 = vmatpush1.msra.mxu0 0.0
    %886 = vmatprep.subr.mxu0 0.0
    %887 = vmatpush1.msra.mxu0 0.0
    %888 = vmatprep.subr.mxu0 0.0
    %889 = vmatpush1.msra.mxu0 0.0
    %890 = vmatprep.subr.mxu0 0.0
    %891 = vmatpush1.msra.mxu0 0.0
    %892 = vmatprep.subr.mxu0 0.0
    %893 = vmatpush1.msra.mxu0 0.0
    %894 = vmatprep.subr.mxu0 0.0
    %895 = vmatpush1.msra.mxu0 0.0
    %896 = vmatprep.subr.mxu0 0.0
    %897 = vmatpush1.msra.mxu0 0.0
    %898 = vmatprep.subr.mxu0 0.0
    %899 = vmatpush1.msra.mxu0 0.0
    %900 = vmatprep.subr.mxu0 0.0
    %901 = vmatpush1.msra.mxu0 0.0
    %902 = vmatprep.subr.mxu0 0.0
    %903 = vmatpush1.msra.mxu0 0.0
    %904 = vmatprep.subr.mxu0 0.0
    %905 = vmatpush1.msra.mxu0 0.0
    %906 = vmatprep.subr.mxu0 0.0
    %907 = vmatpush1.msra.mxu0 0.0
    %908 = vmatprep.subr.mxu0 0.0
    %909 = vmatpush1.msra.mxu0 0.0
    %910 = vmatprep.subr.mxu0 0.0
    %911 = vmatpush1.msra.mxu0 0.0
    %912 = vmatprep.subr.mxu0 0.0
    %913 = vmatpush1.msra.mxu0 0.0
    %914 = vmatprep.subr.mxu0 0.0
    %915 = vmatpush1.msra.mxu0 0.0
    %916 = vmatprep.subr.mxu0 0.0
    %917 = vmatpush1.msra.mxu0 0.0
    %918 = vmatprep.subr.mxu0 0.0
    %919 = vmatpush1.msra.mxu0 0.0
    %920 = vmatprep.subr.mxu0 0.0
    %921 = vmatpush1.msra.mxu0 0.0
    %922 = vmatprep.mubr.f32.mxu0 0.0
    %923 = vmatmul.mubr.f32.gmra.mrb[0].mxu0 %v853
    %v924 = vpop.f32.mrb[0].mxu0
    %v925 = vadd.f32 0.0, %v924
    %v926 = vpop.f32.mrb[0].mxu0
    %927 = vmatprep.mubr.f32.mxu0 0.0
    %928 = vmatmul.mubr.f32.gmra.mrb[0].mxu0 %v856
    %v929 = vpop.f32.mrb[0].mxu0
    %v930 = vadd.f32 0.0, %v929
    %v931 = vpop.f32.mrb[0].mxu0
    %932 = vdwg.mxu0
    %933 = vrot.lane.b32.xlu0 %v499, 112
    %v934 = vpop.permute.xlu0 %933
    %935 = vrot.lane.b32.xlu0 %v504, 112
    %v936 = vpop.permute.xlu0 %935
    %937 = vrot.lane.b32.xlu0 %v499, 80
    %v938 = vpop.permute.xlu0 %937
    %939 = vrot.lane.b32.xlu0 %v504, 80
    %v940 = vpop.permute.xlu0 %939
    %v941 = vsel %vm531, %v934, 0
    %v943 = vsel %vm531, %v936, 0
    %v945 = vsel %vm531, %v938, 0
    %v947 = vsel %vm531, %v940, 0
    %949 = vmatprep.subr.mxu0 0.0
    %950 = vmatpush1.xpose.msra.mxu0 %v945
    %951 = vmatprep.subr.mxu0 0.0
    %952 = vmatpush1.xpose.msra.mxu0 %v947
    %953 = vmatprep.subr.mxu0 0.0
    %954 = vmatpush1.xpose.msra.mxu0 0.0
    %955 = vmatprep.subr.mxu0 0.0
    %956 = vmatpush1.xpose.msra.mxu0 0.0
    %957 = vmatprep.subr.mxu0 0.0
    %958 = vmatpush1.xpose.msra.mxu0 0.0
    %959 = vmatprep.subr.mxu0 0.0
    %960 = vmatpush1.xpose.msra.mxu0 0.0
    %961 = vmatprep.subr.mxu0 0.0
    %962 = vmatpush1.xpose.msra.mxu0 0.0
    %963 = vmatprep.subr.mxu0 0.0
    %964 = vmatpush1.xpose.msra.mxu0 0.0
    %965 = vmatprep.subr.mxu0 0.0
    %966 = vmatpush1.xpose.msra.mxu0 0.0
    %967 = vmatprep.subr.mxu0 0.0
    %968 = vmatpush1.xpose.msra.mxu0 0.0
    %969 = vmatprep.subr.mxu0 0.0
    %970 = vmatpush1.xpose.msra.mxu0 0.0
    %971 = vmatprep.subr.mxu0 0.0
    %972 = vmatpush1.xpose.msra.mxu0 0.0
    %973 = vmatprep.subr.mxu0 0.0
    %974 = vmatpush1.xpose.msra.mxu0 0.0
    %975 = vmatprep.subr.mxu0 0.0
    %976 = vmatpush1.xpose.msra.mxu0 0.0
    %977 = vmatprep.subr.mxu0 0.0
    %978 = vmatpush1.xpose.msra.mxu0 0.0
    %979 = vmatprep.subr.mxu0 0.0
    %980 = vmatpush1.xpose.msra.mxu0 0.0
    %981 = vmatprep.subr.mxu0 0.0
    %982 = vmatpush1.xpose.msra.mxu0 0.0
    %983 = vmatprep.subr.mxu0 0.0
    %984 = vmatpush1.xpose.msra.mxu0 0.0
    %985 = vmatprep.subr.mxu0 0.0
    %986 = vmatpush1.xpose.msra.mxu0 0.0
    %987 = vmatprep.subr.mxu0 0.0
    %988 = vmatpush1.xpose.msra.mxu0 0.0
    %989 = vmatprep.subr.mxu0 0.0
    %990 = vmatpush1.xpose.msra.mxu0 0.0
    %991 = vmatprep.subr.mxu0 0.0
    %992 = vmatpush1.xpose.msra.mxu0 0.0
    %993 = vmatprep.subr.mxu0 0.0
    %994 = vmatpush1.xpose.msra.mxu0 0.0
    %995 = vmatprep.subr.mxu0 0.0
    %996 = vmatpush1.xpose.msra.mxu0 0.0
    %997 = vmatprep.subr.mxu0 0.0
    %998 = vmatpush1.xpose.msra.mxu0 0.0
    %999 = vmatprep.subr.mxu0 0.0
    %1000 = vmatpush1.xpose.msra.mxu0 0.0
    %1001 = vmatprep.subr.mxu0 0.0
    %1002 = vmatpush1.xpose.msra.mxu0 0.0
    %1003 = vmatprep.subr.mxu0 0.0
    %1004 = vmatpush1.xpose.msra.mxu0 0.0
    %1005 = vmatprep.subr.mxu0 0.0
    %1006 = vmatpush1.xpose.msra.mxu0 0.0
    %1007 = vmatprep.subr.mxu0 0.0
    %1008 = vmatpush1.xpose.msra.mxu0 0.0
    %1009 = vmatprep.subr.mxu0 0.0
    %1010 = vmatpush1.xpose.msra.mxu0 0.0
    %1011 = vmatprep.subr.mxu0 0.0
    %1012 = vmatpush1.xpose.msra.mxu0 0.0
    %1013 = vmatprep.mubr.f32.mxu0 0.0
    %1014 = vmatmul.mubr.f32.gmra.mrb[0].mxu0 %v941
    %v1015 = vpop.f32.mrb[0].mxu0
    %v1016 = vadd.f32 0.0, %v1015
    %v1017 = vpop.f32.mrb[0].mxu0
    %1018 = vmatprep.mubr.f32.mxu0 0.0
    %1019 = vmatmul.mubr.f32.gmra.mrb[0].mxu0 %v943
    %v1020 = vpop.f32.mrb[0].mxu0
    %v1021 = vadd.f32 0.0, %v1020
    %v1022 = vpop.f32.mrb[0].mxu0
    %1023 = vdwg.mxu0
    %v1024 = vmul.f32 %v1016, 0.35355338
    %v1025 = vmul.f32 %v1021, 0.35355338
    %v1026 = vsel %vm524, -1e+09, %v1024
    %v1027 = vsel %vm524, -1e+09, %v1025
    %v1028 = vsel %vm619, %v1026, -inf
    %1029 = vmax.xlane.f32.xlu0 %v1028
    %v1030 = vpop.xlane.xlu0 %1029
    %v1031 = vsel %vm619, %v1027, -inf
    %1032 = vmax.xlane.f32.xlu0 %v1031
    %v1033 = vpop.xlane.xlu0 %1032
    %v1034 = vsub.f32 %v1026, %v1030
    %v1035 = vsub.f32 %v1027, %v1033
    %v1036 = vmul.f32 %v1034, 1.442695
    %v1037 = vpow.pop %v1036
    %v1038 = vmul.f32 %v1035, 1.442695
    %v1039 = vpow.pop %v1038
    %v1040 = vsel %vm619, %v1037, 0.0
    %1041 = vadd.xlane.f32.xlu0 %v1040
    %v1042 = vpop.xlane.xlu0 %1041
    %v1043 = vsel %vm619, %v1039, 0.0
    %1044 = vadd.xlane.f32.xlu0 %v1043
    %v1045 = vpop.xlane.xlu0 %1044
    %v1046 = vrcp.pop %v1042
    %v1047 = vmul.f32 %v1037, %v1046
    %v1048 = vrcp.pop %v1045
    %v1049 = vmul.f32 %v1039, %v1048
    %1050 = vrot.lane.b32.xlu0 %v499, 48
    %v1051 = vpop.permute.xlu0 %1050
    %1052 = vrot.lane.b32.xlu0 %v504, 48
    %v1053 = vpop.permute.xlu0 %1052
    %v1057 = vsel %vm619, %v1047, 0
    %v1060 = vsel %vm619, %v1049, 0
    %1062 = vmatprep.subr.mxu0 0.0
    %1063 = vmatpush1.msra.mxu0 %v1051
    %1064 = vmatprep.subr.mxu0 0.0
    %1065 = vmatpush1.msra.mxu0 %v1053
    %1066 = vmatprep.subr.mxu0 0.0
    %1067 = vmatpush1.msra.mxu0 0.0
    %1068 = vmatprep.subr.mxu0 0.0
    %1069 = vmatpush1.msra.mxu0 0.0
    %1070 = vmatprep.subr.mxu0 0.0
    %1071 = vmatpush1.msra.mxu0 0.0
    %1072 = vmatprep.subr.mxu0 0.0
    %1073 = vmatpush1.msra.mxu0 0.0
    %1074 = vmatprep.subr.mxu0 0.0
    %1075 = vmatpush1.msra.mxu0 0.0
    %1076 = vmatprep.subr.mxu0 0.0
    %1077 = vmatpush1.msra.mxu0 0.0
    %1078 = vmatprep.subr.mxu0 0.0
    %1079 = vmatpush1.msra.mxu0 0.0
    %1080 = vmatprep.subr.mxu0 0.0
    %1081 = vmatpush1.msra.mxu0 0.0
    %1082 = vmatprep.subr.mxu0 0.0
    %1083 = vmatpush1.msra.mxu0 0.0
    %1084 = vmatprep.subr.mxu0 0.0
    %1085 = vmatpush1.msra.mxu0 0.0
    %1086 = vmatprep.subr.mxu0 0.0
    %1087 = vmatpush1.msra.mxu0 0.0
    %1088 = vmatprep.subr.mxu0 0.0
    %1089 = vmatpush1.msra.mxu0 0.0
    %1090 = vmatprep.subr.mxu0 0.0
    %1091 = vmatpush1.msra.mxu0 0.0
    %1092 = vmatprep.subr.mxu0 0.0
    %1093 = vmatpush1.msra.mxu0 0.0
    %1094 = vmatprep.subr.mxu0 0.0
    %1095 = vmatpush1.msra.mxu0 0.0
    %1096 = vmatprep.subr.mxu0 0.0
    %1097 = vmatpush1.msra.mxu0 0.0
    %1098 = vmatprep.subr.mxu0 0.0
    %1099 = vmatpush1.msra.mxu0 0.0
    %1100 = vmatprep.subr.mxu0 0.0
    %1101 = vmatpush1.msra.mxu0 0.0
    %1102 = vmatprep.subr.mxu0 0.0
    %1103 = vmatpush1.msra.mxu0 0.0
    %1104 = vmatprep.subr.mxu0 0.0
    %1105 = vmatpush1.msra.mxu0 0.0
    %1106 = vmatprep.subr.mxu0 0.0
    %1107 = vmatpush1.msra.mxu0 0.0
    %1108 = vmatprep.subr.mxu0 0.0
    %1109 = vmatpush1.msra.mxu0 0.0
    %1110 = vmatprep.subr.mxu0 0.0
    %1111 = vmatpush1.msra.mxu0 0.0
    %1112 = vmatprep.subr.mxu0 0.0
    %1113 = vmatpush1.msra.mxu0 0.0
    %1114 = vmatprep.subr.mxu0 0.0
    %1115 = vmatpush1.msra.mxu0 0.0
    %1116 = vmatprep.subr.mxu0 0.0
    %1117 = vmatpush1.msra.mxu0 0.0
    %1118 = vmatprep.subr.mxu0 0.0
    %1119 = vmatpush1.msra.mxu0 0.0
    %1120 = vmatprep.subr.mxu0 0.0
    %1121 = vmatpush1.msra.mxu0 0.0
    %1122 = vmatprep.subr.mxu0 0.0
    %1123 = vmatpush1.msra.mxu0 0.0
    %1124 = vmatprep.subr.mxu0 0.0
    %1125 = vmatpush1.msra.mxu0 0.0
    %1126 = vmatprep.mubr.f32.mxu0 0.0
    %1127 = vmatmul.mubr.f32.gmra.mrb[0].mxu0 %v1057
    %v1128 = vpop.f32.mrb[0].mxu0
    %v1129 = vadd.f32 0.0, %v1128
    %v1130 = vpop.f32.mrb[0].mxu0
    %1131 = vmatprep.mubr.f32.mxu0 0.0
    %1132 = vmatmul.mubr.f32.gmra.mrb[0].mxu0 %v1060
    %v1133 = vpop.f32.mrb[0].mxu0
    %v1134 = vadd.f32 0.0, %v1133
    %v1135 = vpop.f32.mrb[0].mxu0
    %1136 = vdwg.mxu0
    %1137 = vrot.lane.b32.xlu0 %v499, 104
    %v1138 = vpop.permute.xlu0 %1137
    %1139 = vrot.lane.b32.xlu0 %v504, 104
    %v1140 = vpop.permute.xlu0 %1139
    %1141 = vrot.lane.b32.xlu0 %v499, 72
    %v1142 = vpop.permute.xlu0 %1141
    %1143 = vrot.lane.b32.xlu0 %v504, 72
    %v1144 = vpop.permute.xlu0 %1143
    %v1145 = vsel %vm531, %v1138, 0
    %v1147 = vsel %vm531, %v1140, 0
    %v1149 = vsel %vm531, %v1142, 0
    %v1151 = vsel %vm531, %v1144, 0
    %1153 = vmatprep.subr.mxu0 0.0
    %1154 = vmatpush1.xpose.msra.mxu0 %v1149
    %1155 = vmatprep.subr.mxu0 0.0
    %1156 = vmatpush1.xpose.msra.mxu0 %v1151
    %1157 = vmatprep.subr.mxu0 0.0
    %1158 = vmatpush1.xpose.msra.mxu0 0.0
    %1159 = vmatprep.subr.mxu0 0.0
    %1160 = vmatpush1.xpose.msra.mxu0 0.0
    %1161 = vmatprep.subr.mxu0 0.0
    %1162 = vmatpush1.xpose.msra.mxu0 0.0
    %1163 = vmatprep.subr.mxu0 0.0
    %1164 = vmatpush1.xpose.msra.mxu0 0.0
    %1165 = vmatprep.subr.mxu0 0.0
    %1166 = vmatpush1.xpose.msra.mxu0 0.0
    %1167 = vmatprep.subr.mxu0 0.0
    %1168 = vmatpush1.xpose.msra.mxu0 0.0
    %1169 = vmatprep.subr.mxu0 0.0
    %1170 = vmatpush1.xpose.msra.mxu0 0.0
    %1171 = vmatprep.subr.mxu0 0.0
    %1172 = vmatpush1.xpose.msra.mxu0 0.0
    %1173 = vmatprep.subr.mxu0 0.0
    %1174 = vmatpush1.xpose.msra.mxu0 0.0
    %1175 = vmatprep.subr.mxu0 0.0
    %1176 = vmatpush1.xpose.msra.mxu0 0.0
    %1177 = vmatprep.subr.mxu0 0.0
    %1178 = vmatpush1.xpose.msra.mxu0 0.0
    %1179 = vmatprep.subr.mxu0 0.0
    %1180 = vmatpush1.xpose.msra.mxu0 0.0
    %1181 = vmatprep.subr.mxu0 0.0
    %1182 = vmatpush1.xpose.msra.mxu0 0.0
    %1183 = vmatprep.subr.mxu0 0.0
    %1184 = vmatpush1.xpose.msra.mxu0 0.0
    %1185 = vmatprep.subr.mxu0 0.0
    %1186 = vmatpush1.xpose.msra.mxu0 0.0
    %1187 = vmatprep.subr.mxu0 0.0
    %1188 = vmatpush1.xpose.msra.mxu0 0.0
    %1189 = vmatprep.subr.mxu0 0.0
    %1190 = vmatpush1.xpose.msra.mxu0 0.0
    %1191 = vmatprep.subr.mxu0 0.0
    %1192 = vmatpush1.xpose.msra.mxu0 0.0
    %1193 = vmatprep.subr.mxu0 0.0
    %1194 = vmatpush1.xpose.msra.mxu0 0.0
    %1195 = vmatprep.subr.mxu0 0.0
    %1196 = vmatpush1.xpose.msra.mxu0 0.0
    %1197 = vmatprep.subr.mxu0 0.0
    %1198 = vmatpush1.xpose.msra.mxu0 0.0
    %1199 = vmatprep.subr.mxu0 0.0
    %1200 = vmatpush1.xpose.msra.mxu0 0.0
    %1201 = vmatprep.subr.mxu0 0.0
    %1202 = vmatpush1.xpose.msra.mxu0 0.0
    %1203 = vmatprep.subr.mxu0 0.0
    %1204 = vmatpush1.xpose.msra.mxu0 0.0
    %1205 = vmatprep.subr.mxu0 0.0
    %1206 = vmatpush1.xpose.msra.mxu0 0.0
    %1207 = vmatprep.subr.mxu0 0.0
    %1208 = vmatpush1.xpose.msra.mxu0 0.0
    %1209 = vmatprep.subr.mxu0 0.0
    %1210 = vmatpush1.xpose.msra.mxu0 0.0
    %1211 = vmatprep.subr.mxu0 0.0
    %1212 = vmatpush1.xpose.msra.mxu0 0.0
    %1213 = vmatprep.subr.mxu0 0.0
    %1214 = vmatpush1.xpose.msra.mxu0 0.0
    %1215 = vmatprep.subr.mxu0 0.0
    %1216 = vmatpush1.xpose.msra.mxu0 0.0
    %1217 = vmatprep.mubr.f32.mxu0 0.0
    %1218 = vmatmul.mubr.f32.gmra.mrb[0].mxu0 %v1145
    %v1219 = vpop.f32.mrb[0].mxu0
    %v1220 = vadd.f32 0.0, %v1219
    %v1221 = vpop.f32.mrb[0].mxu0
    %1222 = vmatprep.mubr.f32.mxu0 0.0
    %1223 = vmatmul.mubr.f32.gmra.mrb[0].mxu0 %v1147
    %v1224 = vpop.f32.mrb[0].mxu0
    %v1225 = vadd.f32 0.0, %v1224
    %v1226 = vpop.f32.mrb[0].mxu0
    %1227 = vdwg.mxu0
    %v1228 = vmul.f32 %v1220, 0.35355338
    %v1229 = vmul.f32 %v1225, 0.35355338
    %v1230 = vsel %vm524, -1e+09, %v1228
    %v1231 = vsel %vm524, -1e+09, %v1229
    %v1232 = vsel %vm619, %v1230, -inf
    %1233 = vmax.xlane.f32.xlu0 %v1232
    %v1234 = vpop.xlane.xlu0 %1233
    %v1235 = vsel %vm619, %v1231, -inf
    %1236 = vmax.xlane.f32.xlu0 %v1235
    %v1237 = vpop.xlane.xlu0 %1236
    %v1238 = vsub.f32 %v1230, %v1234
    %v1239 = vsub.f32 %v1231, %v1237
    %v1240 = vmul.f32 %v1238, 1.442695
    %v1241 = vpow.pop %v1240
    %v1242 = vmul.f32 %v1239, 1.442695
    %v1243 = vpow.pop %v1242
    %v1244 = vsel %vm619, %v1241, 0.0
    %1245 = vadd.xlane.f32.xlu0 %v1244
    %v1246 = vpop.xlane.xlu0 %1245
    %v1247 = vsel %vm619, %v1243, 0.0
    %1248 = vadd.xlane.f32.xlu0 %v1247
    %v1249 = vpop.xlane.xlu0 %1248
    %v1250 = vrcp.pop %v1246
    %v1251 = vmul.f32 %v1241, %v1250
    %v1252 = vrcp.pop %v1249
    %v1253 = vmul.f32 %v1243, %v1252
    %1254 = vrot.lane.b32.xlu0 %v499, 40
    %v1255 = vpop.permute.xlu0 %1254
    %1256 = vrot.lane.b32.xlu0 %v504, 40
    %v1257 = vpop.permute.xlu0 %1256
    %v1261 = vsel %vm619, %v1251, 0
    %v1264 = vsel %vm619, %v1253, 0
    %1266 = vmatprep.subr.mxu0 0.0
    %1267 = vmatpush1.msra.mxu0 %v1255
    %1268 = vmatprep.subr.mxu0 0.0
    %1269 = vmatpush1.msra.mxu0 %v1257
    %1270 = vmatprep.subr.mxu0 0.0
    %1271 = vmatpush1.msra.mxu0 0.0
    %1272 = vmatprep.subr.mxu0 0.0
    %1273 = vmatpush1.msra.mxu0 0.0
    %1274 = vmatprep.subr.mxu0 0.0
    %1275 = vmatpush1.msra.mxu0 0.0
    %1276 = vmatprep.subr.mxu0 0.0
    %1277 = vmatpush1.msra.mxu0 0.0
    %1278 = vmatprep.subr.mxu0 0.0
    %1279 = vmatpush1.msra.mxu0 0.0
    %1280 = vmatprep.subr.mxu0 0.0
    %1281 = vmatpush1.msra.mxu0 0.0
    %1282 = vmatprep.subr.mxu0 0.0
    %1283 = vmatpush1.msra.mxu0 0.0
    %1284 = vmatprep.subr.mxu0 0.0
    %1285 = vmatpush1.msra.mxu0 0.0
    %1286 = vmatprep.subr.mxu0 0.0
    %1287 = vmatpush1.msra.mxu0 0.0
    %1288 = vmatprep.subr.mxu0 0.0
    %1289 = vmatpush1.msra.mxu0 0.0
    %1290 = vmatprep.subr.mxu0 0.0
    %1291 = vmatpush1.msra.mxu0 0.0
    %1292 = vmatprep.subr.mxu0 0.0
    %1293 = vmatpush1.msra.mxu0 0.0
    %1294 = vmatprep.subr.mxu0 0.0
    %1295 = vmatpush1.msra.mxu0 0.0
    %1296 = vmatprep.subr.mxu0 0.0
    %1297 = vmatpush1.msra.mxu0 0.0
    %1298 = vmatprep.subr.mxu0 0.0
    %1299 = vmatpush1.msra.mxu0 0.0
    %1300 = vmatprep.subr.mxu0 0.0
    %1301 = vmatpush1.msra.mxu0 0.0
    %1302 = vmatprep.subr.mxu0 0.0
    %1303 = vmatpush1.msra.mxu0 0.0
    %1304 = vmatprep.subr.mxu0 0.0
    %1305 = vmatpush1.msra.mxu0 0.0
    %1306 = vmatprep.subr.mxu0 0.0
    %1307 = vmatpush1.msra.mxu0 0.0
    %1308 = vmatprep.subr.mxu0 0.0
    %1309 = vmatpush1.msra.mxu0 0.0
    %1310 = vmatprep.subr.mxu0 0.0
    %1311 = vmatpush1.msra.mxu0 0.0
    %1312 = vmatprep.subr.mxu0 0.0
    %1313 = vmatpush1.msra.mxu0 0.0
    %1314 = vmatprep.subr.mxu0 0.0
    %1315 = vmatpush1.msra.mxu0 0.0
    %1316 = vmatprep.subr.mxu0 0.0
    %1317 = vmatpush1.msra.mxu0 0.0
    %1318 = vmatprep.subr.mxu0 0.0
    %1319 = vmatpush1.msra.mxu0 0.0
    %1320 = vmatprep.subr.mxu0 0.0
    %1321 = vmatpush1.msra.mxu0 0.0
    %1322 = vmatprep.subr.mxu0 0.0
    %1323 = vmatpush1.msra.mxu0 0.0
    %1324 = vmatprep.subr.mxu0 0.0
    %1325 = vmatpush1.msra.mxu0 0.0
    %1326 = vmatprep.subr.mxu0 0.0
    %1327 = vmatpush1.msra.mxu0 0.0
    %1328 = vmatprep.subr.mxu0 0.0
    %1329 = vmatpush1.msra.mxu0 0.0
    %1330 = vmatprep.mubr.f32.mxu0 0.0
    %1331 = vmatmul.mubr.f32.gmra.mrb[0].mxu0 %v1261
    %v1332 = vpop.f32.mrb[0].mxu0
    %v1333 = vadd.f32 0.0, %v1332
    %v1334 = vpop.f32.mrb[0].mxu0
    %1335 = vmatprep.mubr.f32.mxu0 0.0
    %1336 = vmatmul.mubr.f32.gmra.mrb[0].mxu0 %v1264
    %v1337 = vpop.f32.mrb[0].mxu0
    %v1338 = vadd.f32 0.0, %v1337
    %v1339 = vpop.f32.mrb[0].mxu0
    %1340 = vdwg.mxu0
    %1343 = vrot.lane.b32.xlu0 %v925, 8
    %v1344 = vpop.permute.xlu0 %1343
    %1345 = vrot.lane.b32.xlu0 %v930, 8
    %v1346 = vpop.permute.xlu0 %1345
    %1351 = vrot.lane.b32.xlu0 %v1129, 16
    %v1352 = vpop.permute.xlu0 %1351
    %1353 = vrot.lane.b32.xlu0 %v1134, 16
    %v1354 = vpop.permute.xlu0 %1353
    %1359 = vrot.lane.b32.xlu0 %v1333, 24
    %v1360 = vpop.permute.xlu0 %1359
    %1361 = vrot.lane.b32.xlu0 %v1338, 24
    %v1362 = vpop.permute.xlu0 %1361
    %v1365 = vsel %vm531, %v721, %v1344
    %v1366 = vsel %vm531, %v726, %v1346
    %v1367 = vsel %vm619, %v1365, %v1352
    %v1368 = vsel %vm619, %v1366, %v1354
    %vm1369 = vcmask 195584
    %v1370 = vsel %vm1369, %v1367, %v1360
    %v1371 = vsel %vm1369, %v1368, %v1362
    %v1372 = vlaneseq
    %v1373 = vshrl.u32 %v1372, 7
    %v1374 = vsub.s32 1, %v1373
    %v1375 = vrot.slane %v519, %v1374
    %vm1376 = vcmp.eq.s32.totalorder %v1375, 1
    %1379 = vrot.lane.b32.xlu0 %v509, 96
    %v1380 = vpop.permute.xlu0 %1379
    %1381 = vrot.lane.b32.xlu0 %v514, 96
    %v1382 = vpop.permute.xlu0 %1381
    %v1383 = vsel %vm531, %v509, 0
    %v1385 = vsel %vm531, %v514, 0
    %v1387 = vsel %vm531, %v1380, 0
    %v1389 = vsel %vm531, %v1382, 0
    %1391 = vmatprep.subr.mxu0 0.0
    %1392 = vmatpush1.xpose.msra.mxu0 %v1387
    %1393 = vmatprep.subr.mxu0 0.0
    %1394 = vmatpush1.xpose.msra.mxu0 %v1389
    %1395 = vmatprep.subr.mxu0 0.0
    %1396 = vmatpush1.xpose.msra.mxu0 0.0
    %1397 = vmatprep.subr.mxu0 0.0
    %1398 = vmatpush1.xpose.msra.mxu0 0.0
    %1399 = vmatprep.subr.mxu0 0.0
    %1400 = vmatpush1.xpose.msra.mxu0 0.0
    %1401 = vmatprep.subr.mxu0 0.0
    %1402 = vmatpush1.xpose.msra.mxu0 0.0
    %1403 = vmatprep.subr.mxu0 0.0
    %1404 = vmatpush1.xpose.msra.mxu0 0.0
    %1405 = vmatprep.subr.mxu0 0.0
    %1406 = vmatpush1.xpose.msra.mxu0 0.0
    %1407 = vmatprep.subr.mxu0 0.0
    %1408 = vmatpush1.xpose.msra.mxu0 0.0
    %1409 = vmatprep.subr.mxu0 0.0
    %1410 = vmatpush1.xpose.msra.mxu0 0.0
    %1411 = vmatprep.subr.mxu0 0.0
    %1412 = vmatpush1.xpose.msra.mxu0 0.0
    %1413 = vmatprep.subr.mxu0 0.0
    %1414 = vmatpush1.xpose.msra.mxu0 0.0
    %1415 = vmatprep.subr.mxu0 0.0
    %1416 = vmatpush1.xpose.msra.mxu0 0.0
    %1417 = vmatprep.subr.mxu0 0.0
    %1418 = vmatpush1.xpose.msra.mxu0 0.0
    %1419 = vmatprep.subr.mxu0 0.0
    %1420 = vmatpush1.xpose.msra.mxu0 0.0
    %1421 = vmatprep.subr.mxu0 0.0
    %1422 = vmatpush1.xpose.msra.mxu0 0.0
    %1423 = vmatprep.subr.mxu0 0.0
    %1424 = vmatpush1.xpose.msra.mxu0 0.0
    %1425 = vmatprep.subr.mxu0 0.0
    %1426 = vmatpush1.xpose.msra.mxu0 0.0
    %1427 = vmatprep.subr.mxu0 0.0
    %1428 = vmatpush1.xpose.msra.mxu0 0.0
    %1429 = vmatprep.subr.mxu0 0.0
    %1430 = vmatpush1.xpose.msra.mxu0 0.0
    %1431 = vmatprep.subr.mxu0 0.0
    %1432 = vmatpush1.xpose.msra.mxu0 0.0
    %1433 = vmatprep.subr.mxu0 0.0
    %1434 = vmatpush1.xpose.msra.mxu0 0.0
    %1435 = vmatprep.subr.mxu0 0.0
    %1436 = vmatpush1.xpose.msra.mxu0 0.0
    %1437 = vmatprep.subr.mxu0 0.0
    %1438 = vmatpush1.xpose.msra.mxu0 0.0
    %1439 = vmatprep.subr.mxu0 0.0
    %1440 = vmatpush1.xpose.msra.mxu0 0.0
    %1441 = vmatprep.subr.mxu0 0.0
    %1442 = vmatpush1.xpose.msra.mxu0 0.0
    %1443 = vmatprep.subr.mxu0 0.0
    %1444 = vmatpush1.xpose.msra.mxu0 0.0
    %1445 = vmatprep.subr.mxu0 0.0
    %1446 = vmatpush1.xpose.msra.mxu0 0.0
    %1447 = vmatprep.subr.mxu0 0.0
    %1448 = vmatpush1.xpose.msra.mxu0 0.0
    %1449 = vmatprep.subr.mxu0 0.0
    %1450 = vmatpush1.xpose.msra.mxu0 0.0
    %1451 = vmatprep.subr.mxu0 0.0
    %1452 = vmatpush1.xpose.msra.mxu0 0.0
    %1453 = vmatprep.subr.mxu0 0.0
    %1454 = vmatpush1.xpose.msra.mxu0 0.0
    %1455 = vmatprep.mubr.f32.mxu0 0.0
    %1456 = vmatmul.mubr.f32.gmra.mrb[0].mxu0 %v1383
    %v1457 = vpop.f32.mrb[0].mxu0
    %v1458 = vadd.f32 0.0, %v1457
    %v1459 = vpop.f32.mrb[0].mxu0
    %1460 = vmatprep.mubr.f32.mxu0 0.0
    %1461 = vmatmul.mubr.f32.gmra.mrb[0].mxu0 %v1385
    %v1462 = vpop.f32.mrb[0].mxu0
    %v1463 = vadd.f32 0.0, %v1462
    %v1464 = vpop.f32.mrb[0].mxu0
    %1465 = vdwg.mxu0
    %v1466 = vmul.f32 %v1458, 0.35355338
    %v1467 = vmul.f32 %v1463, 0.35355338
    %v1468 = vsel %vm1376, -1e+09, %v1466
    %v1469 = vsel %vm1376, -1e+09, %v1467
    %v1470 = vsel %vm619, %v1468, -inf
    %1471 = vmax.xlane.f32.xlu0 %v1470
    %v1472 = vpop.xlane.xlu0 %1471
    %v1473 = vsel %vm619, %v1469, -inf
    %1474 = vmax.xlane.f32.xlu0 %v1473
    %v1475 = vpop.xlane.xlu0 %1474
    %v1476 = vsub.f32 %v1468, %v1472
    %v1477 = vsub.f32 %v1469, %v1475
    %v1478 = vmul.f32 %v1476, 1.442695
    %v1479 = vpow.pop %v1478
    %v1480 = vmul.f32 %v1477, 1.442695
    %v1481 = vpow.pop %v1480
    %v1482 = vsel %vm619, %v1479, 0.0
    %1483 = vadd.xlane.f32.xlu0 %v1482
    %v1484 = vpop.xlane.xlu0 %1483
    %v1485 = vsel %vm619, %v1481, 0.0
    %1486 = vadd.xlane.f32.xlu0 %v1485
    %v1487 = vpop.xlane.xlu0 %1486
    %v1488 = vrcp.pop %v1484
    %v1489 = vmul.f32 %v1479, %v1488
    %v1490 = vrcp.pop %v1487
    %v1491 = vmul.f32 %v1481, %v1490
    %1492 = vrot.lane.b32.xlu0 %v509, 64
    %v1493 = vpop.permute.xlu0 %1492
    %1494 = vrot.lane.b32.xlu0 %v514, 64
    %v1495 = vpop.permute.xlu0 %1494
    %v1499 = vsel %vm619, %v1489, 0
    %v1502 = vsel %vm619, %v1491, 0
    %1504 = vmatprep.subr.mxu0 0.0
    %1505 = vmatpush1.msra.mxu0 %v1493
    %1506 = vmatprep.subr.mxu0 0.0
    %1507 = vmatpush1.msra.mxu0 %v1495
    %1508 = vmatprep.subr.mxu0 0.0
    %1509 = vmatpush1.msra.mxu0 0.0
    %1510 = vmatprep.subr.mxu0 0.0
    %1511 = vmatpush1.msra.mxu0 0.0
    %1512 = vmatprep.subr.mxu0 0.0
    %1513 = vmatpush1.msra.mxu0 0.0
    %1514 = vmatprep.subr.mxu0 0.0
    %1515 = vmatpush1.msra.mxu0 0.0
    %1516 = vmatprep.subr.mxu0 0.0
    %1517 = vmatpush1.msra.mxu0 0.0
    %1518 = vmatprep.subr.mxu0 0.0
    %1519 = vmatpush1.msra.mxu0 0.0
    %1520 = vmatprep.subr.mxu0 0.0
    %1521 = vmatpush1.msra.mxu0 0.0
    %1522 = vmatprep.subr.mxu0 0.0
    %1523 = vmatpush1.msra.mxu0 0.0
    %1524 = vmatprep.subr.mxu0 0.0
    %1525 = vmatpush1.msra.mxu0 0.0
    %1526 = vmatprep.subr.mxu0 0.0
    %1527 = vmatpush1.msra.mxu0 0.0
    %1528 = vmatprep.subr.mxu0 0.0
    %1529 = vmatpush1.msra.mxu0 0.0
    %1530 = vmatprep.subr.mxu0 0.0
    %1531 = vmatpush1.msra.mxu0 0.0
    %1532 = vmatprep.subr.mxu0 0.0
    %1533 = vmatpush1.msra.mxu0 0.0
    %1534 = vmatprep.subr.mxu0 0.0
    %1535 = vmatpush1.msra.mxu0 0.0
    %1536 = vmatprep.subr.mxu0 0.0
    %1537 = vmatpush1.msra.mxu0 0.0
    %1538 = vmatprep.subr.mxu0 0.0
    %1539 = vmatpush1.msra.mxu0 0.0
    %1540 = vmatprep.subr.mxu0 0.0
    %1541 = vmatpush1.msra.mxu0 0.0
    %1542 = vmatprep.subr.mxu0 0.0
    %1543 = vmatpush1.msra.mxu0 0.0
    %1544 = vmatprep.subr.mxu0 0.0
    %1545 = vmatpush1.msra.mxu0 0.0
    %1546 = vmatprep.subr.mxu0 0.0
    %1547 = vmatpush1.msra.mxu0 0.0
    %1548 = vmatprep.subr.mxu0 0.0
    %1549 = vmatpush1.msra.mxu0 0.0
    %1550 = vmatprep.subr.mxu0 0.0
    %1551 = vmatpush1.msra.mxu0 0.0
    %1552 = vmatprep.subr.mxu0 0.0
    %1553 = vmatpush1.msra.mxu0 0.0
    %1554 = vmatprep.subr.mxu0 0.0
    %1555 = vmatpush1.msra.mxu0 0.0
    %1556 = vmatprep.subr.mxu0 0.0
    %1557 = vmatpush1.msra.mxu0 0.0
    %1558 = vmatprep.subr.mxu0 0.0
    %1559 = vmatpush1.msra.mxu0 0.0
    %1560 = vmatprep.subr.mxu0 0.0
    %1561 = vmatpush1.msra.mxu0 0.0
    %1562 = vmatprep.subr.mxu0 0.0
    %1563 = vmatpush1.msra.mxu0 0.0
    %1564 = vmatprep.subr.mxu0 0.0
    %1565 = vmatpush1.msra.mxu0 0.0
    %1566 = vmatprep.subr.mxu0 0.0
    %1567 = vmatpush1.msra.mxu0 0.0
    %1568 = vmatprep.mubr.f32.mxu0 0.0
    %1569 = vmatmul.mubr.f32.gmra.mrb[0].mxu0 %v1499
    %v1570 = vpop.f32.mrb[0].mxu0
    %v1571 = vadd.f32 0.0, %v1570
    %v1572 = vpop.f32.mrb[0].mxu0
    %1573 = vmatprep.mubr.f32.mxu0 0.0
    %1574 = vmatmul.mubr.f32.gmra.mrb[0].mxu0 %v1502
    %v1575 = vpop.f32.mrb[0].mxu0
    %v1576 = vadd.f32 0.0, %v1575
    %v1577 = vpop.f32.mrb[0].mxu0
    %1578 = vdwg.mxu0
    %1579 = vrot.lane.b32.xlu0 %v509, 120
    %v1580 = vpop.permute.xlu0 %1579
    %1581 = vrot.lane.b32.xlu0 %v514, 120
    %v1582 = vpop.permute.xlu0 %1581
    %1583 = vrot.lane.b32.xlu0 %v509, 88
    %v1584 = vpop.permute.xlu0 %1583
    %1585 = vrot.lane.b32.xlu0 %v514, 88
    %v1586 = vpop.permute.xlu0 %1585
    %v1587 = vsel %vm531, %v1580, 0
    %v1589 = vsel %vm531, %v1582, 0
    %v1591 = vsel %vm531, %v1584, 0
    %v1593 = vsel %vm531, %v1586, 0
    %1595 = vmatprep.subr.mxu0 0.0
    %1596 = vmatpush1.xpose.msra.mxu0 %v1591
    %1597 = vmatprep.subr.mxu0 0.0
    %1598 = vmatpush1.xpose.msra.mxu0 %v1593
    %1599 = vmatprep.subr.mxu0 0.0
    %1600 = vmatpush1.xpose.msra.mxu0 0.0
    %1601 = vmatprep.subr.mxu0 0.0
    %1602 = vmatpush1.xpose.msra.mxu0 0.0
    %1603 = vmatprep.subr.mxu0 0.0
    %1604 = vmatpush1.xpose.msra.mxu0 0.0
    %1605 = vmatprep.subr.mxu0 0.0
    %1606 = vmatpush1.xpose.msra.mxu0 0.0
    %1607 = vmatprep.subr.mxu0 0.0
    %1608 = vmatpush1.xpose.msra.mxu0 0.0
    %1609 = vmatprep.subr.mxu0 0.0
    %1610 = vmatpush1.xpose.msra.mxu0 0.0
    %1611 = vmatprep.subr.mxu0 0.0
    %1612 = vmatpush1.xpose.msra.mxu0 0.0
    %1613 = vmatprep.subr.mxu0 0.0
    %1614 = vmatpush1.xpose.msra.mxu0 0.0
    %1615 = vmatprep.subr.mxu0 0.0
    %1616 = vmatpush1.xpose.msra.mxu0 0.0
    %1617 = vmatprep.subr.mxu0 0.0
    %1618 = vmatpush1.xpose.msra.mxu0 0.0
    %1619 = vmatprep.subr.mxu0 0.0
    %1620 = vmatpush1.xpose.msra.mxu0 0.0
    %1621 = vmatprep.subr.mxu0 0.0
    %1622 = vmatpush1.xpose.msra.mxu0 0.0
    %1623 = vmatprep.subr.mxu0 0.0
    %1624 = vmatpush1.xpose.msra.mxu0 0.0
    %1625 = vmatprep.subr.mxu0 0.0
    %1626 = vmatpush1.xpose.msra.mxu0 0.0
    %1627 = vmatprep.subr.mxu0 0.0
    %1628 = vmatpush1.xpose.msra.mxu0 0.0
    %1629 = vmatprep.subr.mxu0 0.0
    %1630 = vmatpush1.xpose.msra.mxu0 0.0
    %1631 = vmatprep.subr.mxu0 0.0
    %1632 = vmatpush1.xpose.msra.mxu0 0.0
    %1633 = vmatprep.subr.mxu0 0.0
    %1634 = vmatpush1.xpose.msra.mxu0 0.0
    %1635 = vmatprep.subr.mxu0 0.0
    %1636 = vmatpush1.xpose.msra.mxu0 0.0
    %1637 = vmatprep.subr.mxu0 0.0
    %1638 = vmatpush1.xpose.msra.mxu0 0.0
    %1639 = vmatprep.subr.mxu0 0.0
    %1640 = vmatpush1.xpose.msra.mxu0 0.0
    %1641 = vmatprep.subr.mxu0 0.0
    %1642 = vmatpush1.xpose.msra.mxu0 0.0
    %1643 = vmatprep.subr.mxu0 0.0
    %1644 = vmatpush1.xpose.msra.mxu0 0.0
    %1645 = vmatprep.subr.mxu0 0.0
    %1646 = vmatpush1.xpose.msra.mxu0 0.0
    %1647 = vmatprep.subr.mxu0 0.0
    %1648 = vmatpush1.xpose.msra.mxu0 0.0
    %1649 = vmatprep.subr.mxu0 0.0
    %1650 = vmatpush1.xpose.msra.mxu0 0.0
    %1651 = vmatprep.subr.mxu0 0.0
    %1652 = vmatpush1.xpose.msra.mxu0 0.0
    %1653 = vmatprep.subr.mxu0 0.0
    %1654 = vmatpush1.xpose.msra.mxu0 0.0
    %1655 = vmatprep.subr.mxu0 0.0
    %1656 = vmatpush1.xpose.msra.mxu0 0.0
    %1657 = vmatprep.subr.mxu0 0.0
    %1658 = vmatpush1.xpose.msra.mxu0 0.0
    %1659 = vmatprep.mubr.f32.mxu0 0.0
    %1660 = vmatmul.mubr.f32.gmra.mrb[0].mxu0 %v1587
    %v1661 = vpop.f32.mrb[0].mxu0
    %v1662 = vadd.f32 0.0, %v1661
    %v1663 = vpop.f32.mrb[0].mxu0
    %1664 = vmatprep.mubr.f32.mxu0 0.0
    %1665 = vmatmul.mubr.f32.gmra.mrb[0].mxu0 %v1589
    %v1666 = vpop.f32.mrb[0].mxu0
    %v1667 = vadd.f32 0.0, %v1666
    %v1668 = vpop.f32.mrb[0].mxu0
    %1669 = vdwg.mxu0
    %v1670 = vmul.f32 %v1662, 0.35355338
    %v1671 = vmul.f32 %v1667, 0.35355338
    %v1672 = vsel %vm1376, -1e+09, %v1670
    %v1673 = vsel %vm1376, -1e+09, %v1671
    %v1674 = vsel %vm619, %v1672, -inf
    %1675 = vmax.xlane.f32.xlu0 %v1674
    %v1676 = vpop.xlane.xlu0 %1675
    %v1677 = vsel %vm619, %v1673, -inf
    %1678 = vmax.xlane.f32.xlu0 %v1677
    %v1679 = vpop.xlane.xlu0 %1678
    %v1680 = vsub.f32 %v1672, %v1676
    %v1681 = vsub.f32 %v1673, %v1679
    %v1682 = vmul.f32 %v1680, 1.442695
    %v1683 = vpow.pop %v1682
    %v1684 = vmul.f32 %v1681, 1.442695
    %v1685 = vpow.pop %v1684
    %v1686 = vsel %vm619, %v1683, 0.0
    %1687 = vadd.xlane.f32.xlu0 %v1686
    %v1688 = vpop.xlane.xlu0 %1687
    %v1689 = vsel %vm619, %v1685, 0.0
    %1690 = vadd.xlane.f32.xlu0 %v1689
    %v1691 = vpop.xlane.xlu0 %1690
    %v1692 = vrcp.pop %v1688
    %v1693 = vmul.f32 %v1683, %v1692
    %v1694 = vrcp.pop %v1691
    %v1695 = vmul.f32 %v1685, %v1694
    %1696 = vrot.lane.b32.xlu0 %v509, 56
    %v1697 = vpop.permute.xlu0 %1696
    %1698 = vrot.lane.b32.xlu0 %v514, 56
    %v1699 = vpop.permute.xlu0 %1698
    %v1703 = vsel %vm619, %v1693, 0
    %v1706 = vsel %vm619, %v1695, 0
    %1708 = vmatprep.subr.mxu0 0.0
    %1709 = vmatpush1.msra.mxu0 %v1697
    %1710 = vmatprep.subr.mxu0 0.0
    %1711 = vmatpush1.msra.mxu0 %v1699
    %1712 = vmatprep.subr.mxu0 0.0
    %1713 = vmatpush1.msra.mxu0 0.0
    %1714 = vmatprep.subr.mxu0 0.0
    %1715 = vmatpush1.msra.mxu0 0.0
    %1716 = vmatprep.subr.mxu0 0.0
    %1717 = vmatpush1.msra.mxu0 0.0
    %1718 = vmatprep.subr.mxu0 0.0
    %1719 = vmatpush1.msra.mxu0 0.0
    %1720 = vmatprep.subr.mxu0 0.0
    %1721 = vmatpush1.msra.mxu0 0.0
    %1722 = vmatprep.subr.mxu0 0.0
    %1723 = vmatpush1.msra.mxu0 0.0
    %1724 = vmatprep.subr.mxu0 0.0
    %1725 = vmatpush1.msra.mxu0 0.0
    %1726 = vmatprep.subr.mxu0 0.0
    %1727 = vmatpush1.msra.mxu0 0.0
    %1728 = vmatprep.subr.mxu0 0.0
    %1729 = vmatpush1.msra.mxu0 0.0
    %1730 = vmatprep.subr.mxu0 0.0
    %1731 = vmatpush1.msra.mxu0 0.0
    %1732 = vmatprep.subr.mxu0 0.0
    %1733 = vmatpush1.msra.mxu0 0.0
    %1734 = vmatprep.subr.mxu0 0.0
    %1735 = vmatpush1.msra.mxu0 0.0
    %1736 = vmatprep.subr.mxu0 0.0
    %1737 = vmatpush1.msra.mxu0 0.0
    %1738 = vmatprep.subr.mxu0 0.0
    %1739 = vmatpush1.msra.mxu0 0.0
    %1740 = vmatprep.subr.mxu0 0.0
    %1741 = vmatpush1.msra.mxu0 0.0
    %1742 = vmatprep.subr.mxu0 0.0
    %1743 = vmatpush1.msra.mxu0 0.0
    %1744 = vmatprep.subr.mxu0 0.0
    %1745 = vmatpush1.msra.mxu0 0.0
    %1746 = vmatprep.subr.mxu0 0.0
    %1747 = vmatpush1.msra.mxu0 0.0
    %1748 = vmatprep.subr.mxu0 0.0
    %1749 = vmatpush1.msra.mxu0 0.0
    %1750 = vmatprep.subr.mxu0 0.0
    %1751 = vmatpush1.msra.mxu0 0.0
    %1752 = vmatprep.subr.mxu0 0.0
    %1753 = vmatpush1.msra.mxu0 0.0
    %1754 = vmatprep.subr.mxu0 0.0
    %1755 = vmatpush1.msra.mxu0 0.0
    %1756 = vmatprep.subr.mxu0 0.0
    %1757 = vmatpush1.msra.mxu0 0.0
    %1758 = vmatprep.subr.mxu0 0.0
    %1759 = vmatpush1.msra.mxu0 0.0
    %1760 = vmatprep.subr.mxu0 0.0
    %1761 = vmatpush1.msra.mxu0 0.0
    %1762 = vmatprep.subr.mxu0 0.0
    %1763 = vmatpush1.msra.mxu0 0.0
    %1764 = vmatprep.subr.mxu0 0.0
    %1765 = vmatpush1.msra.mxu0 0.0
    %1766 = vmatprep.subr.mxu0 0.0
    %1767 = vmatpush1.msra.mxu0 0.0
    %1768 = vmatprep.subr.mxu0 0.0
    %1769 = vmatpush1.msra.mxu0 0.0
    %1770 = vmatprep.subr.mxu0 0.0
    %1771 = vmatpush1.msra.mxu0 0.0
    %1772 = vmatprep.mubr.f32.mxu0 0.0
    %1773 = vmatmul.mubr.f32.gmra.mrb[0].mxu0 %v1703
    %v1774 = vpop.f32.mrb[0].mxu0
    %v1775 = vadd.f32 0.0, %v1774
    %v1776 = vpop.f32.mrb[0].mxu0
    %1777 = vmatprep.mubr.f32.mxu0 0.0
    %1778 = vmatmul.mubr.f32.gmra.mrb[0].mxu0 %v1706
    %v1779 = vpop.f32.mrb[0].mxu0
    %v1780 = vadd.f32 0.0, %v1779
    %v1781 = vpop.f32.mrb[0].mxu0
    %1782 = vdwg.mxu0
    %1783 = vrot.lane.b32.xlu0 %v509, 112
    %v1784 = vpop.permute.xlu0 %1783
    %1785 = vrot.lane.b32.xlu0 %v514, 112
    %v1786 = vpop.permute.xlu0 %1785
    %1787 = vrot.lane.b32.xlu0 %v509, 80
    %v1788 = vpop.permute.xlu0 %1787
    %1789 = vrot.lane.b32.xlu0 %v514, 80
    %v1790 = vpop.permute.xlu0 %1789
    %v1791 = vsel %vm531, %v1784, 0
    %v1793 = vsel %vm531, %v1786, 0
    %v1795 = vsel %vm531, %v1788, 0
    %v1797 = vsel %vm531, %v1790, 0
    %1799 = vmatprep.subr.mxu0 0.0
    %1800 = vmatpush1.xpose.msra.mxu0 %v1795
    %1801 = vmatprep.subr.mxu0 0.0
    %1802 = vmatpush1.xpose.msra.mxu0 %v1797
    %1803 = vmatprep.subr.mxu0 0.0
    %1804 = vmatpush1.xpose.msra.mxu0 0.0
    %1805 = vmatprep.subr.mxu0 0.0
    %1806 = vmatpush1.xpose.msra.mxu0 0.0
    %1807 = vmatprep.subr.mxu0 0.0
    %1808 = vmatpush1.xpose.msra.mxu0 0.0
    %1809 = vmatprep.subr.mxu0 0.0
    %1810 = vmatpush1.xpose.msra.mxu0 0.0
    %1811 = vmatprep.subr.mxu0 0.0
    %1812 = vmatpush1.xpose.msra.mxu0 0.0
    %1813 = vmatprep.subr.mxu0 0.0
    %1814 = vmatpush1.xpose.msra.mxu0 0.0
    %1815 = vmatprep.subr.mxu0 0.0
    %1816 = vmatpush1.xpose.msra.mxu0 0.0
    %1817 = vmatprep.subr.mxu0 0.0
    %1818 = vmatpush1.xpose.msra.mxu0 0.0
    %1819 = vmatprep.subr.mxu0 0.0
    %1820 = vmatpush1.xpose.msra.mxu0 0.0
    %1821 = vmatprep.subr.mxu0 0.0
    %1822 = vmatpush1.xpose.msra.mxu0 0.0
    %1823 = vmatprep.subr.mxu0 0.0
    %1824 = vmatpush1.xpose.msra.mxu0 0.0
    %1825 = vmatprep.subr.mxu0 0.0
    %1826 = vmatpush1.xpose.msra.mxu0 0.0
    %1827 = vmatprep.subr.mxu0 0.0
    %1828 = vmatpush1.xpose.msra.mxu0 0.0
    %1829 = vmatprep.subr.mxu0 0.0
    %1830 = vmatpush1.xpose.msra.mxu0 0.0
    %1831 = vmatprep.subr.mxu0 0.0
    %1832 = vmatpush1.xpose.msra.mxu0 0.0
    %1833 = vmatprep.subr.mxu0 0.0
    %1834 = vmatpush1.xpose.msra.mxu0 0.0
    %1835 = vmatprep.subr.mxu0 0.0
    %1836 = vmatpush1.xpose.msra.mxu0 0.0
    %1837 = vmatprep.subr.mxu0 0.0
    %1838 = vmatpush1.xpose.msra.mxu0 0.0
    %1839 = vmatprep.subr.mxu0 0.0
    %1840 = vmatpush1.xpose.msra.mxu0 0.0
    %1841 = vmatprep.subr.mxu0 0.0
    %1842 = vmatpush1.xpose.msra.mxu0 0.0
    %1843 = vmatprep.subr.mxu0 0.0
    %1844 = vmatpush1.xpose.msra.mxu0 0.0
    %1845 = vmatprep.subr.mxu0 0.0
    %1846 = vmatpush1.xpose.msra.mxu0 0.0
    %1847 = vmatprep.subr.mxu0 0.0
    %1848 = vmatpush1.xpose.msra.mxu0 0.0
    %1849 = vmatprep.subr.mxu0 0.0
    %1850 = vmatpush1.xpose.msra.mxu0 0.0
    %1851 = vmatprep.subr.mxu0 0.0
    %1852 = vmatpush1.xpose.msra.mxu0 0.0
    %1853 = vmatprep.subr.mxu0 0.0
    %1854 = vmatpush1.xpose.msra.mxu0 0.0
    %1855 = vmatprep.subr.mxu0 0.0
    %1856 = vmatpush1.xpose.msra.mxu0 0.0
    %1857 = vmatprep.subr.mxu0 0.0
    %1858 = vmatpush1.xpose.msra.mxu0 0.0
    %1859 = vmatprep.subr.mxu0 0.0
    %1860 = vmatpush1.xpose.msra.mxu0 0.0
    %1861 = vmatprep.subr.mxu0 0.0
    %1862 = vmatpush1.xpose.msra.mxu0 0.0
    %1863 = vmatprep.mubr.f32.mxu0 0.0
    %1864 = vmatmul.mubr.f32.gmra.mrb[0].mxu0 %v1791
    %v1865 = vpop.f32.mrb[0].mxu0
    %v1866 = vadd.f32 0.0, %v1865
    %v1867 = vpop.f32.mrb[0].mxu0
    %1868 = vmatprep.mubr.f32.mxu0 0.0
    %1869 = vmatmul.mubr.f32.gmra.mrb[0].mxu0 %v1793
    %v1870 = vpop.f32.mrb[0].mxu0
    %v1871 = vadd.f32 0.0, %v1870
    %v1872 = vpop.f32.mrb[0].mxu0
    %1873 = vdwg.mxu0
    %v1874 = vmul.f32 %v1866, 0.35355338
    %v1875 = vmul.f32 %v1871, 0.35355338
    %v1876 = vsel %vm1376, -1e+09, %v1874
    %v1877 = vsel %vm1376, -1e+09, %v1875
    %v1878 = vsel %vm619, %v1876, -inf
    %1879 = vmax.xlane.f32.xlu0 %v1878
    %v1880 = vpop.xlane.xlu0 %1879
    %v1881 = vsel %vm619, %v1877, -inf
    %1882 = vmax.xlane.f32.xlu0 %v1881
    %v1883 = vpop.xlane.xlu0 %1882
    %v1884 = vsub.f32 %v1876, %v1880
    %v1885 = vsub.f32 %v1877, %v1883
    %v1886 = vmul.f32 %v1884, 1.442695
    %v1887 = vpow.pop %v1886
    %v1888 = vmul.f32 %v1885, 1.442695
    %v1889 = vpow.pop %v1888
    %v1890 = vsel %vm619, %v1887, 0.0
    %1891 = vadd.xlane.f32.xlu0 %v1890
    %v1892 = vpop.xlane.xlu0 %1891
    %v1893 = vsel %vm619, %v1889, 0.0
    %1894 = vadd.xlane.f32.xlu0 %v1893
    %v1895 = vpop.xlane.xlu0 %1894
    %v1896 = vrcp.pop %v1892
    %v1897 = vmul.f32 %v1887, %v1896
    %v1898 = vrcp.pop %v1895
    %v1899 = vmul.f32 %v1889, %v1898
    %1900 = vrot.lane.b32.xlu0 %v509, 48
    %v1901 = vpop.permute.xlu0 %1900
    %1902 = vrot.lane.b32.xlu0 %v514, 48
    %v1903 = vpop.permute.xlu0 %1902
    %v1907 = vsel %vm619, %v1897, 0
    %v1910 = vsel %vm619, %v1899, 0
    %1912 = vmatprep.subr.mxu0 0.0
    %1913 = vmatpush1.msra.mxu0 %v1901
    %1914 = vmatprep.subr.mxu0 0.0
    %1915 = vmatpush1.msra.mxu0 %v1903
    %1916 = vmatprep.subr.mxu0 0.0
    %1917 = vmatpush1.msra.mxu0 0.0
    %1918 = vmatprep.subr.mxu0 0.0
    %1919 = vmatpush1.msra.mxu0 0.0
    %1920 = vmatprep.subr.mxu0 0.0
    %1921 = vmatpush1.msra.mxu0 0.0
    %1922 = vmatprep.subr.mxu0 0.0
    %1923 = vmatpush1.msra.mxu0 0.0
    %1924 = vmatprep.subr.mxu0 0.0
    %1925 = vmatpush1.msra.mxu0 0.0
    %1926 = vmatprep.subr.mxu0 0.0
    %1927 = vmatpush1.msra.mxu0 0.0
    %1928 = vmatprep.subr.mxu0 0.0
    %1929 = vmatpush1.msra.mxu0 0.0
    %1930 = vmatprep.subr.mxu0 0.0
    %1931 = vmatpush1.msra.mxu0 0.0
    %1932 = vmatprep.subr.mxu0 0.0
    %1933 = vmatpush1.msra.mxu0 0.0
    %1934 = vmatprep.subr.mxu0 0.0
    %1935 = vmatpush1.msra.mxu0 0.0
    %1936 = vmatprep.subr.mxu0 0.0
    %1937 = vmatpush1.msra.mxu0 0.0
    %1938 = vmatprep.subr.mxu0 0.0
    %1939 = vmatpush1.msra.mxu0 0.0
    %1940 = vmatprep.subr.mxu0 0.0
    %1941 = vmatpush1.msra.mxu0 0.0
    %1942 = vmatprep.subr.mxu0 0.0
    %1943 = vmatpush1.msra.mxu0 0.0
    %1944 = vmatprep.subr.mxu0 0.0
    %1945 = vmatpush1.msra.mxu0 0.0
    %1946 = vmatprep.subr.mxu0 0.0
    %1947 = vmatpush1.msra.mxu0 0.0
    %1948 = vmatprep.subr.mxu0 0.0
    %1949 = vmatpush1.msra.mxu0 0.0
    %1950 = vmatprep.subr.mxu0 0.0
    %1951 = vmatpush1.msra.mxu0 0.0
    %1952 = vmatprep.subr.mxu0 0.0
    %1953 = vmatpush1.msra.mxu0 0.0
    %1954 = vmatprep.subr.mxu0 0.0
    %1955 = vmatpush1.msra.mxu0 0.0
    %1956 = vmatprep.subr.mxu0 0.0
    %1957 = vmatpush1.msra.mxu0 0.0
    %1958 = vmatprep.subr.mxu0 0.0
    %1959 = vmatpush1.msra.mxu0 0.0
    %1960 = vmatprep.subr.mxu0 0.0
    %1961 = vmatpush1.msra.mxu0 0.0
    %1962 = vmatprep.subr.mxu0 0.0
    %1963 = vmatpush1.msra.mxu0 0.0
    %1964 = vmatprep.subr.mxu0 0.0
    %1965 = vmatpush1.msra.mxu0 0.0
    %1966 = vmatprep.subr.mxu0 0.0
    %1967 = vmatpush1.msra.mxu0 0.0
    %1968 = vmatprep.subr.mxu0 0.0
    %1969 = vmatpush1.msra.mxu0 0.0
    %1970 = vmatprep.subr.mxu0 0.0
    %1971 = vmatpush1.msra.mxu0 0.0
    %1972 = vmatprep.subr.mxu0 0.0
    %1973 = vmatpush1.msra.mxu0 0.0
    %1974 = vmatprep.subr.mxu0 0.0
    %1975 = vmatpush1.msra.mxu0 0.0
    %1976 = vmatprep.mubr.f32.mxu0 0.0
    %1977 = vmatmul.mubr.f32.gmra.mrb[0].mxu0 %v1907
    %v1978 = vpop.f32.mrb[0].mxu0
    %v1979 = vadd.f32 0.0, %v1978
    %v1980 = vpop.f32.mrb[0].mxu0
    %1981 = vmatprep.mubr.f32.mxu0 0.0
    %1982 = vmatmul.mubr.f32.gmra.mrb[0].mxu0 %v1910
    %v1983 = vpop.f32.mrb[0].mxu0
    %v1984 = vadd.f32 0.0, %v1983
    %v1985 = vpop.f32.mrb[0].mxu0
    %1986 = vdwg.mxu0
    %1987 = vrot.lane.b32.xlu0 %v509, 104
    %v1988 = vpop.permute.xlu0 %1987
    %1989 = vrot.lane.b32.xlu0 %v514, 104
    %v1990 = vpop.permute.xlu0 %1989
    %1991 = vrot.lane.b32.xlu0 %v509, 72
    %v1992 = vpop.permute.xlu0 %1991
    %1993 = vrot.lane.b32.xlu0 %v514, 72
    %v1994 = vpop.permute.xlu0 %1993
    %v1995 = vsel %vm531, %v1988, 0
    %v1997 = vsel %vm531, %v1990, 0
    %v1999 = vsel %vm531, %v1992, 0
    %v2001 = vsel %vm531, %v1994, 0
    %2003 = vmatprep.subr.mxu0 0.0
    %2004 = vmatpush1.xpose.msra.mxu0 %v1999
    %2005 = vmatprep.subr.mxu0 0.0
    %2006 = vmatpush1.xpose.msra.mxu0 %v2001
    %2007 = vmatprep.subr.mxu0 0.0
    %2008 = vmatpush1.xpose.msra.mxu0 0.0
    %2009 = vmatprep.subr.mxu0 0.0
    %2010 = vmatpush1.xpose.msra.mxu0 0.0
    %2011 = vmatprep.subr.mxu0 0.0
    %2012 = vmatpush1.xpose.msra.mxu0 0.0
    %2013 = vmatprep.subr.mxu0 0.0
    %2014 = vmatpush1.xpose.msra.mxu0 0.0
    %2015 = vmatprep.subr.mxu0 0.0
    %2016 = vmatpush1.xpose.msra.mxu0 0.0
    %2017 = vmatprep.subr.mxu0 0.0
    %2018 = vmatpush1.xpose.msra.mxu0 0.0
    %2019 = vmatprep.subr.mxu0 0.0
    %2020 = vmatpush1.xpose.msra.mxu0 0.0
    %2021 = vmatprep.subr.mxu0 0.0
    %2022 = vmatpush1.xpose.msra.mxu0 0.0
    %2023 = vmatprep.subr.mxu0 0.0
    %2024 = vmatpush1.xpose.msra.mxu0 0.0
    %2025 = vmatprep.subr.mxu0 0.0
    %2026 = vmatpush1.xpose.msra.mxu0 0.0
    %2027 = vmatprep.subr.mxu0 0.0
    %2028 = vmatpush1.xpose.msra.mxu0 0.0
    %2029 = vmatprep.subr.mxu0 0.0
    %2030 = vmatpush1.xpose.msra.mxu0 0.0
    %2031 = vmatprep.subr.mxu0 0.0
    %2032 = vmatpush1.xpose.msra.mxu0 0.0
    %2033 = vmatprep.subr.mxu0 0.0
    %2034 = vmatpush1.xpose.msra.mxu0 0.0
    %2035 = vmatprep.subr.mxu0 0.0
    %2036 = vmatpush1.xpose.msra.mxu0 0.0
    %2037 = vmatprep.subr.mxu0 0.0
    %2038 = vmatpush1.xpose.msra.mxu0 0.0
    %2039 = vmatprep.subr.mxu0 0.0
    %2040 = vmatpush1.xpose.msra.mxu0 0.0
    %2041 = vmatprep.subr.mxu0 0.0
    %2042 = vmatpush1.xpose.msra.mxu0 0.0
    %2043 = vmatprep.subr.mxu0 0.0
    %2044 = vmatpush1.xpose.msra.mxu0 0.0
    %2045 = vmatprep.subr.mxu0 0.0
    %2046 = vmatpush1.xpose.msra.mxu0 0.0
    %2047 = vmatprep.subr.mxu0 0.0
    %2048 = vmatpush1.xpose.msra.mxu0 0.0
    %2049 = vmatprep.subr.mxu0 0.0
    %2050 = vmatpush1.xpose.msra.mxu0 0.0
    %2051 = vmatprep.subr.mxu0 0.0
    %2052 = vmatpush1.xpose.msra.mxu0 0.0
    %2053 = vmatprep.subr.mxu0 0.0
    %2054 = vmatpush1.xpose.msra.mxu0 0.0
    %2055 = vmatprep.subr.mxu0 0.0
    %2056 = vmatpush1.xpose.msra.mxu0 0.0
    %2057 = vmatprep.subr.mxu0 0.0
    %2058 = vmatpush1.xpose.msra.mxu0 0.0
    %2059 = vmatprep.subr.mxu0 0.0
    %2060 = vmatpush1.xpose.msra.mxu0 0.0
    %2061 = vmatprep.subr.mxu0 0.0
    %2062 = vmatpush1.xpose.msra.mxu0 0.0
    %2063 = vmatprep.subr.mxu0 0.0
    %2064 = vmatpush1.xpose.msra.mxu0 0.0
    %2065 = vmatprep.subr.mxu0 0.0
    %2066 = vmatpush1.xpose.msra.mxu0 0.0
    %2067 = vmatprep.mubr.f32.mxu0 0.0
    %2068 = vmatmul.mubr.f32.gmra.mrb[0].mxu0 %v1995
    %v2069 = vpop.f32.mrb[0].mxu0
    %v2070 = vadd.f32 0.0, %v2069
    %v2071 = vpop.f32.mrb[0].mxu0
    %2072 = vmatprep.mubr.f32.mxu0 0.0
    %2073 = vmatmul.mubr.f32.gmra.mrb[0].mxu0 %v1997
    %v2074 = vpop.f32.mrb[0].mxu0
    %v2075 = vadd.f32 0.0, %v2074
    %v2076 = vpop.f32.mrb[0].mxu0
    %2077 = vdwg.mxu0
    %v2078 = vmul.f32 %v2070, 0.35355338
    %v2079 = vmul.f32 %v2075, 0.35355338
    %v2080 = vsel %vm1376, -1e+09, %v2078
    %v2081 = vsel %vm1376, -1e+09, %v2079
    %v2082 = vsel %vm619, %v2080, -inf
    %2083 = vmax.xlane.f32.xlu0 %v2082
    %v2084 = vpop.xlane.xlu0 %2083
    %v2085 = vsel %vm619, %v2081, -inf
    %2086 = vmax.xlane.f32.xlu0 %v2085
    %v2087 = vpop.xlane.xlu0 %2086
    %v2088 = vsub.f32 %v2080, %v2084
    %v2089 = vsub.f32 %v2081, %v2087
    %v2090 = vmul.f32 %v2088, 1.442695
    %v2091 = vpow.pop %v2090
    %v2092 = vmul.f32 %v2089, 1.442695
    %v2093 = vpow.pop %v2092
    %v2094 = vsel %vm619, %v2091, 0.0
    %2095 = vadd.xlane.f32.xlu0 %v2094
    %v2096 = vpop.xlane.xlu0 %2095
    %v2097 = vsel %vm619, %v2093, 0.0
    %2098 = vadd.xlane.f32.xlu0 %v2097
    %v2099 = vpop.xlane.xlu0 %2098
    %v2100 = vrcp.pop %v2096
    %v2101 = vmul.f32 %v2091, %v2100
    %v2102 = vrcp.pop %v2099
    %v2103 = vmul.f32 %v2093, %v2102
    %2104 = vrot.lane.b32.xlu0 %v509, 40
    %v2105 = vpop.permute.xlu0 %2104
    %2106 = vrot.lane.b32.xlu0 %v514, 40
    %v2107 = vpop.permute.xlu0 %2106
    %v2111 = vsel %vm619, %v2101, 0
    %v2114 = vsel %vm619, %v2103, 0
    %2116 = vmatprep.subr.mxu0 0.0
    %2117 = vmatpush1.msra.mxu0 %v2105
    %2118 = vmatprep.subr.mxu0 0.0
    %2119 = vmatpush1.msra.mxu0 %v2107
    %2120 = vmatprep.subr.mxu0 0.0
    %2121 = vmatpush1.msra.mxu0 0.0
    %2122 = vmatprep.subr.mxu0 0.0
    %2123 = vmatpush1.msra.mxu0 0.0
    %2124 = vmatprep.subr.mxu0 0.0
    %2125 = vmatpush1.msra.mxu0 0.0
    %2126 = vmatprep.subr.mxu0 0.0
    %2127 = vmatpush1.msra.mxu0 0.0
    %2128 = vmatprep.subr.mxu0 0.0
    %2129 = vmatpush1.msra.mxu0 0.0
    %2130 = vmatprep.subr.mxu0 0.0
    %2131 = vmatpush1.msra.mxu0 0.0
    %2132 = vmatprep.subr.mxu0 0.0
    %2133 = vmatpush1.msra.mxu0 0.0
    %2134 = vmatprep.subr.mxu0 0.0
    %2135 = vmatpush1.msra.mxu0 0.0
    %2136 = vmatprep.subr.mxu0 0.0
    %2137 = vmatpush1.msra.mxu0 0.0
    %2138 = vmatprep.subr.mxu0 0.0
    %2139 = vmatpush1.msra.mxu0 0.0
    %2140 = vmatprep.subr.mxu0 0.0
    %2141 = vmatpush1.msra.mxu0 0.0
    %2142 = vmatprep.subr.mxu0 0.0
    %2143 = vmatpush1.msra.mxu0 0.0
    %2144 = vmatprep.subr.mxu0 0.0
    %2145 = vmatpush1.msra.mxu0 0.0
    %2146 = vmatprep.subr.mxu0 0.0
    %2147 = vmatpush1.msra.mxu0 0.0
    %2148 = vmatprep.subr.mxu0 0.0
    %2149 = vmatpush1.msra.mxu0 0.0
    %2150 = vmatprep.subr.mxu0 0.0
    %2151 = vmatpush1.msra.mxu0 0.0
    %2152 = vmatprep.subr.mxu0 0.0
    %2153 = vmatpush1.msra.mxu0 0.0
    %2154 = vmatprep.subr.mxu0 0.0
    %2155 = vmatpush1.msra.mxu0 0.0
    %2156 = vmatprep.subr.mxu0 0.0
    %2157 = vmatpush1.msra.mxu0 0.0
    %2158 = vmatprep.subr.mxu0 0.0
    %2159 = vmatpush1.msra.mxu0 0.0
    %2160 = vmatprep.subr.mxu0 0.0
    %2161 = vmatpush1.msra.mxu0 0.0
    %2162 = vmatprep.subr.mxu0 0.0
    %2163 = vmatpush1.msra.mxu0 0.0
    %2164 = vmatprep.subr.mxu0 0.0
    %2165 = vmatpush1.msra.mxu0 0.0
    %2166 = vmatprep.subr.mxu0 0.0
    %2167 = vmatpush1.msra.mxu0 0.0
    %2168 = vmatprep.subr.mxu0 0.0
    %2169 = vmatpush1.msra.mxu0 0.0
    %2170 = vmatprep.subr.mxu0 0.0
    %2171 = vmatpush1.msra.mxu0 0.0
    %2172 = vmatprep.subr.mxu0 0.0
    %2173 = vmatpush1.msra.mxu0 0.0
    %2174 = vmatprep.subr.mxu0 0.0
    %2175 = vmatpush1.msra.mxu0 0.0
    %2176 = vmatprep.subr.mxu0 0.0
    %2177 = vmatpush1.msra.mxu0 0.0
    %2178 = vmatprep.subr.mxu0 0.0
    %2179 = vmatpush1.msra.mxu0 0.0
    %2180 = vmatprep.mubr.f32.mxu0 0.0
    %2181 = vmatmul.mubr.f32.gmra.mrb[0].mxu0 %v2111
    %v2182 = vpop.f32.mrb[0].mxu0
    %v2183 = vadd.f32 0.0, %v2182
    %v2184 = vpop.f32.mrb[0].mxu0
    %2185 = vmatprep.mubr.f32.mxu0 0.0
    %2186 = vmatmul.mubr.f32.gmra.mrb[0].mxu0 %v2114
    %v2187 = vpop.f32.mrb[0].mxu0
    %v2188 = vadd.f32 0.0, %v2187
    %v2189 = vpop.f32.mrb[0].mxu0
    %2190 = vdwg.mxu0
    %2193 = vrot.lane.b32.xlu0 %v1775, 8
    %v2194 = vpop.permute.xlu0 %2193
    %2195 = vrot.lane.b32.xlu0 %v1780, 8
    %v2196 = vpop.permute.xlu0 %2195
    %2201 = vrot.lane.b32.xlu0 %v1979, 16
    %v2202 = vpop.permute.xlu0 %2201
    %2203 = vrot.lane.b32.xlu0 %v1984, 16
    %v2204 = vpop.permute.xlu0 %2203
    %2209 = vrot.lane.b32.xlu0 %v2183, 24
    %v2210 = vpop.permute.xlu0 %2209
    %2211 = vrot.lane.b32.xlu0 %v2188, 24
    %v2212 = vpop.permute.xlu0 %2211
    %v2215 = vsel %vm531, %v1571, %v2194
    %v2216 = vsel %vm531, %v1576, %v2196
    %v2217 = vsel %vm619, %v2215, %v2202
    %v2218 = vsel %vm619, %v2216, %v2204
    %v2219 = vsel %vm1369, %v2217, %v2210
    %v2220 = vsel %vm1369, %v2218, %v2212
    %v2221 = vld [vmem:[%s7] sm:$0xff]
    %v2222 = vld [vmem:[%s7 + $0x8] sm:$0xff]
    %v2223 = vld [vmem:[%s7 + $0x10] sm:$0xff]
    %v2224 = vld [vmem:[%s7 + $0x18] sm:$0xff]
    %v2225 = vld [vmem:[%s13 + $0x5] sm:$0x1]
    %v2226 = vlaneseq
    %v2227 = vshrl.u32 %v2226, 7
    %v2228 = vsub.s32 0, %v2227
    %v2229 = vrot.slane %v2225, %v2228
    %v2231 = vsel %vm84, %v1370, 0
    %v2234 = vsel %vm84, %v1371, 0
    %v2237 = vsel %vm84, %v2219, 0
    %v2240 = vsel %vm84, %v2220, 0
    %2242 = vmatprep.subr.mxu0 0.0
    %2243 = vmatpush1.msra.mxu0 %v2221
    %2244 = vmatprep.subr.mxu0 0.0
    %2245 = vmatpush1.msra.mxu0 %v2222
    %2246 = vmatprep.subr.mxu0 0.0
    %2247 = vmatpush1.msra.mxu0 %v2223
    %2248 = vmatprep.subr.mxu0 0.0
    %2249 = vmatpush1.msra.mxu0 %v2224
    %2250 = vmatprep.subr.mxu0 0.0
    %2251 = vmatpush1.msra.mxu0 0.0
    %2252 = vmatprep.subr.mxu0 0.0
    %2253 = vmatpush1.msra.mxu0 0.0
    %2254 = vmatprep.subr.mxu0 0.0
    %2255 = vmatpush1.msra.mxu0 0.0
    %2256 = vmatprep.subr.mxu0 0.0
    %2257 = vmatpush1.msra.mxu0 0.0
    %2258 = vmatprep.subr.mxu0 0.0
    %2259 = vmatpush1.msra.mxu0 0.0
    %2260 = vmatprep.subr.mxu0 0.0
    %2261 = vmatpush1.msra.mxu0 0.0
    %2262 = vmatprep.subr.mxu0 0.0
    %2263 = vmatpush1.msra.mxu0 0.0
    %2264 = vmatprep.subr.mxu0 0.0
    %2265 = vmatpush1.msra.mxu0 0.0
    %2266 = vmatprep.subr.mxu0 0.0
    %2267 = vmatpush1.msra.mxu0 0.0
    %2268 = vmatprep.subr.mxu0 0.0
    %2269 = vmatpush1.msra.mxu0 0.0
    %2270 = vmatprep.subr.mxu0 0.0
    %2271 = vmatpush1.msra.mxu0 0.0
    %2272 = vmatprep.subr.mxu0 0.0
    %2273 = vmatpush1.msra.mxu0 0.0
    %2274 = vmatprep.subr.mxu0 0.0
    %2275 = vmatpush1.msra.mxu0 0.0
    %2276 = vmatprep.subr.mxu0 0.0
    %2277 = vmatpush1.msra.mxu0 0.0
    %2278 = vmatprep.subr.mxu0 0.0
    %2279 = vmatpush1.msra.mxu0 0.0
    %2280 = vmatprep.subr.mxu0 0.0
    %2281 = vmatpush1.msra.mxu0 0.0
    %2282 = vmatprep.subr.mxu0 0.0
    %2283 = vmatpush1.msra.mxu0 0.0
    %2284 = vmatprep.subr.mxu0 0.0
    %2285 = vmatpush1.msra.mxu0 0.0
    %2286 = vmatprep.subr.mxu0 0.0
    %2287 = vmatpush1.msra.mxu0 0.0
    %2288 = vmatprep.subr.mxu0 0.0
    %2289 = vmatpush1.msra.mxu0 0.0
    %2290 = vmatprep.subr.mxu0 0.0
    %2291 = vmatpush1.msra.mxu0 0.0
    %2292 = vmatprep.subr.mxu0 0.0
    %2293 = vmatpush1.msra.mxu0 0.0
    %2294 = vmatprep.subr.mxu0 0.0
    %2295 = vmatpush1.msra.mxu0 0.0
    %2296 = vmatprep.subr.mxu0 0.0
    %2297 = vmatpush1.msra.mxu0 0.0
    %2298 = vmatprep.subr.mxu0 0.0
    %2299 = vmatpush1.msra.mxu0 0.0
    %2300 = vmatprep.subr.mxu0 0.0
    %2301 = vmatpush1.msra.mxu0 0.0
    %2302 = vmatprep.subr.mxu0 0.0
    %2303 = vmatpush1.msra.mxu0 0.0
    %2304 = vmatprep.subr.mxu0 0.0
    %2305 = vmatpush1.msra.mxu0 0.0
    %2306 = vmatprep.mubr.f32.mxu0 0.0
    %2307 = vmatmul.mubr.f32.gmra.mrb[0].mxu0 %v2231
    %v2308 = vpop.f32.mrb[0].mxu0
    %v2309 = vadd.f32 %v2229, %v2308
    %v2310 = vpop.f32.mrb[0].mxu0
    %2311 = vmatprep.mubr.f32.mxu0 0.0
    %2312 = vmatmul.mubr.f32.gmra.mrb[0].mxu0 %v2234
    %v2313 = vpop.f32.mrb[0].mxu0
    %v2314 = vadd.f32 %v2229, %v2313
    %v2315 = vpop.f32.mrb[0].mxu0
    %2316 = vmatprep.mubr.f32.mxu0 0.0
    %2317 = vmatmul.mubr.f32.gmra.mrb[0].mxu0 %v2237
    %v2318 = vpop.f32.mrb[0].mxu0
    %v2319 = vadd.f32 %v2229, %v2318
    %v2320 = vpop.f32.mrb[0].mxu0
    %2321 = vmatprep.mubr.f32.mxu0 0.0
    %2322 = vmatmul.mubr.f32.gmra.mrb[0].mxu0 %v2240
    %v2323 = vpop.f32.mrb[0].mxu0
    %v2324 = vadd.f32 %v2229, %v2323
    %v2325 = vpop.f32.mrb[0].mxu0
    %2326 = vdwg.mxu0
    %v2327 = vadd.f32 %v2309, %v404
    %v2328 = vadd.f32 %v2314, %v405
    %v2329 = vadd.f32 %v2319, %v406
    %v2330 = vadd.f32 %v2324, %v407
    %v2331 = vld [vmem:[%s13 + $0x6] sm:$0x1]
    %v2332 = vld [vmem:[%s13 + $0x7] sm:$0x1]
    %v2333 = vsel %vm419, %v2327, 0.0
    %2334 = vadd.xlane.f32.xlu0 %v2333
    %v2335 = vpop.xlane.xlu0 %2334
    %v2336 = vsel %vm419, %v2328, 0.0
    %2337 = vadd.xlane.f32.xlu0 %v2336
    %v2338 = vpop.xlane.xlu0 %2337
    %v2339 = vsel %vm419, %v2329, 0.0
    %2340 = vadd.xlane.f32.xlu0 %v2339
    %v2341 = vpop.xlane.xlu0 %2340
    %v2342 = vsel %vm419, %v2330, 0.0
    %2343 = vadd.xlane.f32.xlu0 %v2342
    %v2344 = vpop.xlane.xlu0 %2343
    %v2345 = vrcp.pop 48.0
    %v2346 = vmul.f32 %v2335, %v2345
    %v2347 = vmul.f32 %v2338, %v2345
    %v2348 = vmul.f32 %v2341, %v2345
    %v2349 = vmul.f32 %v2344, %v2345
    %v2350 = vsub.f32 %v2327, %v2346
    %v2351 = vsub.f32 %v2328, %v2347
    %v2352 = vsub.f32 %v2329, %v2348
    %v2353 = vsub.f32 %v2330, %v2349
    %v2354 = vmul.f32 %v2350, %v2350
    %v2355 = vmul.f32 %v2351, %v2351
    %v2356 = vmul.f32 %v2352, %v2352
    %v2357 = vmul.f32 %v2353, %v2353
    %v2358 = vsel %vm419, %v2354, 0.0
    %2359 = vadd.xlane.f32.xlu0 %v2358
    %v2360 = vpop.xlane.xlu0 %2359
    %v2361 = vsel %vm419, %v2355, 0.0
    %2362 = vadd.xlane.f32.xlu0 %v2361
    %v2363 = vpop.xlane.xlu0 %2362
    %v2364 = vsel %vm419, %v2356, 0.0
    %2365 = vadd.xlane.f32.xlu0 %v2364
    %v2366 = vpop.xlane.xlu0 %2365
    %v2367 = vsel %vm419, %v2357, 0.0
    %2368 = vadd.xlane.f32.xlu0 %v2367
    %v2369 = vpop.xlane.xlu0 %2368
    %v2370 = vmul.f32 %v2360, %v2345
    %v2371 = vmul.f32 %v2363, %v2345
    %v2372 = vmul.f32 %v2366, %v2345
    %v2373 = vmul.f32 %v2369, %v2345
    %v2374 = vadd.f32 %v2370, 1e-05
    %v2375 = vadd.f32 %v2371, 1e-05
    %v2376 = vadd.f32 %v2372, 1e-05
    %v2377 = vadd.f32 %v2373, 1e-05
    %v2378 = vrsqrt.pop %v2374
    %v2379 = vrsqrt.pop %v2375
    %v2380 = vrsqrt.pop %v2376
    %v2381 = vrsqrt.pop %v2377
    %v2382 = vmul.f32 %v2350, %v2378
    %v2383 = vmul.f32 %v2351, %v2379
    %v2384 = vmul.f32 %v2352, %v2380
    %v2385 = vmul.f32 %v2353, %v2381
    %v2386 = vlaneseq
    %v2387 = vshrl.u32 %v2386, 7
    %v2388 = vsub.s32 0, %v2387
    %v2389 = vrot.slane %v2331, %v2388
    %v2390 = vmul.f32 %v2382, %v2389
    %v2391 = vmul.f32 %v2383, %v2389
    %v2392 = vmul.f32 %v2384, %v2389
    %v2393 = vmul.f32 %v2385, %v2389
    %v2394 = vlaneseq
    %v2395 = vshrl.u32 %v2394, 7
    %v2396 = vsub.s32 0, %v2395
    %v2397 = vrot.slane %v2332, %v2396
    %v2398 = vadd.f32 %v2390, %v2397
    %v2399 = vadd.f32 %v2391, %v2397
    %v2400 = vadd.f32 %v2392, %v2397
    %v2401 = vadd.f32 %v2393, %v2397
    %v2402 = vld [vmem:[%s8] sm:$0xff]
    %v2403 = vld [vmem:[%s8 + $0x8] sm:$0xff]
    %v2404 = vld [vmem:[%s8 + $0x10] sm:$0xff]
    %v2405 = vld [vmem:[%s8 + $0x18] sm:$0xff]
    %v2406 = vld [vmem:[%s8 + $0x20] sm:$0xff]
    %v2407 = vld [vmem:[%s8 + $0x28] sm:$0xff]
    %v2408 = vld [vmem:[%s13 + $0x8] sm:$0x1]
    %v2409 = vlaneseq
    %v2410 = vshrl.u32 %v2409, 7
    %v2411 = vsub.s32 0, %v2410
    %v2412 = vrot.slane %v2408, %v2411
    %v2414 = vsel %vm419, %v2398, 0
    %v2417 = vsel %vm419, %v2399, 0
    %v2420 = vsel %vm419, %v2400, 0
    %v2423 = vsel %vm419, %v2401, 0
    %2425 = vmatprep.subr.mxu0 0.0
    %2426 = vmatpush1.msra.mxu0 %v2402
    %2427 = vmatprep.subr.mxu0 0.0
    %2428 = vmatpush1.msra.mxu0 %v2403
    %2429 = vmatprep.subr.mxu0 0.0
    %2430 = vmatpush1.msra.mxu0 %v2404
    %2431 = vmatprep.subr.mxu0 0.0
    %2432 = vmatpush1.msra.mxu0 %v2405
    %2433 = vmatprep.subr.mxu0 0.0
    %2434 = vmatpush1.msra.mxu0 %v2406
    %2435 = vmatprep.subr.mxu0 0.0
    %2436 = vmatpush1.msra.mxu0 %v2407
    %2437 = vmatprep.subr.mxu0 0.0
    %2438 = vmatpush1.msra.mxu0 0.0
    %2439 = vmatprep.subr.mxu0 0.0
    %2440 = vmatpush1.msra.mxu0 0.0
    %2441 = vmatprep.subr.mxu0 0.0
    %2442 = vmatpush1.msra.mxu0 0.0
    %2443 = vmatprep.subr.mxu0 0.0
    %2444 = vmatpush1.msra.mxu0 0.0
    %2445 = vmatprep.subr.mxu0 0.0
    %2446 = vmatpush1.msra.mxu0 0.0
    %2447 = vmatprep.subr.mxu0 0.0
    %2448 = vmatpush1.msra.mxu0 0.0
    %2449 = vmatprep.subr.mxu0 0.0
    %2450 = vmatpush1.msra.mxu0 0.0
    %2451 = vmatprep.subr.mxu0 0.0
    %2452 = vmatpush1.msra.mxu0 0.0
    %2453 = vmatprep.subr.mxu0 0.0
    %2454 = vmatpush1.msra.mxu0 0.0
    %2455 = vmatprep.subr.mxu0 0.0
    %2456 = vmatpush1.msra.mxu0 0.0
    %2457 = vmatprep.subr.mxu0 0.0
    %2458 = vmatpush1.msra.mxu0 0.0
    %2459 = vmatprep.subr.mxu0 0.0
    %2460 = vmatpush1.msra.mxu0 0.0
    %2461 = vmatprep.subr.mxu0 0.0
    %2462 = vmatpush1.msra.mxu0 0.0
    %2463 = vmatprep.subr.mxu0 0.0
    %2464 = vmatpush1.msra.mxu0 0.0
    %2465 = vmatprep.subr.mxu0 0.0
    %2466 = vmatpush1.msra.mxu0 0.0
    %2467 = vmatprep.subr.mxu0 0.0
    %2468 = vmatpush1.msra.mxu0 0.0
    %2469 = vmatprep.subr.mxu0 0.0
    %2470 = vmatpush1.msra.mxu0 0.0
    %2471 = vmatprep.subr.mxu0 0.0
    %2472 = vmatpush1.msra.mxu0 0.0
    %2473 = vmatprep.subr.mxu0 0.0
    %2474 = vmatpush1.msra.mxu0 0.0
    %2475 = vmatprep.subr.mxu0 0.0
    %2476 = vmatpush1.msra.mxu0 0.0
    %2477 = vmatprep.subr.mxu0 0.0
    %2478 = vmatpush1.msra.mxu0 0.0
    %2479 = vmatprep.subr.mxu0 0.0
    %2480 = vmatpush1.msra.mxu0 0.0
    %2481 = vmatprep.subr.mxu0 0.0
    %2482 = vmatpush1.msra.mxu0 0.0
    %2483 = vmatprep.subr.mxu0 0.0
    %2484 = vmatpush1.msra.mxu0 0.0
    %2485 = vmatprep.subr.mxu0 0.0
    %2486 = vmatpush1.msra.mxu0 0.0
    %2487 = vmatprep.subr.mxu0 0.0
    %2488 = vmatpush1.msra.mxu0 0.0
    %2489 = vmatprep.mubr.f32.mxu0 0.0
    %2490 = vmatmul.mubr.f32.gmra.mrb[0].mxu0 %v2414
    %v2491 = vpop.f32.mrb[0].mxu0
    %v2492 = vadd.f32 %v2412, %v2491
    %v2493 = vpop.f32.mrb[0].mxu0
    %2494 = vmatprep.mubr.f32.mxu0 0.0
    %2495 = vmatmul.mubr.f32.gmra.mrb[0].mxu0 %v2417
    %v2496 = vpop.f32.mrb[0].mxu0
    %v2497 = vadd.f32 %v2412, %v2496
    %v2498 = vpop.f32.mrb[0].mxu0
    %2499 = vmatprep.mubr.f32.mxu0 0.0
    %2500 = vmatmul.mubr.f32.gmra.mrb[0].mxu0 %v2420
    %v2501 = vpop.f32.mrb[0].mxu0
    %v2502 = vadd.f32 %v2412, %v2501
    %v2503 = vpop.f32.mrb[0].mxu0
    %2504 = vmatprep.mubr.f32.mxu0 0.0
    %2505 = vmatmul.mubr.f32.gmra.mrb[0].mxu0 %v2423
    %v2506 = vpop.f32.mrb[0].mxu0
    %v2507 = vadd.f32 %v2412, %v2506
    %v2508 = vpop.f32.mrb[0].mxu0
    %2509 = vdwg.mxu0
    %v2510 = vmax.f32 %v2492, 0.0
    %v2511 = vmax.f32 %v2497, 0.0
    %v2512 = vmax.f32 %v2502, 0.0
    %v2513 = vmax.f32 %v2507, 0.0
    %v2514 = vld [vmem:[%s9] sm:$0xff]
    %v2515 = vld [vmem:[%s9 + $0x8] sm:$0xff]
    %v2516 = vld [vmem:[%s9 + $0x10] sm:$0xff]
    %v2517 = vld [vmem:[%s9 + $0x18] sm:$0xff]
    %v2518 = vld [vmem:[%s9 + $0x20] sm:$0xff]
    %v2519 = vld [vmem:[%s9 + $0x28] sm:$0xff]
    %v2520 = vld [vmem:[%s9 + $0x30] sm:$0xff]
    %v2521 = vld [vmem:[%s9 + $0x38] sm:$0xff]
    %v2522 = vld [vmem:[%s13 + $0x9] sm:$0x1]
    %v2523 = vlaneseq
    %v2524 = vshrl.u32 %v2523, 7
    %v2525 = vsub.s32 0, %v2524
    %v2526 = vrot.slane %v2522, %v2525
    %vm2527 = vcmask 523264
    %v2529 = vsel %vm2527, %v2510, 0
    %v2532 = vsel %vm2527, %v2511, 0
    %v2535 = vsel %vm2527, %v2512, 0
    %v2538 = vsel %vm2527, %v2513, 0
    %2540 = vmatprep.subr.mxu0 0.0
    %2541 = vmatpush1.msra.mxu0 %v2514
    %2542 = vmatprep.subr.mxu0 0.0
    %2543 = vmatpush1.msra.mxu0 %v2515
    %2544 = vmatprep.subr.mxu0 0.0
    %2545 = vmatpush1.msra.mxu0 %v2516
    %2546 = vmatprep.subr.mxu0 0.0
    %2547 = vmatpush1.msra.mxu0 %v2517
    %2548 = vmatprep.subr.mxu0 0.0
    %2549 = vmatpush1.msra.mxu0 %v2518
    %2550 = vmatprep.subr.mxu0 0.0
    %2551 = vmatpush1.msra.mxu0 %v2519
    %2552 = vmatprep.subr.mxu0 0.0
    %2553 = vmatpush1.msra.mxu0 %v2520
    %2554 = vmatprep.subr.mxu0 0.0
    %2555 = vmatpush1.msra.mxu0 %v2521
    %2556 = vmatprep.subr.mxu0 0.0
    %2557 = vmatpush1.msra.mxu0 0.0
    %2558 = vmatprep.subr.mxu0 0.0
    %2559 = vmatpush1.msra.mxu0 0.0
    %2560 = vmatprep.subr.mxu0 0.0
    %2561 = vmatpush1.msra.mxu0 0.0
    %2562 = vmatprep.subr.mxu0 0.0
    %2563 = vmatpush1.msra.mxu0 0.0
    %2564 = vmatprep.subr.mxu0 0.0
    %2565 = vmatpush1.msra.mxu0 0.0
    %2566 = vmatprep.subr.mxu0 0.0
    %2567 = vmatpush1.msra.mxu0 0.0
    %2568 = vmatprep.subr.mxu0 0.0
    %2569 = vmatpush1.msra.mxu0 0.0
    %2570 = vmatprep.subr.mxu0 0.0
    %2571 = vmatpush1.msra.mxu0 0.0
    %2572 = vmatprep.subr.mxu0 0.0
    %2573 = vmatpush1.msra.mxu0 0.0
    %2574 = vmatprep.subr.mxu0 0.0
    %2575 = vmatpush1.msra.mxu0 0.0
    %2576 = vmatprep.subr.mxu0 0.0
    %2577 = vmatpush1.msra.mxu0 0.0
    %2578 = vmatprep.subr.mxu0 0.0
    %2579 = vmatpush1.msra.mxu0 0.0
    %2580 = vmatprep.subr.mxu0 0.0
    %2581 = vmatpush1.msra.mxu0 0.0
    %2582 = vmatprep.subr.mxu0 0.0
    %2583 = vmatpush1.msra.mxu0 0.0
    %2584 = vmatprep.subr.mxu0 0.0
    %2585 = vmatpush1.msra.mxu0 0.0
    %2586 = vmatprep.subr.mxu0 0.0
    %2587 = vmatpush1.msra.mxu0 0.0
    %2588 = vmatprep.subr.mxu0 0.0
    %2589 = vmatpush1.msra.mxu0 0.0
    %2590 = vmatprep.subr.mxu0 0.0
    %2591 = vmatpush1.msra.mxu0 0.0
    %2592 = vmatprep.subr.mxu0 0.0
    %2593 = vmatpush1.msra.mxu0 0.0
    %2594 = vmatprep.subr.mxu0 0.0
    %2595 = vmatpush1.msra.mxu0 0.0
    %2596 = vmatprep.subr.mxu0 0.0
    %2597 = vmatpush1.msra.mxu0 0.0
    %2598 = vmatprep.subr.mxu0 0.0
    %2599 = vmatpush1.msra.mxu0 0.0
    %2600 = vmatprep.subr.mxu0 0.0
    %2601 = vmatpush1.msra.mxu0 0.0
    %2602 = vmatprep.subr.mxu0 0.0
    %2603 = vmatpush1.msra.mxu0 0.0
    %2604 = vmatprep.mubr.f32.mxu0 0.0
    %2605 = vmatmul.mubr.f32.gmra.mrb[0].mxu0 %v2529
    %v2606 = vpop.f32.mrb[0].mxu0
    %v2607 = vadd.f32 %v2526, %v2606
    %v2608 = vpop.f32.mrb[0].mxu0
    %2609 = vmatprep.mubr.f32.mxu0 0.0
    %2610 = vmatmul.mubr.f32.gmra.mrb[0].mxu0 %v2532
    %v2611 = vpop.f32.mrb[0].mxu0
    %v2612 = vpop.f32.mrb[0].mxu0
    %2613 = vmatprep.mubr.f32.mxu0 0.0
    %2614 = vmatmul.mubr.f32.gmra.mrb[0].mxu0 %v2535
    %v2615 = vpop.f32.mrb[0].mxu0
    %v2616 = vadd.f32 %v2526, %v2615
    %v2617 = vpop.f32.mrb[0].mxu0
    %2618 = vmatprep.mubr.f32.mxu0 0.0
    %2619 = vmatmul.mubr.f32.gmra.mrb[0].mxu0 %v2538
    %v2620 = vpop.f32.mrb[0].mxu0
    %v2621 = vpop.f32.mrb[0].mxu0
    %2622 = vdwg.mxu0
    %v2623 = vld [vmem:[%s10] sm:$0xff]
    %v2624 = vld [vmem:[%s10 + $0x8] sm:$0xff]
    %v2625 = vld [vmem:[%s10 + $0x10] sm:$0xff]
    %v2626 = vld [vmem:[%s10 + $0x18] sm:$0xff]
    %v2627 = vld [vmem:[%s10 + $0x20] sm:$0xff]
    %v2628 = vld [vmem:[%s10 + $0x28] sm:$0xff]
    %v2629 = vld [vmem:[%s10 + $0x30] sm:$0xff]
    %v2630 = vld [vmem:[%s10 + $0x38] sm:$0xff]
    %v2631 = vld [vmem:[%s10 + $0x40] sm:$0xff]
    %v2632 = vld [vmem:[%s10 + $0x48] sm:$0xff]
    %v2633 = vld [vmem:[%s10 + $0x50] sm:$0xff]
    %v2634 = vld [vmem:[%s10 + $0x58] sm:$0xff]
    %v2635 = vld [vmem:[%s10 + $0x60] sm:$0xff]
    %v2636 = vld [vmem:[%s10 + $0x68] sm:$0xff]
    %v2637 = vld [vmem:[%s10 + $0x70] sm:$0xff]
    %v2638 = vld [vmem:[%s10 + $0x78] sm:$0xff]
    %v2639 = vld [vmem:[%s10 + $0x80] sm:$0xff]
    %v2640 = vld [vmem:[%s10 + $0x88] sm:$0xff]
    %v2641 = vld [vmem:[%s10 + $0x90] sm:$0xff]
    %v2642 = vld [vmem:[%s10 + $0x98] sm:$0xff]
    %v2643 = vld [vmem:[%s10 + $0xa0] sm:$0xff]
    %v2644 = vld [vmem:[%s10 + $0xa8] sm:$0xff]
    %v2645 = vld [vmem:[%s10 + $0xb0] sm:$0xff]
    %v2646 = vld [vmem:[%s10 + $0xb8] sm:$0xff]
    %v2647 = vld [vmem:[%s10 + $0xc0] sm:$0xff]
    %v2648 = vld [vmem:[%s10 + $0xc8] sm:$0xff]
    %v2649 = vld [vmem:[%s10 + $0xd0] sm:$0xff]
    %v2650 = vld [vmem:[%s10 + $0xd8] sm:$0xff]
    %v2651 = vld [vmem:[%s10 + $0xe0] sm:$0xff]
    %v2652 = vld [vmem:[%s10 + $0xe8] sm:$0xff]
    %v2653 = vld [vmem:[%s10 + $0xf0] sm:$0xff]
    %v2654 = vld [vmem:[%s10 + $0xf8] sm:$0xff]
    %v2655 = vld [vmem:[%s10 + $0x100] sm:$0xff]
    %v2656 = vld [vmem:[%s10 + $0x108] sm:$0xff]
    %v2657 = vld [vmem:[%s10 + $0x110] sm:$0xff]
    %v2658 = vld [vmem:[%s10 + $0x118] sm:$0xff]
    %v2659 = vld [vmem:[%s10 + $0x120] sm:$0xff]
    %v2660 = vld [vmem:[%s10 + $0x128] sm:$0xff]
    %v2661 = vld [vmem:[%s10 + $0x130] sm:$0xff]
    %v2662 = vld [vmem:[%s10 + $0x138] sm:$0xff]
    %v2663 = vld [vmem:[%s10 + $0x140] sm:$0xff]
    %v2664 = vld [vmem:[%s10 + $0x148] sm:$0xff]
    %v2665 = vld [vmem:[%s10 + $0x150] sm:$0xff]
    %v2666 = vld [vmem:[%s10 + $0x158] sm:$0xff]
    %v2667 = vld [vmem:[%s10 + $0x160] sm:$0xff]
    %v2668 = vld [vmem:[%s10 + $0x168] sm:$0xff]
    %v2669 = vld [vmem:[%s10 + $0x170] sm:$0xff]
    %v2670 = vld [vmem:[%s10 + $0x178] sm:$0xff]
    %v2671 = vld [vmem:[%s10 + $0x180] sm:$0xff]
    %v2672 = vld [vmem:[%s10 + $0x188] sm:$0xff]
    %v2673 = vld [vmem:[%s10 + $0x190] sm:$0xff]
    %v2674 = vld [vmem:[%s10 + $0x198] sm:$0xff]
    %v2675 = vld [vmem:[%s10 + $0x1a0] sm:$0xff]
    %v2676 = vld [vmem:[%s10 + $0x1a8] sm:$0xff]
    %v2677 = vld [vmem:[%s10 + $0x1b0] sm:$0xff]
    %v2678 = vld [vmem:[%s10 + $0x1b8] sm:$0xff]
    %v2679 = vld [vmem:[%s10 + $0x1c0] sm:$0xff]
    %v2680 = vld [vmem:[%s10 + $0x1c8] sm:$0xff]
    %v2681 = vld [vmem:[%s10 + $0x1d0] sm:$0xff]
    %v2682 = vld [vmem:[%s10 + $0x1d8] sm:$0xff]
    %vm2683 = vcmask 1041408
    %v2684 = vrot.slane %v404, 6
    %v2685 = vrot.slane %v405, 6
    %v2686 = vsel %vm2683, %v2684, %v2685
    %v2690 = vsel %vm2683, 0.0, %v2684
    %v2691 = vsel %vm2683, %v2685, 0.0
    %vm2694 = vcmask 1046528
    %v2695 = vrot.slane %v2690, 1
    %v2696 = vrot.slane %v2686, 1
    %v2697 = vsel %vm2694, %v2695, %v2696
    %v2698 = vrot.slane %v2691, 1
    %v2699 = vsel %vm2694, %v2696, %v2698
    %2700 = vrot.lane.b32.xlu0 %v2697, 48
    %v2701 = vpop.permute.xlu0 %2700
    %2702 = vrot.lane.b32.xlu0 %v2699, 48
    %v2703 = vpop.permute.xlu0 %2702
    %vm2706 = vcmask 1045504
    %v2707 = vrot.slane %v2690, 2
    %v2708 = vrot.slane %v2686, 2
    %v2709 = vsel %vm2706, %v2707, %v2708
    %v2710 = vrot.slane %v2691, 2
    %v2711 = vsel %vm2706, %v2708, %v2710
    %2712 = vrot.lane.b32.xlu0 %v2709, 96
    %v2713 = vpop.permute.xlu0 %2712
    %2714 = vrot.lane.b32.xlu0 %v2711, 96
    %v2715 = vpop.permute.xlu0 %2714
    %vm2718 = vcmask 1044480
    %v2719 = vrot.slane %v2690, 3
    %v2720 = vrot.slane %v2686, 3
    %v2721 = vsel %vm2718, %v2719, %v2720
    %v2722 = vrot.slane %v2691, 3
    %v2723 = vsel %vm2718, %v2720, %v2722
    %2724 = vrot.lane.b32.xlu0 %v2721, 16
    %v2725 = vpop.permute.xlu0 %2724
    %2726 = vrot.lane.b32.xlu0 %v2723, 16
    %v2727 = vpop.permute.xlu0 %2726
    %v2730 = vrot.slane %v2690, 4
    %v2731 = vrot.slane %v2686, 4
    %v2732 = vsel %vm216, %v2730, %v2731
    %v2733 = vrot.slane %v2691, 4
    %v2734 = vsel %vm216, %v2731, %v2733
    %2735 = vrot.lane.b32.xlu0 %v2732, 64
    %v2736 = vpop.permute.xlu0 %2735
    %2737 = vrot.lane.b32.xlu0 %v2734, 64
    %v2738 = vpop.permute.xlu0 %2737
    %v2741 = vsel %vm419, %v2690, %v2701
    %v2742 = vsel %vm419, %v2686, %v2703
    %vm2743 = vcmask 785408
    %v2744 = vsel %vm2743, %v2741, %v2713
    %v2745 = vsel %vm2743, %v2742, %v2715
    %v2746 = vsel %vm619, %v2713, %v2725
    %v2747 = vsel %vm619, %v2715, %v2727
    %v2748 = vsel %vm2527, %v2746, %v2736
    %v2749 = vsel %vm2527, %v2747, %v2738
    %v2750 = vrot.slane %v406, 6
    %v2751 = vrot.slane %v407, 6
    %v2752 = vsel %vm2683, %v2750, %v2751
    %v2756 = vsel %vm2683, 0.0, %v2750
    %v2757 = vsel %vm2683, %v2751, 0.0
    %v2760 = vrot.slane %v2756, 1
    %v2761 = vrot.slane %v2752, 1
    %v2762 = vsel %vm2694, %v2760, %v2761
    %v2763 = vrot.slane %v2757, 1
    %v2764 = vsel %vm2694, %v2761, %v2763
    %2765 = vrot.lane.b32.xlu0 %v2762, 48
    %v2766 = vpop.permute.xlu0 %2765
    %2767 = vrot.lane.b32.xlu0 %v2764, 48
    %v2768 = vpop.permute.xlu0 %2767
    %v2771 = vrot.slane %v2756, 2
    %v2772 = vrot.slane %v2752, 2
    %v2773 = vsel %vm2706, %v2771, %v2772
    %v2774 = vrot.slane %v2757, 2
    %v2775 = vsel %vm2706, %v2772, %v2774
    %2776 = vrot.lane.b32.xlu0 %v2773, 96
    %v2777 = vpop.permute.xlu0 %2776
    %2778 = vrot.lane.b32.xlu0 %v2775, 96
    %v2779 = vpop.permute.xlu0 %2778
    %v2782 = vrot.slane %v2756, 3
    %v2783 = vrot.slane %v2752, 3
    %v2784 = vsel %vm2718, %v2782, %v2783
    %v2785 = vrot.slane %v2757, 3
    %v2786 = vsel %vm2718, %v2783, %v2785
    %2787 = vrot.lane.b32.xlu0 %v2784, 16
    %v2788 = vpop.permute.xlu0 %2787
    %2789 = vrot.lane.b32.xlu0 %v2786, 16
    %v2790 = vpop.permute.xlu0 %2789
    %v2793 = vrot.slane %v2756, 4
    %v2794 = vrot.slane %v2752, 4
    %v2795 = vsel %vm216, %v2793, %v2794
    %v2796 = vrot.slane %v2757, 4
    %v2797 = vsel %vm216, %v2794, %v2796
    %2798 = vrot.lane.b32.xlu0 %v2795, 64
    %v2799 = vpop.permute.xlu0 %2798
    %2800 = vrot.lane.b32.xlu0 %v2797, 64
    %v2801 = vpop.permute.xlu0 %2800
    %v2804 = vsel %vm419, %v2756, %v2766
    %v2805 = vsel %vm419, %v2752, %v2768
    %v2806 = vsel %vm2743, %v2804, %v2777
    %v2807 = vsel %vm2743, %v2805, %v2779
    %v2808 = vsel %vm619, %v2777, %v2788
    %v2809 = vsel %vm619, %v2779, %v2790
    %v2810 = vsel %vm2527, %v2808, %v2799
    %v2811 = vsel %vm2527, %v2809, %v2801
    %v2812 = vld [vmem:[%s13 + $0xa] sm:$0x1]
    %v2813 = vlaneseq
    %v2814 = vshrl.u32 %v2813, 7
    %v2815 = vsub.s32 0, %v2814
    %v2816 = vrot.slane %v2812, %v2815
    %vm2817 = vcmask 916480
    %v2819 = vsel %vm2817, %v2748, 0
    %v2822 = vsel %vm2817, %v2749, 0
    %v2825 = vsel %vm2817, %v2810, 0
    %v2828 = vsel %vm2817, %v2811, 0
    %2830 = vmatprep.subr.mxu0 0.0
    %2831 = vmatpush1.msra.mxu0 %v2623
    %2832 = vmatprep.subr.mxu0 0.0
    %2833 = vmatpush1.msra.mxu0 %v2624
    %2834 = vmatprep.subr.mxu0 0.0
    %2835 = vmatpush1.msra.mxu0 %v2625
    %2836 = vmatprep.subr.mxu0 0.0
    %2837 = vmatpush1.msra.mxu0 %v2626
    %2838 = vmatprep.subr.mxu0 0.0
    %2839 = vmatpush1.msra.mxu0 %v2627
    %2840 = vmatprep.subr.mxu0 0.0
    %2841 = vmatpush1.msra.mxu0 %v2628
    %2842 = vmatprep.subr.mxu0 0.0
    %2843 = vmatpush1.msra.mxu0 %v2629
    %2844 = vmatprep.subr.mxu0 0.0
    %2845 = vmatpush1.msra.mxu0 %v2630
    %2846 = vmatprep.subr.mxu0 0.0
    %2847 = vmatpush1.msra.mxu0 %v2631
    %2848 = vmatprep.subr.mxu0 0.0
    %2849 = vmatpush1.msra.mxu0 %v2632
    %2850 = vmatprep.subr.mxu0 0.0
    %2851 = vmatpush1.msra.mxu0 %v2633
    %2852 = vmatprep.subr.mxu0 0.0
    %2853 = vmatpush1.msra.mxu0 %v2634
    %2854 = vmatprep.subr.mxu0 0.0
    %2855 = vmatpush1.msra.mxu0 %v2635
    %2856 = vmatprep.subr.mxu0 0.0
    %2857 = vmatpush1.msra.mxu0 %v2636
    %2858 = vmatprep.subr.mxu0 0.0
    %2859 = vmatpush1.msra.mxu0 %v2637
    %2860 = vmatprep.subr.mxu0 0.0
    %2861 = vmatpush1.msra.mxu0 %v2638
    %2862 = vmatprep.subr.mxu0 0.0
    %2863 = vmatpush1.msra.mxu0 %v2639
    %2864 = vmatprep.subr.mxu0 0.0
    %2865 = vmatpush1.msra.mxu0 %v2640
    %2866 = vmatprep.subr.mxu0 0.0
    %2867 = vmatpush1.msra.mxu0 %v2641
    %2868 = vmatprep.subr.mxu0 0.0
    %2869 = vmatpush1.msra.mxu0 %v2642
    %2870 = vmatprep.subr.mxu0 0.0
    %2871 = vmatpush1.msra.mxu0 %v2643
    %2872 = vmatprep.subr.mxu0 0.0
    %2873 = vmatpush1.msra.mxu0 %v2644
    %2874 = vmatprep.subr.mxu0 0.0
    %2875 = vmatpush1.msra.mxu0 %v2645
    %2876 = vmatprep.subr.mxu0 0.0
    %2877 = vmatpush1.msra.mxu0 %v2646
    %2878 = vmatprep.subr.mxu0 0.0
    %2879 = vmatpush1.msra.mxu0 %v2647
    %2880 = vmatprep.subr.mxu0 0.0
    %2881 = vmatpush1.msra.mxu0 %v2648
    %2882 = vmatprep.subr.mxu0 0.0
    %2883 = vmatpush1.msra.mxu0 %v2649
    %2884 = vmatprep.subr.mxu0 0.0
    %2885 = vmatpush1.msra.mxu0 %v2650
    %2886 = vmatprep.subr.mxu0 0.0
    %2887 = vmatpush1.msra.mxu0 %v2651
    %2888 = vmatprep.subr.mxu0 0.0
    %2889 = vmatpush1.msra.mxu0 %v2652
    %2890 = vmatprep.subr.mxu0 0.0
    %2891 = vmatpush1.msra.mxu0 0.0
    %2892 = vmatprep.subr.mxu0 0.0
    %2893 = vmatpush1.msra.mxu0 0.0
    %2894 = vmatprep.mubr.f32.mxu0 %v2819
    %2895 = vmatmul.mubr.f32.gmra.mrb[0].mxu0 %v2744
    %v2896 = vpop.f32.mrb[0].mxu0
    %v2897 = vadd.f32 %v2816, %v2896
    %v2898 = vpop.f32.mrb[0].mxu0
    %2899 = vmatprep.mubr.f32.mxu0 %v2822
    %2900 = vmatmul.mubr.f32.gmra.mrb[0].mxu0 %v2745
    %v2901 = vpop.f32.mrb[0].mxu0
    %v2902 = vadd.f32 %v2816, %v2901
    %v2903 = vpop.f32.mrb[0].mxu0
    %2904 = vmatprep.mubr.f32.mxu0 %v2825
    %2905 = vmatmul.mubr.f32.gmra.mrb[0].mxu0 %v2806
    %v2906 = vpop.f32.mrb[0].mxu0
    %v2907 = vadd.f32 %v2816, %v2906
    %v2908 = vpop.f32.mrb[0].mxu0
    %2909 = vmatprep.mubr.f32.mxu0 %v2828
    %2910 = vmatmul.mubr.f32.gmra.mrb[0].mxu0 %v2807
    %v2911 = vpop.f32.mrb[0].mxu0
    %v2912 = vadd.f32 %v2816, %v2911
    %v2913 = vpop.f32.mrb[0].mxu0
    %2914 = vdwg.mxu0
    %v2915 = vmax.f32 %v2897, 0.0
    %v2916 = vmax.f32 %v2902, 0.0
    %v2917 = vmax.f32 %v2907, 0.0
    %v2918 = vmax.f32 %v2912, 0.0
    %v2921 = vrot.slane %v2915, 6
    %v2922 = vrot.slane %v2916, 6
    %v2923 = vsel %vm2683, %v2921, %v2922
    %v2927 = vsel %vm2683, 0.0, %v2921
    %v2928 = vsel %vm2683, %v2922, 0.0
    %v2931 = vrot.slane %v2927, 1
    %v2932 = vrot.slane %v2923, 1
    %v2933 = vsel %vm2694, %v2931, %v2932
    %v2934 = vrot.slane %v2928, 1
    %v2935 = vsel %vm2694, %v2932, %v2934
    %2936 = vrot.lane.b32.xlu0 %v2933, 48
    %v2937 = vpop.permute.xlu0 %2936
    %2938 = vrot.lane.b32.xlu0 %v2935, 48
    %v2939 = vpop.permute.xlu0 %2938
    %v2942 = vrot.slane %v2927, 2
    %v2943 = vrot.slane %v2923, 2
    %v2944 = vsel %vm2706, %v2942, %v2943
    %v2945 = vrot.slane %v2928, 2
    %v2946 = vsel %vm2706, %v2943, %v2945
    %2947 = vrot.lane.b32.xlu0 %v2944, 96
    %v2948 = vpop.permute.xlu0 %2947
    %2949 = vrot.lane.b32.xlu0 %v2946, 96
    %v2950 = vpop.permute.xlu0 %2949
    %v2953 = vrot.slane %v2927, 3
    %v2954 = vrot.slane %v2923, 3
    %v2955 = vsel %vm2718, %v2953, %v2954
    %v2956 = vrot.slane %v2928, 3
    %v2957 = vsel %vm2718, %v2954, %v2956
    %2958 = vrot.lane.b32.xlu0 %v2955, 16
    %v2959 = vpop.permute.xlu0 %2958
    %2960 = vrot.lane.b32.xlu0 %v2957, 16
    %v2961 = vpop.permute.xlu0 %2960
    %v2964 = vrot.slane %v2927, 4
    %v2965 = vrot.slane %v2923, 4
    %v2966 = vsel %vm216, %v2964, %v2965
    %v2967 = vrot.slane %v2928, 4
    %v2968 = vsel %vm216, %v2965, %v2967
    %2969 = vrot.lane.b32.xlu0 %v2966, 64
    %v2970 = vpop.permute.xlu0 %2969
    %2971 = vrot.lane.b32.xlu0 %v2968, 64
    %v2972 = vpop.permute.xlu0 %2971
    %v2975 = vsel %vm419, %v2927, %v2937
    %v2976 = vsel %vm419, %v2923, %v2939
    %v2977 = vsel %vm2743, %v2975, %v2948
    %v2978 = vsel %vm2743, %v2976, %v2950
    %v2979 = vsel %vm619, %v2948, %v2959
    %v2980 = vsel %vm619, %v2950, %v2961
    %v2981 = vsel %vm2527, %v2979, %v2970
    %v2982 = vsel %vm2527, %v2980, %v2972
    %v2985 = vrot.slane %v2917, 6
    %v2986 = vrot.slane %v2918, 6
    %v2987 = vsel %vm2683, %v2985, %v2986
    %v2991 = vsel %vm2683, 0.0, %v2985
    %v2992 = vsel %vm2683, %v2986, 0.0
    %v2995 = vrot.slane %v2991, 1
    %v2996 = vrot.slane %v2987, 1
    %v2997 = vsel %vm2694, %v2995, %v2996
    %v2998 = vrot.slane %v2992, 1
    %v2999 = vsel %vm2694, %v2996, %v2998
    %3000 = vrot.lane.b32.xlu0 %v2997, 48
    %v3001 = vpop.permute.xlu0 %3000
    %3002 = vrot.lane.b32.xlu0 %v2999, 48
    %v3003 = vpop.permute.xlu0 %3002
    %v3006 = vrot.slane %v2991, 2
    %v3007 = vrot.slane %v2987, 2
    %v3008 = vsel %vm2706, %v3006, %v3007
    %v3009 = vrot.slane %v2992, 2
    %v3010 = vsel %vm2706, %v3007, %v3009
    %3011 = vrot.lane.b32.xlu0 %v3008, 96
    %v3012 = vpop.permute.xlu0 %3011
    %3013 = vrot.lane.b32.xlu0 %v3010, 96
    %v3014 = vpop.permute.xlu0 %3013
    %v3017 = vrot.slane %v2991, 3
    %v3018 = vrot.slane %v2987, 3
    %v3019 = vsel %vm2718, %v3017, %v3018
    %v3020 = vrot.slane %v2992, 3
    %v3021 = vsel %vm2718, %v3018, %v3020
    %3022 = vrot.lane.b32.xlu0 %v3019, 16
    %v3023 = vpop.permute.xlu0 %3022
    %3024 = vrot.lane.b32.xlu0 %v3021, 16
    %v3025 = vpop.permute.xlu0 %3024
    %v3028 = vrot.slane %v2991, 4
    %v3029 = vrot.slane %v2987, 4
    %v3030 = vsel %vm216, %v3028, %v3029
    %v3031 = vrot.slane %v2992, 4
    %v3032 = vsel %vm216, %v3029, %v3031
    %3033 = vrot.lane.b32.xlu0 %v3030, 64
    %v3034 = vpop.permute.xlu0 %3033
    %3035 = vrot.lane.b32.xlu0 %v3032, 64
    %v3036 = vpop.permute.xlu0 %3035
    %v3039 = vsel %vm419, %v2991, %v3001
    %v3040 = vsel %vm419, %v2987, %v3003
    %v3041 = vsel %vm2743, %v3039, %v3012
    %v3042 = vsel %vm2743, %v3040, %v3014
    %v3043 = vsel %vm619, %v3012, %v3023
    %v3044 = vsel %vm619, %v3014, %v3025
    %v3045 = vsel %vm2527, %v3043, %v3034
    %v3046 = vsel %vm2527, %v3044, %v3036
    %v3047 = vld [vmem:[%s13 + $0xb] sm:$0x1]
    %v3048 = vlaneseq
    %v3049 = vshrl.u32 %v3048, 7
    %v3050 = vsub.s32 0, %v3049
    %v3051 = vrot.slane %v3047, %v3050
    %v3053 = vsel %vm2817, %v2981, 0
    %v3056 = vsel %vm2817, %v2982, 0
    %v3059 = vsel %vm2817, %v3045, 0
    %v3062 = vsel %vm2817, %v3046, 0
    %3064 = vmatprep.subr.mxu0 0.0
    %3065 = vmatpush1.msra.mxu0 %v2653
    %3066 = vmatprep.subr.mxu0 0.0
    %3067 = vmatpush1.msra.mxu0 %v2654
    %3068 = vmatprep.subr.mxu0 0.0
    %3069 = vmatpush1.msra.mxu0 %v2655
    %3070 = vmatprep.subr.mxu0 0.0
    %3071 = vmatpush1.msra.mxu0 %v2656
    %3072 = vmatprep.subr.mxu0 0.0
    %3073 = vmatpush1.msra.mxu0 %v2657
    %3074 = vmatprep.subr.mxu0 0.0
    %3075 = vmatpush1.msra.mxu0 %v2658
    %3076 = vmatprep.subr.mxu0 0.0
    %3077 = vmatpush1.msra.mxu0 %v2659
    %3078 = vmatprep.subr.mxu0 0.0
    %3079 = vmatpush1.msra.mxu0 %v2660
    %3080 = vmatprep.subr.mxu0 0.0
    %3081 = vmatpush1.msra.mxu0 %v2661
    %3082 = vmatprep.subr.mxu0 0.0
    %3083 = vmatpush1.msra.mxu0 %v2662
    %3084 = vmatprep.subr.mxu0 0.0
    %3085 = vmatpush1.msra.mxu0 %v2663
    %3086 = vmatprep.subr.mxu0 0.0
    %3087 = vmatpush1.msra.mxu0 %v2664
    %3088 = vmatprep.subr.mxu0 0.0
    %3089 = vmatpush1.msra.mxu0 %v2665
    %3090 = vmatprep.subr.mxu0 0.0
    %3091 = vmatpush1.msra.mxu0 %v2666
    %3092 = vmatprep.subr.mxu0 0.0
    %3093 = vmatpush1.msra.mxu0 %v2667
    %3094 = vmatprep.subr.mxu0 0.0
    %3095 = vmatpush1.msra.mxu0 %v2668
    %3096 = vmatprep.subr.mxu0 0.0
    %3097 = vmatpush1.msra.mxu0 %v2669
    %3098 = vmatprep.subr.mxu0 0.0
    %3099 = vmatpush1.msra.mxu0 %v2670
    %3100 = vmatprep.subr.mxu0 0.0
    %3101 = vmatpush1.msra.mxu0 %v2671
    %3102 = vmatprep.subr.mxu0 0.0
    %3103 = vmatpush1.msra.mxu0 %v2672
    %3104 = vmatprep.subr.mxu0 0.0
    %3105 = vmatpush1.msra.mxu0 %v2673
    %3106 = vmatprep.subr.mxu0 0.0
    %3107 = vmatpush1.msra.mxu0 %v2674
    %3108 = vmatprep.subr.mxu0 0.0
    %3109 = vmatpush1.msra.mxu0 %v2675
    %3110 = vmatprep.subr.mxu0 0.0
    %3111 = vmatpush1.msra.mxu0 %v2676
    %3112 = vmatprep.subr.mxu0 0.0
    %3113 = vmatpush1.msra.mxu0 %v2677
    %3114 = vmatprep.subr.mxu0 0.0
    %3115 = vmatpush1.msra.mxu0 %v2678
    %3116 = vmatprep.subr.mxu0 0.0
    %3117 = vmatpush1.msra.mxu0 %v2679
    %3118 = vmatprep.subr.mxu0 0.0
    %3119 = vmatpush1.msra.mxu0 %v2680
    %3120 = vmatprep.subr.mxu0 0.0
    %3121 = vmatpush1.msra.mxu0 %v2681
    %3122 = vmatprep.subr.mxu0 0.0
    %3123 = vmatpush1.msra.mxu0 %v2682
    %3124 = vmatprep.subr.mxu0 0.0
    %3125 = vmatpush1.msra.mxu0 0.0
    %3126 = vmatprep.subr.mxu0 0.0
    %3127 = vmatpush1.msra.mxu0 0.0
    %3128 = vmatprep.mubr.f32.mxu0 %v3053
    %3129 = vmatmul.mubr.f32.gmra.mrb[0].mxu0 %v2977
    %v3130 = vpop.f32.mrb[0].mxu0
    %v3131 = vadd.f32 %v3051, %v3130
    %v3132 = vpop.f32.mrb[0].mxu0
    %3133 = vmatprep.mubr.f32.mxu0 %v3056
    %3134 = vmatmul.mubr.f32.gmra.mrb[0].mxu0 %v2978
    %v3135 = vpop.f32.mrb[0].mxu0
    %v3136 = vpop.f32.mrb[0].mxu0
    %3137 = vmatprep.mubr.f32.mxu0 %v3059
    %3138 = vmatmul.mubr.f32.gmra.mrb[0].mxu0 %v3041
    %v3139 = vpop.f32.mrb[0].mxu0
    %v3140 = vadd.f32 %v3051, %v3139
    %v3141 = vpop.f32.mrb[0].mxu0
    %3142 = vmatprep.mubr.f32.mxu0 %v3062
    %3143 = vmatmul.mubr.f32.gmra.mrb[0].mxu0 %v3042
    %v3144 = vpop.f32.mrb[0].mxu0
    %v3145 = vpop.f32.mrb[0].mxu0
    %3146 = vdwg.mxu0
    %v3147 = vadd.f32 %v3131, %v404
    %v3148 = vadd.f32 %v3140, %v406
    %v3149 = vmax.f32 %v3147, 0.0
    %v3150 = vmax.f32 %v3148, 0.0
    %3153 = vrot.lane.b32.xlu0 %v3149, 48
    %v3154 = vpop.permute.xlu0 %3153
    %3155 = vrot.lane.b32.xlu0 %v3150, 48
    %v3156 = vpop.permute.xlu0 %3155
    %v3159 = vsel %vm419, %v2607, %v3154
    %v3160 = vsel %vm419, %v2616, %v3156
    %v3162 = vrot.slane %v3160, 7
    %vm3164 = vcmask 1040384
    %v3165 = vsel %vm3164, %v3159, %v3162
    %v3166 = vld [vmem:[%s11] sm:$0xff]
    %v3167 = vld [vmem:[%s11 + $0x8] sm:$0xff]
    %v3168 = vld [vmem:[%s11 + $0x10] sm:$0xff]
    %v3169 = vld [vmem:[%s11 + $0x18] sm:$0xff]
    %v3170 = vld [vmem:[%s11 + $0x20] sm:$0xff]
    %v3171 = vld [vmem:[%s11 + $0x28] sm:$0xff]
    %v3172 = vld [vmem:[%s11 + $0x30] sm:$0xff]
    %v3173 = vld [vmem:[%s11 + $0x38] sm:$0xff]
    %v3174 = vld [vmem:[%s11 + $0x40] sm:$0xff]
    %v3175 = vld [vmem:[%s11 + $0x48] sm:$0xff]
    %v3176 = vld [vmem:[%s11 + $0x50] sm:$0xff]
    %v3177 = vld [vmem:[%s11 + $0x58] sm:$0xff]
    %v3178 = vld [vmem:[%s13 + $0xc] sm:$0x1]
    %v3179 = vlaneseq
    %v3180 = vshrl.u32 %v3179, 7
    %v3181 = vsub.s32 0, %v3180
    %v3182 = vrot.slane %v3178, %v3181
    %v3184 = vsel %vm2743, %v3165, 0
    %3186 = vmatprep.subr.mxu0 0.0
    %3187 = vmatpush1.msra.mxu0 %v3166
    %3188 = vmatprep.subr.mxu0 0.0
    %3189 = vmatpush1.msra.mxu0 %v3167
    %3190 = vmatprep.subr.mxu0 0.0
    %3191 = vmatpush1.msra.mxu0 %v3168
    %3192 = vmatprep.subr.mxu0 0.0
    %3193 = vmatpush1.msra.mxu0 %v3169
    %3194 = vmatprep.subr.mxu0 0.0
    %3195 = vmatpush1.msra.mxu0 %v3170
    %3196 = vmatprep.subr.mxu0 0.0
    %3197 = vmatpush1.msra.mxu0 %v3171
    %3198 = vmatprep.subr.mxu0 0.0
    %3199 = vmatpush1.msra.mxu0 %v3172
    %3200 = vmatprep.subr.mxu0 0.0
    %3201 = vmatpush1.msra.mxu0 %v3173
    %3202 = vmatprep.subr.mxu0 0.0
    %3203 = vmatpush1.msra.mxu0 %v3174
    %3204 = vmatprep.subr.mxu0 0.0
    %3205 = vmatpush1.msra.mxu0 %v3175
    %3206 = vmatprep.subr.mxu0 0.0
    %3207 = vmatpush1.msra.mxu0 %v3176
    %3208 = vmatprep.subr.mxu0 0.0
    %3209 = vmatpush1.msra.mxu0 %v3177
    %3210 = vmatprep.subr.mxu0 0.0
    %3211 = vmatpush1.msra.mxu0 0.0
    %3212 = vmatprep.subr.mxu0 0.0
    %3213 = vmatpush1.msra.mxu0 0.0
    %3214 = vmatprep.subr.mxu0 0.0
    %3215 = vmatpush1.msra.mxu0 0.0
    %3216 = vmatprep.subr.mxu0 0.0
    %3217 = vmatpush1.msra.mxu0 0.0
    %3218 = vmatprep.subr.mxu0 0.0
    %3219 = vmatpush1.msra.mxu0 0.0
    %3220 = vmatprep.subr.mxu0 0.0
    %3221 = vmatpush1.msra.mxu0 0.0
    %3222 = vmatprep.subr.mxu0 0.0
    %3223 = vmatpush1.msra.mxu0 0.0
    %3224 = vmatprep.subr.mxu0 0.0
    %3225 = vmatpush1.msra.mxu0 0.0
    %3226 = vmatprep.subr.mxu0 0.0
    %3227 = vmatpush1.msra.mxu0 0.0
    %3228 = vmatprep.subr.mxu0 0.0
    %3229 = vmatpush1.msra.mxu0 0.0
    %3230 = vmatprep.subr.mxu0 0.0
    %3231 = vmatpush1.msra.mxu0 0.0
    %3232 = vmatprep.subr.mxu0 0.0
    %3233 = vmatpush1.msra.mxu0 0.0
    %3234 = vmatprep.subr.mxu0 0.0
    %3235 = vmatpush1.msra.mxu0 0.0
    %3236 = vmatprep.subr.mxu0 0.0
    %3237 = vmatpush1.msra.mxu0 0.0
    %3238 = vmatprep.subr.mxu0 0.0
    %3239 = vmatpush1.msra.mxu0 0.0
    %3240 = vmatprep.subr.mxu0 0.0
    %3241 = vmatpush1.msra.mxu0 0.0
    %3242 = vmatprep.subr.mxu0 0.0
    %3243 = vmatpush1.msra.mxu0 0.0
    %3244 = vmatprep.subr.mxu0 0.0
    %3245 = vmatpush1.msra.mxu0 0.0
    %3246 = vmatprep.subr.mxu0 0.0
    %3247 = vmatpush1.msra.mxu0 0.0
    %3248 = vmatprep.subr.mxu0 0.0
    %3249 = vmatpush1.msra.mxu0 0.0
    %3250 = vmatprep.mubr.f32.mxu0 0.0
    %3251 = vmatmul.mubr.f32.gmra.mrb[0].mxu0 %v3184
    %v3252 = vpop.f32.mrb[0].mxu0
    %v3253 = vadd.f32 %v3182, %v3252
    %v3254 = vpop.f32.mrb[0].mxu0
    %3255 = vdwg.mxu0
    %v3256 = vmax.f32 %v3253, 0.0
    %v3257 = vld [vmem:[%s12] sm:$0xff]
    %v3258 = vld [vmem:[%s12 + $0x8] sm:$0xff]
    %v3259 = vld [vmem:[%s12 + $0x10] sm:$0xff]
    %v3260 = vld [vmem:[%s12 + $0x18] sm:$0xff]
    %v3261 = vld [vmem:[%s12 + $0x20] sm:$0xff]
    %v3262 = vld [vmem:[%s12 + $0x28] sm:$0xff]
    %v3263 = vld [vmem:[%s13 + $0xd] sm:$0x1]
    %v3264 = vlaneseq
    %v3265 = vshrl.u32 %v3264, 7
    %v3266 = vsub.s32 0, %v3265
    %v3267 = vrot.slane %v3263, %v3266
    %v3269 = vsel %vm419, %v3256, 0
    %3271 = vmatprep.subr.mxu0 0.0
    %3272 = vmatpush1.msra.mxu0 %v3257
    %3273 = vmatprep.subr.mxu0 0.0
    %3274 = vmatpush1.msra.mxu0 %v3258
    %3275 = vmatprep.subr.mxu0 0.0
    %3276 = vmatpush1.msra.mxu0 %v3259
    %3277 = vmatprep.subr.mxu0 0.0
    %3278 = vmatpush1.msra.mxu0 %v3260
    %3279 = vmatprep.subr.mxu0 0.0
    %3280 = vmatpush1.msra.mxu0 %v3261
    %3281 = vmatprep.subr.mxu0 0.0
    %3282 = vmatpush1.msra.mxu0 %v3262
    %3283 = vmatprep.subr.mxu0 0.0
    %3284 = vmatpush1.msra.mxu0 0.0
    %3285 = vmatprep.subr.mxu0 0.0
    %3286 = vmatpush1.msra.mxu0 0.0
    %3287 = vmatprep.subr.mxu0 0.0
    %3288 = vmatpush1.msra.mxu0 0.0
    %3289 = vmatprep.subr.mxu0 0.0
    %3290 = vmatpush1.msra.mxu0 0.0
    %3291 = vmatprep.subr.mxu0 0.0
    %3292 = vmatpush1.msra.mxu0 0.0
    %3293 = vmatprep.subr.mxu0 0.0
    %3294 = vmatpush1.msra.mxu0 0.0
    %3295 = vmatprep.subr.mxu0 0.0
    %3296 = vmatpush1.msra.mxu0 0.0
    %3297 = vmatprep.subr.mxu0 0.0
    %3298 = vmatpush1.msra.mxu0 0.0
    %3299 = vmatprep.subr.mxu0 0.0
    %3300 = vmatpush1.msra.mxu0 0.0
    %3301 = vmatprep.subr.mxu0 0.0
    %3302 = vmatpush1.msra.mxu0 0.0
    %3303 = vmatprep.subr.mxu0 0.0
    %3304 = vmatpush1.msra.mxu0 0.0
    %3305 = vmatprep.subr.mxu0 0.0
    %3306 = vmatpush1.msra.mxu0 0.0
    %3307 = vmatprep.subr.mxu0 0.0
    %3308 = vmatpush1.msra.mxu0 0.0
    %3309 = vmatprep.subr.mxu0 0.0
    %3310 = vmatpush1.msra.mxu0 0.0
    %3311 = vmatprep.subr.mxu0 0.0
    %3312 = vmatpush1.msra.mxu0 0.0
    %3313 = vmatprep.subr.mxu0 0.0
    %3314 = vmatpush1.msra.mxu0 0.0
    %3315 = vmatprep.subr.mxu0 0.0
    %3316 = vmatpush1.msra.mxu0 0.0
    %3317 = vmatprep.subr.mxu0 0.0
    %3318 = vmatpush1.msra.mxu0 0.0
    %3319 = vmatprep.subr.mxu0 0.0
    %3320 = vmatpush1.msra.mxu0 0.0
    %3321 = vmatprep.subr.mxu0 0.0
    %3322 = vmatpush1.msra.mxu0 0.0
    %3323 = vmatprep.subr.mxu0 0.0
    %3324 = vmatpush1.msra.mxu0 0.0
    %3325 = vmatprep.subr.mxu0 0.0
    %3326 = vmatpush1.msra.mxu0 0.0
    %3327 = vmatprep.subr.mxu0 0.0
    %3328 = vmatpush1.msra.mxu0 0.0
    %3329 = vmatprep.subr.mxu0 0.0
    %3330 = vmatpush1.msra.mxu0 0.0
    %3331 = vmatprep.subr.mxu0 0.0
    %3332 = vmatpush1.msra.mxu0 0.0
    %3333 = vmatprep.subr.mxu0 0.0
    %3334 = vmatpush1.msra.mxu0 0.0
    %3335 = vmatprep.mubr.f32.mxu0 0.0
    %3336 = vmatmul.mubr.f32.gmra.mrb[0].mxu0 %v3269
    %v3337 = vpop.f32.mrb[0].mxu0
    %v3338 = vadd.f32 %v3267, %v3337
    %v3339 = vpop.f32.mrb[0].mxu0
    %3340 = vdwg.mxu0
    %vm3341 = vcmask 9216
    %3342 = vst.msk [vmem:[#allocation2] sm:$0x3] %vm3341, %v3338
    %vm3343 = vcmask 779264
    %3344 = vst.msk [vmem:[#allocation4] sm:$0x3] %vm3343, %v3165
    // Predicated region
    $region58: #{bert_forward.1} parent=1 // pred_check
      _
    $region59: #{bert_forward.1} parent=1 // pred_check_branch
      %3346 = sbr.rel (0) target = $region61
    $region60: #{bert_forward.1} parent=1 // pred_region
      %s3348 = ssub.s32 32, 32
      %3349 = vsyncadd [#allocation3], %s3348
      %s3351 = sshll.u32 [#allocation2], 4
      %s3352 = int_to_ptr.vmem [resolvable:$true] %s3351
      %3354 = dma.vmem_to_hbm [thread:$0]  %s3352, 32, %s14, [#allocation3]
    $region61: #{bert_forward.1} parent=1 // pred_fallthru
      _
    // Predicated region
    $region62: #{bert_forward.1} parent=1 // pred_check
      _
    $region63: #{bert_forward.1} parent=1 // pred_check_branch
      %3356 = sbr.rel (0) target = $region65
    $region64: #{bert_forward.1} parent=1 // pred_region
      %s3358 = ssub.s32 32, 32
      %3359 = vsyncadd [#allocation5], %s3358
      %s3361 = sshll.u32 [#allocation4], 4
      %s3362 = int_to_ptr.vmem [resolvable:$true] %s3361
      %3364 = dma.vmem_to_hbm [thread:$0]  %s3362, 32, %s15, [#allocation5]
    $region65: #{bert_forward.1} parent=1 // pred_fallthru
      _
    // Predicated region
    $region66: #{bert_forward.1} parent=1 // pred_check
      _
    $region67: #{bert_forward.1} parent=1 // pred_check_branch
      %3366 = sbr.rel (0) target = $region69
    $region68: #{bert_forward.1} parent=1 // pred_region
      %3367 = dma.done [#allocation3], 32
    $region69: #{bert_forward.1} parent=1 // pred_fallthru
      _
    // Predicated region
    $region70: #{bert_forward.1} parent=1 // pred_check
      _
    $region71: #{bert_forward.1} parent=1 // pred_check_branch
      %3369 = sbr.rel (0) target = $region73
    $region72: #{bert_forward.1} parent=1 // pred_region
      %3370 = dma.done [#allocation5], 32
    $region73: #{bert_forward.1} parent=1 // pred_fallthru
      _
    %3371 = vsyncpa [#allocation3], 1
    %3372 = vsyncpa [#allocation5], 1

</llo_original>
